<compile_context>
chip_gen: v6e
topology: v6e:2x2x1
jax: 0.10.0
libtpu: 0.0.40
codegen_flags: <defaults>
</compile_context>

<pallas_src>
import functools
import numpy as np

import jax
import jax.numpy as jnp
from jax.experimental import pallas as pl
from jax.experimental.pallas import tpu as pltpu


# ---------------------------------------------------------------- kernel ----

def _net_kernel(xr0_ref, xr1_ref, xr2_ref, xr3_ref,
                wb1e_ref, wb1o_ref, b1_ref,
                wb2e_ref, wb2o_ref, b2_ref,
                w1_ref, bf1_ref, w2_ref, bf2_ref, w3_ref, bf3_ref,
                o_ref, *, tb):
    """Whole Net forward for one batch tile of `tb` images.

    xr0..xr3 : [tb, 9/9/8/8, 128]  rows of the vertically zero-padded,
               lane-padded (96->128) NHWC input, split by padded-row idx mod 4.
    wb1e/o   : [3, 128, 128]  banded conv1 weights (even / odd output columns).
    wb2e/o   : [3, 128, 128]  banded conv2 weights.
    b1 / b2  : [1, 128]       conv biases tiled over pooled output columns.
    w1       : [8, 128, 128]  fc1, one [128,128] block per pooled row h
                              (rows pre-permuted from torch NCHW-flatten order).
    w2, w3   : [128, 128]     fc2 / fc3 zero-padded to 128 lanes.
    bf1..bf3 : [1, 128]       fc biases (bf3's pad lanes carry -1e30).
    o_ref    : [tb, 128]      log-softmax output (lanes 10..127 are pad).
    """
    f32 = jnp.float32

    def mm(a, w):
        return jnp.dot(a, w, preferred_element_type=f32)

    def pooled_conv(t0, t1, t2, t3, wbe_ref, wbo_ref, b_ref):
        # t0..t3: [M,128] = padded input rows r, r+1, r+2, r+3 for every pooled
        # output row.  Returns relu(maxpool2x2(conv3x3) + bias) as [M, 128]
        # (lanes = (w_pooled, cout)).  relu(max(.) + b) == max(relu(. + b))
        # because the bias is shared across the 4 pooled taps.
        we0, we1, we2 = wbe_ref[0], wbe_ref[1], wbe_ref[2]
        wo0, wo1, wo2 = wbo_ref[0], wbo_ref[1], wbo_ref[2]
        r0e = mm(t0, we0) + mm(t1, we1) + mm(t2, we2)   # conv row r,   even cols
        r0o = mm(t0, wo0) + mm(t1, wo1) + mm(t2, wo2)   # conv row r,   odd cols
        r1e = mm(t1, we0) + mm(t2, we1) + mm(t3, we2)   # conv row r+1, even cols
        r1o = mm(t1, wo0) + mm(t2, wo1) + mm(t3, wo2)   # conv row r+1, odd cols
        m = jnp.maximum(jnp.maximum(r0e, r0o), jnp.maximum(r1e, r1o))
        return jnp.maximum(m + b_ref[...], 0.0)

    M = tb * 8

    # ----- conv1 + ReLU + 2x2 pool (batch-stacked: M = 8*tb rows per matmul) -
    xr0 = xr0_ref[...]
    xr1 = xr1_ref[...]
    a0 = xr0[:, 0:8, :].reshape(M, 128)      # padded rows 4m
    a1 = xr1[:, 0:8, :].reshape(M, 128)      # padded rows 4m+1
    a2 = xr2_ref[...].reshape(M, 128)        # padded rows 4m+2
    a3 = xr3_ref[...].reshape(M, 128)        # padded rows 4m+3
    b2r = xr0[:, 1:9, :].reshape(M, 128)     # padded rows 4m+4
    b3r = xr1[:, 1:9, :].reshape(M, 128)     # padded rows 4m+5

    # pooled row 2m uses padded rows 4m..4m+3; pooled row 2m+1 uses 4m+2..4m+5.
    p1e = pooled_conv(a0, a1, a2, a3, wb1e_ref, wb1o_ref, b1_ref)    # rows 0,2,..,14
    p1o = pooled_conv(a2, a3, b2r, b3r, wb1e_ref, wb1o_ref, b1_ref)  # rows 1,3,..,15

    # ----- conv2 taps assembled entirely in VMEM (p1 never leaves the kernel)
    p1e3 = p1e.reshape(tb, 8, 128)
    p1o3 = p1o.reshape(tb, 8, 128)
    zrow = jnp.zeros((tb, 1, 128), f32)
    # padded conv2 input row j: j=0 zero, j=1..16 -> p1 row j-1, j=17 zero;
    # pooled conv2 row h needs padded rows 2h, 2h+1, 2h+2, 2h+3.
    t0 = jnp.concatenate([zrow, p1o3[:, 0:7, :]], axis=1).reshape(M, 128)
    t1 = p1e
    t2 = p1o
    t3 = jnp.concatenate([p1e3[:, 1:8, :], zrow], axis=1).reshape(M, 128)

    p2 = pooled_conv(t0, t1, t2, t3, wb2e_ref, wb2o_ref, b2_ref)     # [tb*8, 128]
    p2_3 = p2.reshape(tb, 8, 128)            # rows = pooled h, lanes = (w, cout)

    # ----- MLP head (all layer widths zero-padded to 128 lanes) --------------
    acc = mm(p2_3[:, 0, :], w1_ref[0])
    for t in range(1, 8):
        acc = acc + mm(p2_3[:, t, :], w1_ref[t])
    h = jnp.maximum(acc + bf1_ref[...], 0.0)
    h = jnp.maximum(mm(h, w2_ref[...]) + bf2_ref[...], 0.0)
    logits = mm(h, w3_ref[...]) + bf3_ref[...]
    # padded logit lanes carry a -1e30 bias -> exp() == 0, so the reduction
    # over 128 lanes equals the reduction over the 10 real classes.
    mx = jnp.max(logits, axis=1, keepdims=True)
    s = logits - mx
    lse = jnp.log(jnp.sum(jnp.exp(s), axis=1, keepdims=True))
    o_ref[...] = s - lse


# --------------------------------------------------------------- wrapper ----

def _batch_tiling(batch):
    """Return (batch tile, padded batch): ~16 images per grid step fills the
    MXU M dim, and >= 2 grid steps keep both v7x TensorCores busy."""
    steps = max(2, -(-batch // 16))
    tb = -(-batch // steps)
    return tb, steps * tb


def net_forward(x_nchw, kparams):
    (wb1e, wb1o, b1t, wb2e, wb2o, b2t,
     w1, bf1, w2, bf2, w3, bf3) = kparams
    B = x_nchw.shape[0]
    tb, Bp = _batch_tiling(B)
    G = Bp // tb

    # Tiny one-time XLA glue on the network input only: NCHW -> NHWC rows
    # (lanes = (w, cin), zero-padded 96 -> 128), one zero row top/bottom, rows
    # split by (padded-row index mod 4) so the kernel needs no strided gathers.
    x = jnp.transpose(x_nchw, (0, 2, 3, 1)).reshape(B, 32, 32 * 3)
    if Bp != B:
        x = jnp.pad(x, ((0, Bp - B), (0, 0), (0, 0)))
    xp = jnp.pad(x, ((0, 0), (1, 1), (0, 128 - 96)))        # [Bp, 34, 128]
    xr0 = xp[:, 0::4, :]                                    # [Bp, 9, 128]
    xr1 = xp[:, 1::4, :]                                    # [Bp, 9, 128]
    xr2 = xp[:, 2::4, :]                                    # [Bp, 8, 128]
    xr3 = xp[:, 3::4, :]                                    # [Bp, 8, 128]

    kernel = functools.partial(_net_kernel, tb=tb)
    batch3 = lambda i: (i, 0, 0)
    const3 = lambda i: (0, 0, 0)
    const2 = lambda i: (0, 0)

    out = pl.pallas_call(
        kernel,
        out_shape=jax.ShapeDtypeStruct((G, tb, 128), jnp.float32),
        grid=(G,),
        in_specs=[
            pl.BlockSpec((tb, 9, 128), batch3),
            pl.BlockSpec((tb, 9, 128), batch3),
            pl.BlockSpec((tb, 8, 128), batch3),
            pl.BlockSpec((tb, 8, 128), batch3),
            pl.BlockSpec((3, 128, 128), const3),
            pl.BlockSpec((3, 128, 128), const3),
            pl.BlockSpec((1, 128), const2),
            pl.BlockSpec((3, 128, 128), const3),
            pl.BlockSpec((3, 128, 128), const3),
            pl.BlockSpec((1, 128), const2),
            pl.BlockSpec((8, 128, 128), const3),
            pl.BlockSpec((1, 128), const2),
            pl.BlockSpec((128, 128), const2),
            pl.BlockSpec((1, 128), const2),
            pl.BlockSpec((128, 128), const2),
            pl.BlockSpec((1, 128), const2),
        ],
        out_specs=pl.BlockSpec((None, tb, 128), batch3),
        compiler_params=pltpu.CompilerParams(
            dimension_semantics=("parallel",)),
    )(xr0, xr1, xr2, xr3, wb1e, wb1o, b1t, wb2e, wb2o, b2t,
      w1, bf1, w2, bf2, w3, bf3)

    return out.reshape(Bp, 128)[:B, :10]


# ----------------------------------------------------- parameter repacking ---

def _banded_conv_weights(w_hwio, width, parity, k_pad):
    """Banded matmul weights for one conv-output-column parity.

    w_hwio: [3, 3, Cin, Cout].  Returns [3, k_pad, (width//2)*Cout] such that
    for an UNPADDED activation row x_row(h) with lane layout (w, cin) (zero
    padded to k_pad lanes), the 3x3 / pad=1 conv output at row h, column
    w = 2*wo + parity, channel co equals
        sum_ky  x_row(h - 1 + ky) @ wb[ky]   at lane  wo*Cout + co,
    where x_row(-1) = x_row(H) = 0 are the vertical pad rows.  The horizontal
    padding is folded in by simply dropping out-of-range taps.
    """
    kh, kw, cin, cout = w_hwio.shape
    wo_n = width // 2
    wb = np.zeros((kh, width * cin, wo_n * cout), np.float32)
    for kx in range(kw):
        for wo in range(wo_n):
            w_in = 2 * wo + parity + kx - 1
            if 0 <= w_in < width:
                wb[:, w_in * cin:(w_in + 1) * cin,
                   wo * cout:(wo + 1) * cout] += w_hwio[:, kx, :, :]
    if k_pad > width * cin:
        wb = np.pad(wb, ((0, 0), (0, k_pad - width * cin), (0, 0)))
    return jnp.asarray(wb)


def prepare_params(params):
    """One-time host-side repack of PyTorch-style params into kernel layout."""
    (w1, b1, w2, b2, wf1, bf1, wf2, bf2, wf3, bf3) = [
        np.asarray(p, np.float32) for p in params]

    # conv stages: banded weights (even / odd output cols) + lane-tiled bias.
    wb1e = _banded_conv_weights(w1, width=32, parity=0, k_pad=128)  # K 96->128
    wb1o = _banded_conv_weights(w1, width=32, parity=1, k_pad=128)
    b1t = jnp.asarray(np.tile(b1.reshape(1, -1), (1, 16)))          # [1,16*8]
    wb2e = _banded_conv_weights(w2, width=16, parity=0, k_pad=128)  # K = 128
    wb2o = _banded_conv_weights(w2, width=16, parity=1, k_pad=128)
    b2t = jnp.asarray(np.tile(b2.reshape(1, -1), (1, 8)))           # [1,8*16]

    # MLP head: permute fc1 rows from torch's NCHW flatten order (c*64+h*8+w)
    # to our NHWC flatten order (h*128 + w*16 + c), split into one [128,128]
    # block per pooled row h, and zero-pad all layer widths to 128 lanes.
    f = np.arange(16 * 8 * 8)
    h, w, c = f // 128, (f % 128) // 16, f % 16
    torch_rows = c * 64 + h * 8 + w
    wf1p = np.zeros((1024, 128), np.float32)
    wf1p[:, :64] = wf1[torch_rows, :]
    wf1p = wf1p.reshape(8, 128, 128)
    bf1p = np.zeros((1, 128), np.float32); bf1p[:, :64] = bf1
    wf2p = np.zeros((128, 128), np.float32); wf2p[:64, :32] = wf2
    bf2p = np.zeros((1, 128), np.float32); bf2p[:, :32] = bf2
    wf3p = np.zeros((128, 128), np.float32); wf3p[:32, :10] = wf3
    bf3p = np.full((1, 128), -1e30, np.float32); bf3p[:, :10] = bf3  # mask pads

    return (wb1e, wb1o, b1t, wb2e, wb2o, b2t,
            jnp.asarray(wf1p), jnp.asarray(bf1p),
            jnp.asarray(wf2p), jnp.asarray(bf2p),
            jnp.asarray(wf3p), jnp.asarray(bf3p))


# ------------------------------------------------------------------- main ---

if __name__ == "__main__":
    key = jax.random.PRNGKey(0)
    ks = jax.random.split(key, 11)
    B = 2

    def uinit(k, shape, fan_in):
        bound = 1.0 / (fan_in ** 0.5)
        return jax.random.uniform(k, shape, jnp.float32, -bound, bound)

    # conv weights stored as (KH, KW, Cin, Cout); fc weights as (in, out) with
    # fc1 rows indexed in torch NCHW-flatten order, exactly like the spec.
    w1 = uinit(ks[0], (3, 3, 3, 8), 3 * 9)
    b1 = uinit(ks[1], (1, 8), 3 * 9)
    w2 = uinit(ks[2], (3, 3, 8, 16), 8 * 9)
    b2 = uinit(ks[3], (1, 16), 8 * 9)
    wf1 = uinit(ks[4], (1024, 64), 1024)
    bf1 = uinit(ks[5], (1, 64), 1024)
    wf2 = uinit(ks[6], (64, 32), 64)
    bf2 = uinit(ks[7], (1, 32), 64)
    wf3 = uinit(ks[8], (32, 10), 32)
    bf3 = uinit(ks[9], (1, 10), 32)
    params = (w1, b1, w2, b2, wf1, bf1, wf2, bf2, wf3, bf3)

    kparams = prepare_params(params)

    x = jax.random.normal(ks[10], (B, 3, 32, 32), jnp.float32)  # NCHW, like torch

    out = jax.jit(net_forward)(x, kparams)
    out = jax.block_until_ready(out)
    assert out.shape == (B, 10), out.shape

    # log_softmax rows must exp-sum to ~1 and be finite
    row_sums = jnp.sum(jnp.exp(out), axis=1)
    assert bool(jnp.all(jnp.isfinite(out)))
    assert bool(jnp.all(jnp.abs(row_sums - 1.0) < 1e-4)), row_sums

    # plain-JAX reference of the original PyTorch forward (structural check)
    def reference_forward(x_nchw, p):
        (rw1, rb1, rw2, rb2, rwf1, rbf1, rwf2, rbf2, rwf3, rbf3) = p
        hp = jax.lax.Precision.HIGHEST
        y = jnp.transpose(x_nchw, (0, 2, 3, 1))
        y = jax.lax.conv_general_dilated(y, rw1, (1, 1), 'SAME',
                                         dimension_numbers=('NHWC', 'HWIO', 'NHWC'),
                                         precision=hp)
        y = jnp.maximum(y + rb1.reshape(1, 1, 1, -1), 0.0)
        y = jax.lax.reduce_window(y, -jnp.inf, jax.lax.max,
                                  (1, 2, 2, 1), (1, 2, 2, 1), 'VALID')
        y = jax.lax.conv_general_dilated(y, rw2, (1, 1), 'SAME',
                                         dimension_numbers=('NHWC', 'HWIO', 'NHWC'),
                                         precision=hp)
        y = jnp.maximum(y + rb2.reshape(1, 1, 1, -1), 0.0)
        y = jax.lax.reduce_window(y, -jnp.inf, jax.lax.max,
                                  (1, 2, 2, 1), (1, 2, 2, 1), 'VALID')
        fl = jnp.transpose(y, (0, 3, 1, 2)).reshape(x_nchw.shape[0], -1)
        z = jnp.maximum(jnp.dot(fl, rwf1, precision=hp) + rbf1, 0.0)
        z = jnp.maximum(jnp.dot(z, rwf2, precision=hp) + rbf2, 0.0)
        logits = jnp.dot(z, rwf3, precision=hp) + rbf3
        return jax.nn.log_softmax(logits, axis=1)

    ref = jax.block_until_ready(jax.jit(reference_forward)(x, params))
    max_err = float(jnp.max(jnp.abs(out - ref)))
    assert max_err < 1e-2, max_err

    print("KERNEL_OK")
</pallas_src>

<mosaic_0001>
module attributes {stable_mosaic.version = 11 : i64} {
  func.func @_net_kernel(%arg0: i32, %arg1: memref<1x9x128xf32, #tpu.memory_space<vmem>>, %arg2: memref<1x9x128xf32, #tpu.memory_space<vmem>>, %arg3: memref<1x8x128xf32, #tpu.memory_space<vmem>>, %arg4: memref<1x8x128xf32, #tpu.memory_space<vmem>>, %arg5: memref<3x128x128xf32, #tpu.memory_space<vmem>>, %arg6: memref<3x128x128xf32, #tpu.memory_space<vmem>>, %arg7: memref<1x128xf32, #tpu.memory_space<vmem>>, %arg8: memref<3x128x128xf32, #tpu.memory_space<vmem>>, %arg9: memref<3x128x128xf32, #tpu.memory_space<vmem>>, %arg10: memref<1x128xf32, #tpu.memory_space<vmem>>, %arg11: memref<8x128x128xf32, #tpu.memory_space<vmem>>, %arg12: memref<1x128xf32, #tpu.memory_space<vmem>>, %arg13: memref<128x128xf32, #tpu.memory_space<vmem>>, %arg14: memref<1x128xf32, #tpu.memory_space<vmem>>, %arg15: memref<128x128xf32, #tpu.memory_space<vmem>>, %arg16: memref<1x128xf32, #tpu.memory_space<vmem>>, %arg17: memref<1x1x128xf32, #tpu.memory_space<vmem>>) attributes {dimension_semantics = [#tpu.dimension_semantics<parallel>], iteration_bounds = array<i64: 2>, scalar_prefetch = 0 : i64, scratch_operands = 0 : i64, tpu.core_type = #tpu.core_type<tc>, window_params = [{transform_indices = @transform_0, window_bounds = array<i64: 1, 9, 128>}, {transform_indices = @transform_1, window_bounds = array<i64: 1, 9, 128>}, {transform_indices = @transform_2, window_bounds = array<i64: 1, 8, 128>}, {transform_indices = @transform_3, window_bounds = array<i64: 1, 8, 128>}, {pipeline_mode = #tpu.pipeline_mode<synchronous>, transform_indices = @transform_4, window_bounds = array<i64: 3, 128, 128>}, {pipeline_mode = #tpu.pipeline_mode<synchronous>, transform_indices = @transform_5, window_bounds = array<i64: 3, 128, 128>}, {pipeline_mode = #tpu.pipeline_mode<synchronous>, transform_indices = @transform_6, window_bounds = array<i64: 1, 128>}, {pipeline_mode = #tpu.pipeline_mode<synchronous>, transform_indices = @transform_7, window_bounds = array<i64: 3, 128, 128>}, {pipeline_mode = #tpu.pipeline_mode<synchronous>, transform_indices = @transform_8, window_bounds = array<i64: 3, 128, 128>}, {pipeline_mode = #tpu.pipeline_mode<synchronous>, transform_indices = @transform_9, window_bounds = array<i64: 1, 128>}, {pipeline_mode = #tpu.pipeline_mode<synchronous>, transform_indices = @transform_10, window_bounds = array<i64: 8, 128, 128>}, {pipeline_mode = #tpu.pipeline_mode<synchronous>, transform_indices = @transform_11, window_bounds = array<i64: 1, 128>}, {pipeline_mode = #tpu.pipeline_mode<synchronous>, transform_indices = @transform_12, window_bounds = array<i64: 128, 128>}, {pipeline_mode = #tpu.pipeline_mode<synchronous>, transform_indices = @transform_13, window_bounds = array<i64: 1, 128>}, {pipeline_mode = #tpu.pipeline_mode<synchronous>, transform_indices = @transform_14, window_bounds = array<i64: 128, 128>}, {pipeline_mode = #tpu.pipeline_mode<synchronous>, transform_indices = @transform_15, window_bounds = array<i64: 1, 128>}, {transform_indices = @transform_16, window_bounds = array<i64: 1, 1, 128>}]} {
    %c0 = arith.constant 0 : index
    %c0_0 = arith.constant 0 : index
    %c0_1 = arith.constant 0 : index
    %0 = vector.load %arg1[%c0, %c0_0, %c0_1] : memref<1x9x128xf32, #tpu.memory_space<vmem>>, vector<1x9x128xf32>
    %c0_2 = arith.constant 0 : index
    %c0_3 = arith.constant 0 : index
    %c0_4 = arith.constant 0 : index
    %1 = vector.load %arg2[%c0_2, %c0_3, %c0_4] : memref<1x9x128xf32, #tpu.memory_space<vmem>>, vector<1x9x128xf32>
    %2 = vector.extract_strided_slice %0 {offsets = [0, 0, 0], sizes = [1, 8, 128], strides = [1, 1, 1]} : vector<1x9x128xf32> to vector<1x8x128xf32>
    %3 = vector.shape_cast %2 : vector<1x8x128xf32> to vector<8x128xf32>
    %4 = vector.extract_strided_slice %1 {offsets = [0, 0, 0], sizes = [1, 8, 128], strides = [1, 1, 1]} : vector<1x9x128xf32> to vector<1x8x128xf32>
    %5 = vector.shape_cast %4 : vector<1x8x128xf32> to vector<8x128xf32>
    %c0_5 = arith.constant 0 : index
    %c0_6 = arith.constant 0 : index
    %c0_7 = arith.constant 0 : index
    %6 = vector.load %arg3[%c0_5, %c0_6, %c0_7] : memref<1x8x128xf32, #tpu.memory_space<vmem>>, vector<1x8x128xf32>
    %7 = vector.shape_cast %6 : vector<1x8x128xf32> to vector<8x128xf32>
    %c0_8 = arith.constant 0 : index
    %c0_9 = arith.constant 0 : index
    %c0_10 = arith.constant 0 : index
    %8 = vector.load %arg4[%c0_8, %c0_9, %c0_10] : memref<1x8x128xf32, #tpu.memory_space<vmem>>, vector<1x8x128xf32>
    %9 = vector.shape_cast %8 : vector<1x8x128xf32> to vector<8x128xf32>
    %10 = vector.extract_strided_slice %0 {offsets = [0, 1, 0], sizes = [1, 8, 128], strides = [1, 1, 1]} : vector<1x9x128xf32> to vector<1x8x128xf32>
    %11 = vector.shape_cast %10 : vector<1x8x128xf32> to vector<8x128xf32>
    %12 = vector.extract_strided_slice %1 {offsets = [0, 1, 0], sizes = [1, 8, 128], strides = [1, 1, 1]} : vector<1x9x128xf32> to vector<1x8x128xf32>
    %13 = vector.shape_cast %12 : vector<1x8x128xf32> to vector<8x128xf32>
    %c0_11 = arith.constant 0 : index
    %c0_12 = arith.constant 0 : index
    %c0_13 = arith.constant 0 : index
    %14 = vector.load %arg5[%c0_11, %c0_12, %c0_13] : memref<3x128x128xf32, #tpu.memory_space<vmem>>, vector<1x128x128xf32>
    %15 = vector.shape_cast %14 : vector<1x128x128xf32> to vector<128x128xf32>
    %c1 = arith.constant 1 : index
    %c0_14 = arith.constant 0 : index
    %c0_15 = arith.constant 0 : index
    %16 = vector.load %arg5[%c1, %c0_14, %c0_15] : memref<3x128x128xf32, #tpu.memory_space<vmem>>, vector<1x128x128xf32>
    %17 = vector.shape_cast %16 : vector<1x128x128xf32> to vector<128x128xf32>
    %c2 = arith.constant 2 : index
    %c0_16 = arith.constant 0 : index
    %c0_17 = arith.constant 0 : index
    %18 = vector.load %arg5[%c2, %c0_16, %c0_17] : memref<3x128x128xf32, #tpu.memory_space<vmem>>, vector<1x128x128xf32>
    %19 = vector.shape_cast %18 : vector<1x128x128xf32> to vector<128x128xf32>
    %c0_18 = arith.constant 0 : index
    %c0_19 = arith.constant 0 : index
    %c0_20 = arith.constant 0 : index
    %20 = vector.load %arg6[%c0_18, %c0_19, %c0_20] : memref<3x128x128xf32, #tpu.memory_space<vmem>>, vector<1x128x128xf32>
    %21 = vector.shape_cast %20 : vector<1x128x128xf32> to vector<128x128xf32>
    %c1_21 = arith.constant 1 : index
    %c0_22 = arith.constant 0 : index
    %c0_23 = arith.constant 0 : index
    %22 = vector.load %arg6[%c1_21, %c0_22, %c0_23] : memref<3x128x128xf32, #tpu.memory_space<vmem>>, vector<1x128x128xf32>
    %23 = vector.shape_cast %22 : vector<1x128x128xf32> to vector<128x128xf32>
    %c2_24 = arith.constant 2 : index
    %c0_25 = arith.constant 0 : index
    %c0_26 = arith.constant 0 : index
    %24 = vector.load %arg6[%c2_24, %c0_25, %c0_26] : memref<3x128x128xf32, #tpu.memory_space<vmem>>, vector<1x128x128xf32>
    %25 = vector.shape_cast %24 : vector<1x128x128xf32> to vector<128x128xf32>
    %cst = arith.constant dense<0.000000e+00> : vector<8x128xf32>
    %26 = tpu.matmul %3, %15, %cst {dimension_numbers = #tpu.dot_dimension_numbers<[1], [0], [0], [1], [0, 0, 1, 1], [], []>} : vector<8x128xf32>, vector<128x128xf32>, vector<8x128xf32> -> vector<8x128xf32>
    %cst_27 = arith.constant dense<0.000000e+00> : vector<8x128xf32>
    %27 = tpu.matmul %5, %17, %cst_27 {dimension_numbers = #tpu.dot_dimension_numbers<[1], [0], [0], [1], [0, 0, 1, 1], [], []>} : vector<8x128xf32>, vector<128x128xf32>, vector<8x128xf32> -> vector<8x128xf32>
    %28 = arith.addf %26, %27 : vector<8x128xf32>
    %cst_28 = arith.constant dense<0.000000e+00> : vector<8x128xf32>
    %29 = tpu.matmul %7, %19, %cst_28 {dimension_numbers = #tpu.dot_dimension_numbers<[1], [0], [0], [1], [0, 0, 1, 1], [], []>} : vector<8x128xf32>, vector<128x128xf32>, vector<8x128xf32> -> vector<8x128xf32>
    %30 = arith.addf %28, %29 : vector<8x128xf32>
    %cst_29 = arith.constant dense<0.000000e+00> : vector<8x128xf32>
    %31 = tpu.matmul %3, %21, %cst_29 {dimension_numbers = #tpu.dot_dimension_numbers<[1], [0], [0], [1], [0, 0, 1, 1], [], []>} : vector<8x128xf32>, vector<128x128xf32>, vector<8x128xf32> -> vector<8x128xf32>
    %cst_30 = arith.constant dense<0.000000e+00> : vector<8x128xf32>
    %32 = tpu.matmul %5, %23, %cst_30 {dimension_numbers = #tpu.dot_dimension_numbers<[1], [0], [0], [1], [0, 0, 1, 1], [], []>} : vector<8x128xf32>, vector<128x128xf32>, vector<8x128xf32> -> vector<8x128xf32>
    %33 = arith.addf %31, %32 : vector<8x128xf32>
    %cst_31 = arith.constant dense<0.000000e+00> : vector<8x128xf32>
    %34 = tpu.matmul %7, %25, %cst_31 {dimension_numbers = #tpu.dot_dimension_numbers<[1], [0], [0], [1], [0, 0, 1, 1], [], []>} : vector<8x128xf32>, vector<128x128xf32>, vector<8x128xf32> -> vector<8x128xf32>
    %35 = arith.addf %33, %34 : vector<8x128xf32>
    %cst_32 = arith.constant dense<0.000000e+00> : vector<8x128xf32>
    %36 = tpu.matmul %5, %15, %cst_32 {dimension_numbers = #tpu.dot_dimension_numbers<[1], [0], [0], [1], [0, 0, 1, 1], [], []>} : vector<8x128xf32>, vector<128x128xf32>, vector<8x128xf32> -> vector<8x128xf32>
    %cst_33 = arith.constant dense<0.000000e+00> : vector<8x128xf32>
    %37 = tpu.matmul %7, %17, %cst_33 {dimension_numbers = #tpu.dot_dimension_numbers<[1], [0], [0], [1], [0, 0, 1, 1], [], []>} : vector<8x128xf32>, vector<128x128xf32>, vector<8x128xf32> -> vector<8x128xf32>
    %38 = arith.addf %36, %37 : vector<8x128xf32>
    %cst_34 = arith.constant dense<0.000000e+00> : vector<8x128xf32>
    %39 = tpu.matmul %9, %19, %cst_34 {dimension_numbers = #tpu.dot_dimension_numbers<[1], [0], [0], [1], [0, 0, 1, 1], [], []>} : vector<8x128xf32>, vector<128x128xf32>, vector<8x128xf32> -> vector<8x128xf32>
    %40 = arith.addf %38, %39 : vector<8x128xf32>
    %cst_35 = arith.constant dense<0.000000e+00> : vector<8x128xf32>
    %41 = tpu.matmul %5, %21, %cst_35 {dimension_numbers = #tpu.dot_dimension_numbers<[1], [0], [0], [1], [0, 0, 1, 1], [], []>} : vector<8x128xf32>, vector<128x128xf32>, vector<8x128xf32> -> vector<8x128xf32>
    %cst_36 = arith.constant dense<0.000000e+00> : vector<8x128xf32>
    %42 = tpu.matmul %7, %23, %cst_36 {dimension_numbers = #tpu.dot_dimension_numbers<[1], [0], [0], [1], [0, 0, 1, 1], [], []>} : vector<8x128xf32>, vector<128x128xf32>, vector<8x128xf32> -> vector<8x128xf32>
    %43 = arith.addf %41, %42 : vector<8x128xf32>
    %cst_37 = arith.constant dense<0.000000e+00> : vector<8x128xf32>
    %44 = tpu.matmul %9, %25, %cst_37 {dimension_numbers = #tpu.dot_dimension_numbers<[1], [0], [0], [1], [0, 0, 1, 1], [], []>} : vector<8x128xf32>, vector<128x128xf32>, vector<8x128xf32> -> vector<8x128xf32>
    %45 = arith.addf %43, %44 : vector<8x128xf32>
    %46 = arith.maximumf %30, %35 : vector<8x128xf32>
    %47 = arith.maximumf %40, %45 : vector<8x128xf32>
    %48 = arith.maximumf %46, %47 : vector<8x128xf32>
    %c0_38 = arith.constant 0 : index
    %c0_39 = arith.constant 0 : index
    %49 = vector.load %arg7[%c0_38, %c0_39] : memref<1x128xf32, #tpu.memory_space<vmem>>, vector<1x128xf32>
    %50 = vector.broadcast %49 : vector<1x128xf32> to vector<8x128xf32>
    %51 = arith.addf %48, %50 : vector<8x128xf32>
    %cst_40 = arith.constant 0.000000e+00 : f32
    %52 = vector.broadcast %cst_40 : f32 to vector<8x128xf32>
    %53 = arith.maximumf %51, %52 : vector<8x128xf32>
    %c0_41 = arith.constant 0 : index
    %c0_42 = arith.constant 0 : index
    %c0_43 = arith.constant 0 : index
    %54 = vector.load %arg5[%c0_41, %c0_42, %c0_43] : memref<3x128x128xf32, #tpu.memory_space<vmem>>, vector<1x128x128xf32>
    %55 = vector.shape_cast %54 : vector<1x128x128xf32> to vector<128x128xf32>
    %c1_44 = arith.constant 1 : index
    %c0_45 = arith.constant 0 : index
    %c0_46 = arith.constant 0 : index
    %56 = vector.load %arg5[%c1_44, %c0_45, %c0_46] : memref<3x128x128xf32, #tpu.memory_space<vmem>>, vector<1x128x128xf32>
    %57 = vector.shape_cast %56 : vector<1x128x128xf32> to vector<128x128xf32>
    %c2_47 = arith.constant 2 : index
    %c0_48 = arith.constant 0 : index
    %c0_49 = arith.constant 0 : index
    %58 = vector.load %arg5[%c2_47, %c0_48, %c0_49] : memref<3x128x128xf32, #tpu.memory_space<vmem>>, vector<1x128x128xf32>
    %59 = vector.shape_cast %58 : vector<1x128x128xf32> to vector<128x128xf32>
    %c0_50 = arith.constant 0 : index
    %c0_51 = arith.constant 0 : index
    %c0_52 = arith.constant 0 : index
    %60 = vector.load %arg6[%c0_50, %c0_51, %c0_52] : memref<3x128x128xf32, #tpu.memory_space<vmem>>, vector<1x128x128xf32>
    %61 = vector.shape_cast %60 : vector<1x128x128xf32> to vector<128x128xf32>
    %c1_53 = arith.constant 1 : index
    %c0_54 = arith.constant 0 : index
    %c0_55 = arith.constant 0 : index
    %62 = vector.load %arg6[%c1_53, %c0_54, %c0_55] : memref<3x128x128xf32, #tpu.memory_space<vmem>>, vector<1x128x128xf32>
    %63 = vector.shape_cast %62 : vector<1x128x128xf32> to vector<128x128xf32>
    %c2_56 = arith.constant 2 : index
    %c0_57 = arith.constant 0 : index
    %c0_58 = arith.constant 0 : index
    %64 = vector.load %arg6[%c2_56, %c0_57, %c0_58] : memref<3x128x128xf32, #tpu.memory_space<vmem>>, vector<1x128x128xf32>
    %65 = vector.shape_cast %64 : vector<1x128x128xf32> to vector<128x128xf32>
    %cst_59 = arith.constant dense<0.000000e+00> : vector<8x128xf32>
    %66 = tpu.matmul %7, %55, %cst_59 {dimension_numbers = #tpu.dot_dimension_numbers<[1], [0], [0], [1], [0, 0, 1, 1], [], []>} : vector<8x128xf32>, vector<128x128xf32>, vector<8x128xf32> -> vector<8x128xf32>
    %cst_60 = arith.constant dense<0.000000e+00> : vector<8x128xf32>
    %67 = tpu.matmul %9, %57, %cst_60 {dimension_numbers = #tpu.dot_dimension_numbers<[1], [0], [0], [1], [0, 0, 1, 1], [], []>} : vector<8x128xf32>, vector<128x128xf32>, vector<8x128xf32> -> vector<8x128xf32>
    %68 = arith.addf %66, %67 : vector<8x128xf32>
    %cst_61 = arith.constant dense<0.000000e+00> : vector<8x128xf32>
    %69 = tpu.matmul %11, %59, %cst_61 {dimension_numbers = #tpu.dot_dimension_numbers<[1], [0], [0], [1], [0, 0, 1, 1], [], []>} : vector<8x128xf32>, vector<128x128xf32>, vector<8x128xf32> -> vector<8x128xf32>
    %70 = arith.addf %68, %69 : vector<8x128xf32>
    %cst_62 = arith.constant dense<0.000000e+00> : vector<8x128xf32>
    %71 = tpu.matmul %7, %61, %cst_62 {dimension_numbers = #tpu.dot_dimension_numbers<[1], [0], [0], [1], [0, 0, 1, 1], [], []>} : vector<8x128xf32>, vector<128x128xf32>, vector<8x128xf32> -> vector<8x128xf32>
    %cst_63 = arith.constant dense<0.000000e+00> : vector<8x128xf32>
    %72 = tpu.matmul %9, %63, %cst_63 {dimension_numbers = #tpu.dot_dimension_numbers<[1], [0], [0], [1], [0, 0, 1, 1], [], []>} : vector<8x128xf32>, vector<128x128xf32>, vector<8x128xf32> -> vector<8x128xf32>
    %73 = arith.addf %71, %72 : vector<8x128xf32>
    %cst_64 = arith.constant dense<0.000000e+00> : vector<8x128xf32>
    %74 = tpu.matmul %11, %65, %cst_64 {dimension_numbers = #tpu.dot_dimension_numbers<[1], [0], [0], [1], [0, 0, 1, 1], [], []>} : vector<8x128xf32>, vector<128x128xf32>, vector<8x128xf32> -> vector<8x128xf32>
    %75 = arith.addf %73, %74 : vector<8x128xf32>
    %cst_65 = arith.constant dense<0.000000e+00> : vector<8x128xf32>
    %76 = tpu.matmul %9, %55, %cst_65 {dimension_numbers = #tpu.dot_dimension_numbers<[1], [0], [0], [1], [0, 0, 1, 1], [], []>} : vector<8x128xf32>, vector<128x128xf32>, vector<8x128xf32> -> vector<8x128xf32>
    %cst_66 = arith.constant dense<0.000000e+00> : vector<8x128xf32>
    %77 = tpu.matmul %11, %57, %cst_66 {dimension_numbers = #tpu.dot_dimension_numbers<[1], [0], [0], [1], [0, 0, 1, 1], [], []>} : vector<8x128xf32>, vector<128x128xf32>, vector<8x128xf32> -> vector<8x128xf32>
    %78 = arith.addf %76, %77 : vector<8x128xf32>
    %cst_67 = arith.constant dense<0.000000e+00> : vector<8x128xf32>
    %79 = tpu.matmul %13, %59, %cst_67 {dimension_numbers = #tpu.dot_dimension_numbers<[1], [0], [0], [1], [0, 0, 1, 1], [], []>} : vector<8x128xf32>, vector<128x128xf32>, vector<8x128xf32> -> vector<8x128xf32>
    %80 = arith.addf %78, %79 : vector<8x128xf32>
    %cst_68 = arith.constant dense<0.000000e+00> : vector<8x128xf32>
    %81 = tpu.matmul %9, %61, %cst_68 {dimension_numbers = #tpu.dot_dimension_numbers<[1], [0], [0], [1], [0, 0, 1, 1], [], []>} : vector<8x128xf32>, vector<128x128xf32>, vector<8x128xf32> -> vector<8x128xf32>
    %cst_69 = arith.constant dense<0.000000e+00> : vector<8x128xf32>
    %82 = tpu.matmul %11, %63, %cst_69 {dimension_numbers = #tpu.dot_dimension_numbers<[1], [0], [0], [1], [0, 0, 1, 1], [], []>} : vector<8x128xf32>, vector<128x128xf32>, vector<8x128xf32> -> vector<8x128xf32>
    %83 = arith.addf %81, %82 : vector<8x128xf32>
    %cst_70 = arith.constant dense<0.000000e+00> : vector<8x128xf32>
    %84 = tpu.matmul %13, %65, %cst_70 {dimension_numbers = #tpu.dot_dimension_numbers<[1], [0], [0], [1], [0, 0, 1, 1], [], []>} : vector<8x128xf32>, vector<128x128xf32>, vector<8x128xf32> -> vector<8x128xf32>
    %85 = arith.addf %83, %84 : vector<8x128xf32>
    %86 = arith.maximumf %70, %75 : vector<8x128xf32>
    %87 = arith.maximumf %80, %85 : vector<8x128xf32>
    %88 = arith.maximumf %86, %87 : vector<8x128xf32>
    %c0_71 = arith.constant 0 : index
    %c0_72 = arith.constant 0 : index
    %89 = vector.load %arg7[%c0_71, %c0_72] : memref<1x128xf32, #tpu.memory_space<vmem>>, vector<1x128xf32>
    %90 = vector.broadcast %89 : vector<1x128xf32> to vector<8x128xf32>
    %91 = arith.addf %88, %90 : vector<8x128xf32>
    %cst_73 = arith.constant 0.000000e+00 : f32
    %92 = vector.broadcast %cst_73 : f32 to vector<8x128xf32>
    %93 = arith.maximumf %91, %92 : vector<8x128xf32>
    %94 = vector.shape_cast %53 : vector<8x128xf32> to vector<1x8x128xf32>
    %95 = vector.shape_cast %93 : vector<8x128xf32> to vector<1x8x128xf32>
    %cst_74 = arith.constant 0.000000e+00 : f32
    %96 = vector.broadcast %cst_74 : f32 to vector<1x1x128xf32>
    %97 = vector.extract_strided_slice %95 {offsets = [0, 0, 0], sizes = [1, 7, 128], strides = [1, 1, 1]} : vector<1x8x128xf32> to vector<1x7x128xf32>
    %98 = tpu.concatenate %96, %97 in 1 : vector<1x1x128xf32>, vector<1x7x128xf32> -> vector<1x8x128xf32>
    %99 = vector.shape_cast %98 : vector<1x8x128xf32> to vector<8x128xf32>
    %100 = vector.extract_strided_slice %94 {offsets = [0, 1, 0], sizes = [1, 7, 128], strides = [1, 1, 1]} : vector<1x8x128xf32> to vector<1x7x128xf32>
    %101 = tpu.concatenate %100, %96 in 1 : vector<1x7x128xf32>, vector<1x1x128xf32> -> vector<1x8x128xf32>
    %102 = vector.shape_cast %101 : vector<1x8x128xf32> to vector<8x128xf32>
    %c0_75 = arith.constant 0 : index
    %c0_76 = arith.constant 0 : index
    %c0_77 = arith.constant 0 : index
    %103 = vector.load %arg8[%c0_75, %c0_76, %c0_77] : memref<3x128x128xf32, #tpu.memory_space<vmem>>, vector<1x128x128xf32>
    %104 = vector.shape_cast %103 : vector<1x128x128xf32> to vector<128x128xf32>
    %c1_78 = arith.constant 1 : index
    %c0_79 = arith.constant 0 : index
    %c0_80 = arith.constant 0 : index
    %105 = vector.load %arg8[%c1_78, %c0_79, %c0_80] : memref<3x128x128xf32, #tpu.memory_space<vmem>>, vector<1x128x128xf32>
    %106 = vector.shape_cast %105 : vector<1x128x128xf32> to vector<128x128xf32>
    %c2_81 = arith.constant 2 : index
    %c0_82 = arith.constant 0 : index
    %c0_83 = arith.constant 0 : index
    %107 = vector.load %arg8[%c2_81, %c0_82, %c0_83] : memref<3x128x128xf32, #tpu.memory_space<vmem>>, vector<1x128x128xf32>
    %108 = vector.shape_cast %107 : vector<1x128x128xf32> to vector<128x128xf32>
    %c0_84 = arith.constant 0 : index
    %c0_85 = arith.constant 0 : index
    %c0_86 = arith.constant 0 : index
    %109 = vector.load %arg9[%c0_84, %c0_85, %c0_86] : memref<3x128x128xf32, #tpu.memory_space<vmem>>, vector<1x128x128xf32>
    %110 = vector.shape_cast %109 : vector<1x128x128xf32> to vector<128x128xf32>
    %c1_87 = arith.constant 1 : index
    %c0_88 = arith.constant 0 : index
    %c0_89 = arith.constant 0 : index
    %111 = vector.load %arg9[%c1_87, %c0_88, %c0_89] : memref<3x128x128xf32, #tpu.memory_space<vmem>>, vector<1x128x128xf32>
    %112 = vector.shape_cast %111 : vector<1x128x128xf32> to vector<128x128xf32>
    %c2_90 = arith.constant 2 : index
    %c0_91 = arith.constant 0 : index
    %c0_92 = arith.constant 0 : index
    %113 = vector.load %arg9[%c2_90, %c0_91, %c0_92] : memref<3x128x128xf32, #tpu.memory_space<vmem>>, vector<1x128x128xf32>
    %114 = vector.shape_cast %113 : vector<1x128x128xf32> to vector<128x128xf32>
    %cst_93 = arith.constant dense<0.000000e+00> : vector<8x128xf32>
    %115 = tpu.matmul %99, %104, %cst_93 {dimension_numbers = #tpu.dot_dimension_numbers<[1], [0], [0], [1], [0, 0, 1, 1], [], []>} : vector<8x128xf32>, vector<128x128xf32>, vector<8x128xf32> -> vector<8x128xf32>
    %cst_94 = arith.constant dense<0.000000e+00> : vector<8x128xf32>
    %116 = tpu.matmul %53, %106, %cst_94 {dimension_numbers = #tpu.dot_dimension_numbers<[1], [0], [0], [1], [0, 0, 1, 1], [], []>} : vector<8x128xf32>, vector<128x128xf32>, vector<8x128xf32> -> vector<8x128xf32>
    %117 = arith.addf %115, %116 : vector<8x128xf32>
    %cst_95 = arith.constant dense<0.000000e+00> : vector<8x128xf32>
    %118 = tpu.matmul %93, %108, %cst_95 {dimension_numbers = #tpu.dot_dimension_numbers<[1], [0], [0], [1], [0, 0, 1, 1], [], []>} : vector<8x128xf32>, vector<128x128xf32>, vector<8x128xf32> -> vector<8x128xf32>
    %119 = arith.addf %117, %118 : vector<8x128xf32>
    %cst_96 = arith.constant dense<0.000000e+00> : vector<8x128xf32>
    %120 = tpu.matmul %99, %110, %cst_96 {dimension_numbers = #tpu.dot_dimension_numbers<[1], [0], [0], [1], [0, 0, 1, 1], [], []>} : vector<8x128xf32>, vector<128x128xf32>, vector<8x128xf32> -> vector<8x128xf32>
    %cst_97 = arith.constant dense<0.000000e+00> : vector<8x128xf32>
    %121 = tpu.matmul %53, %112, %cst_97 {dimension_numbers = #tpu.dot_dimension_numbers<[1], [0], [0], [1], [0, 0, 1, 1], [], []>} : vector<8x128xf32>, vector<128x128xf32>, vector<8x128xf32> -> vector<8x128xf32>
    %122 = arith.addf %120, %121 : vector<8x128xf32>
    %cst_98 = arith.constant dense<0.000000e+00> : vector<8x128xf32>
    %123 = tpu.matmul %93, %114, %cst_98 {dimension_numbers = #tpu.dot_dimension_numbers<[1], [0], [0], [1], [0, 0, 1, 1], [], []>} : vector<8x128xf32>, vector<128x128xf32>, vector<8x128xf32> -> vector<8x128xf32>
    %124 = arith.addf %122, %123 : vector<8x128xf32>
    %cst_99 = arith.constant dense<0.000000e+00> : vector<8x128xf32>
    %125 = tpu.matmul %53, %104, %cst_99 {dimension_numbers = #tpu.dot_dimension_numbers<[1], [0], [0], [1], [0, 0, 1, 1], [], []>} : vector<8x128xf32>, vector<128x128xf32>, vector<8x128xf32> -> vector<8x128xf32>
    %cst_100 = arith.constant dense<0.000000e+00> : vector<8x128xf32>
    %126 = tpu.matmul %93, %106, %cst_100 {dimension_numbers = #tpu.dot_dimension_numbers<[1], [0], [0], [1], [0, 0, 1, 1], [], []>} : vector<8x128xf32>, vector<128x128xf32>, vector<8x128xf32> -> vector<8x128xf32>
    %127 = arith.addf %125, %126 : vector<8x128xf32>
    %cst_101 = arith.constant dense<0.000000e+00> : vector<8x128xf32>
    %128 = tpu.matmul %102, %108, %cst_101 {dimension_numbers = #tpu.dot_dimension_numbers<[1], [0], [0], [1], [0, 0, 1, 1], [], []>} : vector<8x128xf32>, vector<128x128xf32>, vector<8x128xf32> -> vector<8x128xf32>
    %129 = arith.addf %127, %128 : vector<8x128xf32>
    %cst_102 = arith.constant dense<0.000000e+00> : vector<8x128xf32>
    %130 = tpu.matmul %53, %110, %cst_102 {dimension_numbers = #tpu.dot_dimension_numbers<[1], [0], [0], [1], [0, 0, 1, 1], [], []>} : vector<8x128xf32>, vector<128x128xf32>, vector<8x128xf32> -> vector<8x128xf32>
    %cst_103 = arith.constant dense<0.000000e+00> : vector<8x128xf32>
    %131 = tpu.matmul %93, %112, %cst_103 {dimension_numbers = #tpu.dot_dimension_numbers<[1], [0], [0], [1], [0, 0, 1, 1], [], []>} : vector<8x128xf32>, vector<128x128xf32>, vector<8x128xf32> -> vector<8x128xf32>
    %132 = arith.addf %130, %131 : vector<8x128xf32>
    %cst_104 = arith.constant dense<0.000000e+00> : vector<8x128xf32>
    %133 = tpu.matmul %102, %114, %cst_104 {dimension_numbers = #tpu.dot_dimension_numbers<[1], [0], [0], [1], [0, 0, 1, 1], [], []>} : vector<8x128xf32>, vector<128x128xf32>, vector<8x128xf32> -> vector<8x128xf32>
    %134 = arith.addf %132, %133 : vector<8x128xf32>
    %135 = arith.maximumf %119, %124 : vector<8x128xf32>
    %136 = arith.maximumf %129, %134 : vector<8x128xf32>
    %137 = arith.maximumf %135, %136 : vector<8x128xf32>
    %c0_105 = arith.constant 0 : index
    %c0_106 = arith.constant 0 : index
    %138 = vector.load %arg10[%c0_105, %c0_106] : memref<1x128xf32, #tpu.memory_space<vmem>>, vector<1x128xf32>
    %139 = vector.broadcast %138 : vector<1x128xf32> to vector<8x128xf32>
    %140 = arith.addf %137, %139 : vector<8x128xf32>
    %cst_107 = arith.constant 0.000000e+00 : f32
    %141 = vector.broadcast %cst_107 : f32 to vector<8x128xf32>
    %142 = arith.maximumf %140, %141 : vector<8x128xf32>
    %143 = vector.shape_cast %142 : vector<8x128xf32> to vector<1x8x128xf32>
    %144 = vector.extract_strided_slice %143 {offsets = [0, 0, 0], sizes = [1, 1, 128], strides = [1, 1, 1]} : vector<1x8x128xf32> to vector<1x1x128xf32>
    %145 = vector.shape_cast %144 : vector<1x1x128xf32> to vector<1x128xf32>
    %c0_108 = arith.constant 0 : index
    %c0_109 = arith.constant 0 : index
    %c0_110 = arith.constant 0 : index
    %146 = vector.load %arg11[%c0_108, %c0_109, %c0_110] : memref<8x128x128xf32, #tpu.memory_space<vmem>>, vector<1x128x128xf32>
    %147 = vector.shape_cast %146 : vector<1x128x128xf32> to vector<128x128xf32>
    %cst_111 = arith.constant dense<0.000000e+00> : vector<1x128xf32>
    %148 = tpu.matmul %145, %147, %cst_111 {dimension_numbers = #tpu.dot_dimension_numbers<[1], [0], [0], [1], [0, 0, 1, 1], [], []>} : vector<1x128xf32>, vector<128x128xf32>, vector<1x128xf32> -> vector<1x128xf32>
    %149 = vector.extract_strided_slice %143 {offsets = [0, 1, 0], sizes = [1, 1, 128], strides = [1, 1, 1]} : vector<1x8x128xf32> to vector<1x1x128xf32>
    %150 = vector.shape_cast %149 : vector<1x1x128xf32> to vector<1x128xf32>
    %c1_112 = arith.constant 1 : index
    %c0_113 = arith.constant 0 : index
    %c0_114 = arith.constant 0 : index
    %151 = vector.load %arg11[%c1_112, %c0_113, %c0_114] : memref<8x128x128xf32, #tpu.memory_space<vmem>>, vector<1x128x128xf32>
    %152 = vector.shape_cast %151 : vector<1x128x128xf32> to vector<128x128xf32>
    %cst_115 = arith.constant dense<0.000000e+00> : vector<1x128xf32>
    %153 = tpu.matmul %150, %152, %cst_115 {dimension_numbers = #tpu.dot_dimension_numbers<[1], [0], [0], [1], [0, 0, 1, 1], [], []>} : vector<1x128xf32>, vector<128x128xf32>, vector<1x128xf32> -> vector<1x128xf32>
    %154 = arith.addf %148, %153 : vector<1x128xf32>
    %155 = vector.extract_strided_slice %143 {offsets = [0, 2, 0], sizes = [1, 1, 128], strides = [1, 1, 1]} : vector<1x8x128xf32> to vector<1x1x128xf32>
    %156 = vector.shape_cast %155 : vector<1x1x128xf32> to vector<1x128xf32>
    %c2_116 = arith.constant 2 : index
    %c0_117 = arith.constant 0 : index
    %c0_118 = arith.constant 0 : index
    %157 = vector.load %arg11[%c2_116, %c0_117, %c0_118] : memref<8x128x128xf32, #tpu.memory_space<vmem>>, vector<1x128x128xf32>
    %158 = vector.shape_cast %157 : vector<1x128x128xf32> to vector<128x128xf32>
    %cst_119 = arith.constant dense<0.000000e+00> : vector<1x128xf32>
    %159 = tpu.matmul %156, %158, %cst_119 {dimension_numbers = #tpu.dot_dimension_numbers<[1], [0], [0], [1], [0, 0, 1, 1], [], []>} : vector<1x128xf32>, vector<128x128xf32>, vector<1x128xf32> -> vector<1x128xf32>
    %160 = arith.addf %154, %159 : vector<1x128xf32>
    %161 = vector.extract_strided_slice %143 {offsets = [0, 3, 0], sizes = [1, 1, 128], strides = [1, 1, 1]} : vector<1x8x128xf32> to vector<1x1x128xf32>
    %162 = vector.shape_cast %161 : vector<1x1x128xf32> to vector<1x128xf32>
    %c3 = arith.constant 3 : index
    %c0_120 = arith.constant 0 : index
    %c0_121 = arith.constant 0 : index
    %163 = vector.load %arg11[%c3, %c0_120, %c0_121] : memref<8x128x128xf32, #tpu.memory_space<vmem>>, vector<1x128x128xf32>
    %164 = vector.shape_cast %163 : vector<1x128x128xf32> to vector<128x128xf32>
    %cst_122 = arith.constant dense<0.000000e+00> : vector<1x128xf32>
    %165 = tpu.matmul %162, %164, %cst_122 {dimension_numbers = #tpu.dot_dimension_numbers<[1], [0], [0], [1], [0, 0, 1, 1], [], []>} : vector<1x128xf32>, vector<128x128xf32>, vector<1x128xf32> -> vector<1x128xf32>
    %166 = arith.addf %160, %165 : vector<1x128xf32>
    %167 = vector.extract_strided_slice %143 {offsets = [0, 4, 0], sizes = [1, 1, 128], strides = [1, 1, 1]} : vector<1x8x128xf32> to vector<1x1x128xf32>
    %168 = vector.shape_cast %167 : vector<1x1x128xf32> to vector<1x128xf32>
    %c4 = arith.constant 4 : index
    %c0_123 = arith.constant 0 : index
    %c0_124 = arith.constant 0 : index
    %169 = vector.load %arg11[%c4, %c0_123, %c0_124] : memref<8x128x128xf32, #tpu.memory_space<vmem>>, vector<1x128x128xf32>
    %170 = vector.shape_cast %169 : vector<1x128x128xf32> to vector<128x128xf32>
    %cst_125 = arith.constant dense<0.000000e+00> : vector<1x128xf32>
    %171 = tpu.matmul %168, %170, %cst_125 {dimension_numbers = #tpu.dot_dimension_numbers<[1], [0], [0], [1], [0, 0, 1, 1], [], []>} : vector<1x128xf32>, vector<128x128xf32>, vector<1x128xf32> -> vector<1x128xf32>
    %172 = arith.addf %166, %171 : vector<1x128xf32>
    %173 = vector.extract_strided_slice %143 {offsets = [0, 5, 0], sizes = [1, 1, 128], strides = [1, 1, 1]} : vector<1x8x128xf32> to vector<1x1x128xf32>
    %174 = vector.shape_cast %173 : vector<1x1x128xf32> to vector<1x128xf32>
    %c5 = arith.constant 5 : index
    %c0_126 = arith.constant 0 : index
    %c0_127 = arith.constant 0 : index
    %175 = vector.load %arg11[%c5, %c0_126, %c0_127] : memref<8x128x128xf32, #tpu.memory_space<vmem>>, vector<1x128x128xf32>
    %176 = vector.shape_cast %175 : vector<1x128x128xf32> to vector<128x128xf32>
    %cst_128 = arith.constant dense<0.000000e+00> : vector<1x128xf32>
    %177 = tpu.matmul %174, %176, %cst_128 {dimension_numbers = #tpu.dot_dimension_numbers<[1], [0], [0], [1], [0, 0, 1, 1], [], []>} : vector<1x128xf32>, vector<128x128xf32>, vector<1x128xf32> -> vector<1x128xf32>
    %178 = arith.addf %172, %177 : vector<1x128xf32>
    %179 = vector.extract_strided_slice %143 {offsets = [0, 6, 0], sizes = [1, 1, 128], strides = [1, 1, 1]} : vector<1x8x128xf32> to vector<1x1x128xf32>
    %180 = vector.shape_cast %179 : vector<1x1x128xf32> to vector<1x128xf32>
    %c6 = arith.constant 6 : index
    %c0_129 = arith.constant 0 : index
    %c0_130 = arith.constant 0 : index
    %181 = vector.load %arg11[%c6, %c0_129, %c0_130] : memref<8x128x128xf32, #tpu.memory_space<vmem>>, vector<1x128x128xf32>
    %182 = vector.shape_cast %181 : vector<1x128x128xf32> to vector<128x128xf32>
    %cst_131 = arith.constant dense<0.000000e+00> : vector<1x128xf32>
    %183 = tpu.matmul %180, %182, %cst_131 {dimension_numbers = #tpu.dot_dimension_numbers<[1], [0], [0], [1], [0, 0, 1, 1], [], []>} : vector<1x128xf32>, vector<128x128xf32>, vector<1x128xf32> -> vector<1x128xf32>
    %184 = arith.addf %178, %183 : vector<1x128xf32>
    %185 = vector.extract_strided_slice %143 {offsets = [0, 7, 0], sizes = [1, 1, 128], strides = [1, 1, 1]} : vector<1x8x128xf32> to vector<1x1x128xf32>
    %186 = vector.shape_cast %185 : vector<1x1x128xf32> to vector<1x128xf32>
    %c7 = arith.constant 7 : index
    %c0_132 = arith.constant 0 : index
    %c0_133 = arith.constant 0 : index
    %187 = vector.load %arg11[%c7, %c0_132, %c0_133] : memref<8x128x128xf32, #tpu.memory_space<vmem>>, vector<1x128x128xf32>
    %188 = vector.shape_cast %187 : vector<1x128x128xf32> to vector<128x128xf32>
    %cst_134 = arith.constant dense<0.000000e+00> : vector<1x128xf32>
    %189 = tpu.matmul %186, %188, %cst_134 {dimension_numbers = #tpu.dot_dimension_numbers<[1], [0], [0], [1], [0, 0, 1, 1], [], []>} : vector<1x128xf32>, vector<128x128xf32>, vector<1x128xf32> -> vector<1x128xf32>
    %190 = arith.addf %184, %189 : vector<1x128xf32>
    %c0_135 = arith.constant 0 : index
    %c0_136 = arith.constant 0 : index
    %191 = vector.load %arg12[%c0_135, %c0_136] : memref<1x128xf32, #tpu.memory_space<vmem>>, vector<1x128xf32>
    %192 = arith.addf %190, %191 : vector<1x128xf32>
    %cst_137 = arith.constant 0.000000e+00 : f32
    %193 = vector.broadcast %cst_137 : f32 to vector<1x128xf32>
    %194 = arith.maximumf %192, %193 : vector<1x128xf32>
    %c0_138 = arith.constant 0 : index
    %c0_139 = arith.constant 0 : index
    %195 = vector.load %arg13[%c0_138, %c0_139] : memref<128x128xf32, #tpu.memory_space<vmem>>, vector<128x128xf32>
    %cst_140 = arith.constant dense<0.000000e+00> : vector<1x128xf32>
    %196 = tpu.matmul %194, %195, %cst_140 {dimension_numbers = #tpu.dot_dimension_numbers<[1], [0], [0], [1], [0, 0, 1, 1], [], []>} : vector<1x128xf32>, vector<128x128xf32>, vector<1x128xf32> -> vector<1x128xf32>
    %c0_141 = arith.constant 0 : index
    %c0_142 = arith.constant 0 : index
    %197 = vector.load %arg14[%c0_141, %c0_142] : memref<1x128xf32, #tpu.memory_space<vmem>>, vector<1x128xf32>
    %198 = arith.addf %196, %197 : vector<1x128xf32>
    %cst_143 = arith.constant 0.000000e+00 : f32
    %199 = vector.broadcast %cst_143 : f32 to vector<1x128xf32>
    %200 = arith.maximumf %198, %199 : vector<1x128xf32>
    %c0_144 = arith.constant 0 : index
    %c0_145 = arith.constant 0 : index
    %201 = vector.load %arg15[%c0_144, %c0_145] : memref<128x128xf32, #tpu.memory_space<vmem>>, vector<128x128xf32>
    %cst_146 = arith.constant dense<0.000000e+00> : vector<1x128xf32>
    %202 = tpu.matmul %200, %201, %cst_146 {dimension_numbers = #tpu.dot_dimension_numbers<[1], [0], [0], [1], [0, 0, 1, 1], [], []>} : vector<1x128xf32>, vector<128x128xf32>, vector<1x128xf32> -> vector<1x128xf32>
    %c0_147 = arith.constant 0 : index
    %c0_148 = arith.constant 0 : index
    %203 = vector.load %arg16[%c0_147, %c0_148] : memref<1x128xf32, #tpu.memory_space<vmem>>, vector<1x128xf32>
    %204 = arith.addf %202, %203 : vector<1x128xf32>
    %cst_149 = arith.constant dense<0xFF800000> : vector<1xf32>
    %205 = vector.multi_reduction <maximumf>, %204, %cst_149 [1] : vector<1x128xf32> to vector<1xf32>
    %206 = vector.shape_cast %205 : vector<1xf32> to vector<1x1xf32>
    %207 = vector.broadcast %206 : vector<1x1xf32> to vector<1x128xf32>
    %208 = arith.subf %204, %207 : vector<1x128xf32>
    %209 = math.exp %208 : vector<1x128xf32>
    %cst_150 = arith.constant dense<0.000000e+00> : vector<1xf32>
    %210 = vector.multi_reduction <add>, %209, %cst_150 [1] : vector<1x128xf32> to vector<1xf32>
    %211 = vector.shape_cast %210 : vector<1xf32> to vector<1x1xf32>
    %212 = math.log %211 : vector<1x1xf32>
    %213 = vector.broadcast %212 : vector<1x1xf32> to vector<1x128xf32>
    %214 = arith.subf %208, %213 : vector<1x128xf32>
    %c0_151 = arith.constant 0 : index
    %c0_152 = arith.constant 0 : index
    %c0_153 = arith.constant 0 : index
    %215 = vector.load %arg17[%c0_151, %c0_152, %c0_153] : memref<1x1x128xf32, #tpu.memory_space<vmem>>, vector<1x1x128xf32>
    %216 = vector.shape_cast %215 : vector<1x1x128xf32> to vector<1x128xf32>
    %217 = vector.shape_cast %214 : vector<1x128xf32> to vector<1x1x128xf32>
    tpu.vector_store %arg17[%c0_151, %c0_152, %c0_153], %217 {strides = array<i32>} : memref<1x1x128xf32, #tpu.memory_space<vmem>>, vector<1x1x128xf32>,
    return
  }
  func.func @transform_0(%arg0: i32) -> (i32, i32, i32) {
    %c0_i32 = arith.constant 0 : i32
    %c0_i32_0 = arith.constant 0 : i32
    %c0_i32_1 = arith.constant 0 : i32
    return %arg0, %c0_i32, %c0_i32_0 : i32, i32, i32
  }
  func.func @transform_1(%arg0: i32) -> (i32, i32, i32) {
    %c0_i32 = arith.constant 0 : i32
    %c0_i32_0 = arith.constant 0 : i32
    %c0_i32_1 = arith.constant 0 : i32
    return %arg0, %c0_i32, %c0_i32_0 : i32, i32, i32
  }
  func.func @transform_2(%arg0: i32) -> (i32, i32, i32) {
    %c0_i32 = arith.constant 0 : i32
    %c0_i32_0 = arith.constant 0 : i32
    %c0_i32_1 = arith.constant 0 : i32
    return %arg0, %c0_i32, %c0_i32_0 : i32, i32, i32
  }
  func.func @transform_3(%arg0: i32) -> (i32, i32, i32) {
    %c0_i32 = arith.constant 0 : i32
    %c0_i32_0 = arith.constant 0 : i32
    %c0_i32_1 = arith.constant 0 : i32
    return %arg0, %c0_i32, %c0_i32_0 : i32, i32, i32
  }
  func.func @transform_4(%arg0: i32) -> (i32, i32, i32) {
    %c0_i32 = arith.constant 0 : i32
    %c0_i32_0 = arith.constant 0 : i32
    %c0_i32_1 = arith.constant 0 : i32
    %c0_i32_2 = arith.constant 0 : i32
    return %c0_i32, %c0_i32_0, %c0_i32_1 : i32, i32, i32
  }
  func.func @transform_5(%arg0: i32) -> (i32, i32, i32) {
    %c0_i32 = arith.constant 0 : i32
    %c0_i32_0 = arith.constant 0 : i32
    %c0_i32_1 = arith.constant 0 : i32
    %c0_i32_2 = arith.constant 0 : i32
    return %c0_i32, %c0_i32_0, %c0_i32_1 : i32, i32, i32
  }
  func.func @transform_6(%arg0: i32) -> (i32, i32) {
    %c0_i32 = arith.constant 0 : i32
    %c0_i32_0 = arith.constant 0 : i32
    %c0_i32_1 = arith.constant 0 : i32
    return %c0_i32, %c0_i32_0 : i32, i32
  }
  func.func @transform_7(%arg0: i32) -> (i32, i32, i32) {
    %c0_i32 = arith.constant 0 : i32
    %c0_i32_0 = arith.constant 0 : i32
    %c0_i32_1 = arith.constant 0 : i32
    %c0_i32_2 = arith.constant 0 : i32
    return %c0_i32, %c0_i32_0, %c0_i32_1 : i32, i32, i32
  }
  func.func @transform_8(%arg0: i32) -> (i32, i32, i32) {
    %c0_i32 = arith.constant 0 : i32
    %c0_i32_0 = arith.constant 0 : i32
    %c0_i32_1 = arith.constant 0 : i32
    %c0_i32_2 = arith.constant 0 : i32
    return %c0_i32, %c0_i32_0, %c0_i32_1 : i32, i32, i32
  }
  func.func @transform_9(%arg0: i32) -> (i32, i32) {
    %c0_i32 = arith.constant 0 : i32
    %c0_i32_0 = arith.constant 0 : i32
    %c0_i32_1 = arith.constant 0 : i32
    return %c0_i32, %c0_i32_0 : i32, i32
  }
  func.func @transform_10(%arg0: i32) -> (i32, i32, i32) {
    %c0_i32 = arith.constant 0 : i32
    %c0_i32_0 = arith.constant 0 : i32
    %c0_i32_1 = arith.constant 0 : i32
    %c0_i32_2 = arith.constant 0 : i32
    return %c0_i32, %c0_i32_0, %c0_i32_1 : i32, i32, i32
  }
  func.func @transform_11(%arg0: i32) -> (i32, i32) {
    %c0_i32 = arith.constant 0 : i32
    %c0_i32_0 = arith.constant 0 : i32
    %c0_i32_1 = arith.constant 0 : i32
    return %c0_i32, %c0_i32_0 : i32, i32
  }
  func.func @transform_12(%arg0: i32) -> (i32, i32) {
    %c0_i32 = arith.constant 0 : i32
    %c0_i32_0 = arith.constant 0 : i32
    %c0_i32_1 = arith.constant 0 : i32
    return %c0_i32, %c0_i32_0 : i32, i32
  }
  func.func @transform_13(%arg0: i32) -> (i32, i32) {
    %c0_i32 = arith.constant 0 : i32
    %c0_i32_0 = arith.constant 0 : i32
    %c0_i32_1 = arith.constant 0 : i32
    return %c0_i32, %c0_i32_0 : i32, i32
  }
  func.func @transform_14(%arg0: i32) -> (i32, i32) {
    %c0_i32 = arith.constant 0 : i32
    %c0_i32_0 = arith.constant 0 : i32
    %c0_i32_1 = arith.constant 0 : i32
    return %c0_i32, %c0_i32_0 : i32, i32
  }
  func.func @transform_15(%arg0: i32) -> (i32, i32) {
    %c0_i32 = arith.constant 0 : i32
    %c0_i32_0 = arith.constant 0 : i32
    %c0_i32_1 = arith.constant 0 : i32
    return %c0_i32, %c0_i32_0 : i32, i32
  }
  func.func @transform_16(%arg0: i32) -> (i32, i32, i32) {
    %c0_i32 = arith.constant 0 : i32
    %c0_i32_0 = arith.constant 0 : i32
    %c0_i32_1 = arith.constant 0 : i32
    return %arg0, %c0_i32, %c0_i32_0 : i32, i32, i32
  }
}

</mosaic_0001>

<llo_original>
// kernel: net_forward.1
$region0: #{net_forward.1}
  #allocation0 [shape = 'u32[]', space=smem, size = 0x4, offset = 0x4, fixed_abs, tag = 'smem constant byte address 0x4 - core index']
  #allocation1 [shape = 'u32[144,128]{1,0:T(1,128)}', space=vmem, size = 0x12000, scoped, tag = 'internal scratch']
  %s0 = inlined_call_operand.vmem [shape: f32[2,9,128], index: 0, kind: input, shape index: {}]
  %s1 = inlined_call_operand.vmem [shape: f32[2,9,128], index: 1, kind: input, shape index: {}]
  %s2 = inlined_call_operand.vmem [shape: f32[2,8,128], index: 2, kind: input, shape index: {}]
  %s3 = inlined_call_operand.vmem [shape: f32[2,8,128], index: 3, kind: input, shape index: {}]
  %s4 = inlined_call_operand.vmem [shape: f32[3,128,128], index: 4, kind: input, shape index: {}]
  %s5 = inlined_call_operand.vmem [shape: f32[3,128,128], index: 5, kind: input, shape index: {}]
  %s6 = inlined_call_operand.vmem [shape: f32[1,128], index: 6, kind: input, shape index: {}]
  %s7 = inlined_call_operand.hbm [shape: f32[3,128,128], index: 7, kind: input, shape index: {}]
  %s8 = inlined_call_operand.hbm [shape: f32[3,128,128], index: 8, kind: input, shape index: {}]
  %s9 = inlined_call_operand.vmem [shape: f32[1,128], index: 9, kind: input, shape index: {}]
  %s10 = inlined_call_operand.hbm [shape: f32[8,128,128], index: 10, kind: input, shape index: {}]
  %s11 = inlined_call_operand.vmem [shape: f32[1,128], index: 11, kind: input, shape index: {}]
  %s12 = inlined_call_operand.vmem [shape: f32[128,128], index: 12, kind: input, shape index: {}]
  %s13 = inlined_call_operand.vmem [shape: f32[1,128], index: 13, kind: input, shape index: {}]
  %s14 = inlined_call_operand.hbm [shape: f32[128,128], index: 14, kind: input, shape index: {}]
  %s15 = inlined_call_operand.vmem [shape: f32[1,128], index: 15, kind: input, shape index: {}]
  %s16 = inlined_call_operand.hbm [shape: f32[2,1,128], index: 16, kind: output, shape index: {}]
  %s17 = sld [smem:[#allocation0]]
  $region113: #{net_forward.1} parent=0
    _
  %s19 = ssub.s32 1, %s17
  %s20 = scalar_select 0, %s19, %s17
  $region1: #{net_forward.1} parent=0
    #allocation2 [shape = 'u8[196608]{0}', space=vmem, size = 0x30000, scoped, tag = 'input window, operand 7, single buffered']
    #allocation3 [shape = 's32[2]{0}', space=sflag, size = 0x8, scoped, tag = 'scoped memory for net_forward.1']
    #allocation4 [shape = 's32[2]{0}', space=sflag, size = 0x8, scoped, tag = 'scoped memory for net_forward.1']
    #allocation5 [shape = 'u8[196608]{0}', space=vmem, size = 0x30000, scoped, tag = 'input window, operand 8, single buffered']
    #allocation6 [shape = 's32[1]{0}', space=sflag, size = 0x4, scoped, tag = 'scoped memory for net_forward.1']
    #allocation7 [shape = 'u8[524288]{0}', space=vmem, size = 0x80000, scoped, tag = 'input window, operand 10, single buffered']
    #allocation8 [shape = 'u8[65536]{0}', space=vmem, size = 0x10000, scoped, tag = 'input window, operand 14, single buffered']
    #allocation9 [shape = 's32[1]{0}', space=sflag, size = 0x4, scoped, tag = 'scoped memory for net_forward.1']
    #allocation10 [shape = 'u8[1024]{0}', space=vmem, size = 0x400, scoped, tag = 'output window, operand 0']
    %21 = vsyncpa [#allocation3], 0
    %22 = vsyncpa [#allocation6], 0
    %23 = vsyncpa [#allocation9], 0
    %24 = vsyncpa [#allocation4], 0
    %s25 = scalar_lea.sflag [#allocation4], 1
    %26 = vsyncpa %s25, 0
    loop: start=0, step=1, limit=4
    $region2: #{net_forward.1} parent=1 // loop_pre_header
      _
    $region3: #{net_forward.1} parent=1 // loop_header
      %s28 = sphi 0, %s32
      %p29 = scmp.ge.s32.totalorder %s28, 4
      %s38 = sphi 0, %s40
      %s41 = sphi 0, %s38
      %s42 = sphi 0, %s41
      %s58 = sphi 0, %s42
      %s64 = sphi 0, %s66
      %s67 = sphi 0, %s64
      %s68 = sphi 0, %s67
      %s84 = sphi 0, %s68
      %s90 = sphi 0, %s92
      %s93 = sphi 0, %s90
      %s94 = sphi 0, %s93
      %s110 = sphi 0, %s94
      %s116 = sphi 0, %s118
      %s119 = sphi 0, %s116
      %s120 = sphi 0, %s119
      %s136 = sphi 0, %s120
      %s140 = sphi 0, %s140
      %s142 = sphi 0, %s140
      %s143 = sphi 0, %s142
      %s157 = sphi 0, %s143
      %s161 = sphi 0, %s161
      %s163 = sphi 0, %s161
      %s164 = sphi 0, %s163
      %s178 = sphi 0, %s164
      %s182 = sphi 0, %s182
      %s184 = sphi 0, %s182
      %s185 = sphi 0, %s184
      %s199 = sphi 0, %s185
      %s203 = sphi 0, %s203
      %s205 = sphi 0, %s203
      %s206 = sphi 0, %s205
      %s220 = sphi 0, %s206
      %s224 = sphi 0, %s224
      %s226 = sphi 0, %s224
      %s227 = sphi 0, %s226
      %s241 = sphi 0, %s227
      %s245 = sphi 0, %s245
      %s247 = sphi 0, %s245
      %s248 = sphi 0, %s247
      %s262 = sphi 0, %s248
      %s266 = sphi 0, %s266
      %s268 = sphi 0, %s266
      %s269 = sphi 0, %s268
      %s283 = sphi 0, %s269
      %s287 = sphi 0, %s287
      %s289 = sphi 0, %s287
      %s290 = sphi 0, %s289
      %s304 = sphi 0, %s290
      %s308 = sphi 0, %s308
      %s310 = sphi 0, %s308
      %s311 = sphi 0, %s310
      %s325 = sphi 0, %s311
      %s329 = sphi 0, %s329
      %s331 = sphi 0, %s329
      %s332 = sphi 0, %s331
      %s346 = sphi 0, %s332
      %s350 = sphi 0, %s350
      %s352 = sphi 0, %s350
      %s353 = sphi 0, %s352
      %s367 = sphi 0, %s353
      %s371 = sphi 0, %s371
      %s373 = sphi 0, %s371
      %s374 = sphi 0, %s373
      %s388 = sphi 0, %s374
      %s394 = sphi 0, %s396
      %s397 = sphi 0, %s394
      %s398 = sphi 0, %s397
      %s414 = sphi 0, %s398
    $region4: #{net_forward.1} parent=1 // loop_header_branch
      %31 = sbr.rel (%p29) target = $region8
    $region5: #{net_forward.1} parent=1 // loop_body
      %s33 = ssub.s32 %s28, 1
      %s34 = ssub.s32 %s28, 2
      %s35 = sadd.s32 %s28, 1
      %s36 = ssub.s32 %s28, %s35
      %p37 = scmp.eq.s32.totalorder %s36, 0
      %s39 = sadd.s32 %s38, 1
      %s40 = scalar_select %p37, %s38, %s39
      %p43 = pneg %p37
      %p44 = scmp.eq.s32.totalorder %s28, 1
      %p45 = por %p43, %p44
      %p46 = scmp.ne.s32.totalorder %s38, %s41
      %p47 = scmp.eq.s32.totalorder %s28, 0
      %p48 = por %p46, %p47
      %p49 = scmp.ne.s32.totalorder %s38, %s41
      %p50 = scmp.eq.s32.totalorder %s33, 1
      %p51 = por %p49, %p50
      %p52 = scmp.ne.s32.totalorder %s41, %s42
      %p53 = scmp.eq.s32.totalorder %s33, 0
      %p54 = por %p52, %p53
      %p55 = scmp.ne.s32.totalorder %s41, %s42
      %p56 = scmp.eq.s32.totalorder %s34, 1
      %p57 = por %p55, %p56
      %p59 = scmp.ne.s32.totalorder %s42, %s58
      %p60 = scmp.eq.s32.totalorder %s34, 0
      %p61 = por %p59, %p60
      %s62 = ssub.s32 %s28, %s35
      %p63 = scmp.eq.s32.totalorder %s62, 0
      %s65 = sadd.s32 %s64, 1
      %s66 = scalar_select %p63, %s64, %s65
      %p69 = pneg %p63
      %p70 = scmp.eq.s32.totalorder %s28, 1
      %p71 = por %p69, %p70
      %p72 = scmp.ne.s32.totalorder %s64, %s67
      %p73 = scmp.eq.s32.totalorder %s28, 0
      %p74 = por %p72, %p73
      %p75 = scmp.ne.s32.totalorder %s64, %s67
      %p76 = scmp.eq.s32.totalorder %s33, 1
      %p77 = por %p75, %p76
      %p78 = scmp.ne.s32.totalorder %s67, %s68
      %p79 = scmp.eq.s32.totalorder %s33, 0
      %p80 = por %p78, %p79
      %p81 = scmp.ne.s32.totalorder %s67, %s68
      %p82 = scmp.eq.s32.totalorder %s34, 1
      %p83 = por %p81, %p82
      %p85 = scmp.ne.s32.totalorder %s68, %s84
      %p86 = scmp.eq.s32.totalorder %s34, 0
      %p87 = por %p85, %p86
      %s88 = ssub.s32 %s28, %s35
      %p89 = scmp.eq.s32.totalorder %s88, 0
      %s91 = sadd.s32 %s90, 1
      %s92 = scalar_select %p89, %s90, %s91
      %p95 = pneg %p89
      %p96 = scmp.eq.s32.totalorder %s28, 1
      %p97 = por %p95, %p96
      %p98 = scmp.ne.s32.totalorder %s90, %s93
      %p99 = scmp.eq.s32.totalorder %s28, 0
      %p100 = por %p98, %p99
      %p101 = scmp.ne.s32.totalorder %s90, %s93
      %p102 = scmp.eq.s32.totalorder %s33, 1
      %p103 = por %p101, %p102
      %p104 = scmp.ne.s32.totalorder %s93, %s94
      %p105 = scmp.eq.s32.totalorder %s33, 0
      %p106 = por %p104, %p105
      %p107 = scmp.ne.s32.totalorder %s93, %s94
      %p108 = scmp.eq.s32.totalorder %s34, 1
      %p109 = por %p107, %p108
      %p111 = scmp.ne.s32.totalorder %s94, %s110
      %p112 = scmp.eq.s32.totalorder %s34, 0
      %p113 = por %p111, %p112
      %s114 = ssub.s32 %s28, %s35
      %p115 = scmp.eq.s32.totalorder %s114, 0
      %s117 = sadd.s32 %s116, 1
      %s118 = scalar_select %p115, %s116, %s117
      %p121 = pneg %p115
      %p122 = scmp.eq.s32.totalorder %s28, 1
      %p123 = por %p121, %p122
      %p124 = scmp.ne.s32.totalorder %s116, %s119
      %p125 = scmp.eq.s32.totalorder %s28, 0
      %p126 = por %p124, %p125
      %p127 = scmp.ne.s32.totalorder %s116, %s119
      %p128 = scmp.eq.s32.totalorder %s33, 1
      %p129 = por %p127, %p128
      %p130 = scmp.ne.s32.totalorder %s119, %s120
      %p131 = scmp.eq.s32.totalorder %s33, 0
      %p132 = por %p130, %p131
      %p133 = scmp.ne.s32.totalorder %s119, %s120
      %p134 = scmp.eq.s32.totalorder %s34, 1
      %p135 = por %p133, %p134
      %p137 = scmp.ne.s32.totalorder %s120, %s136
      %p138 = scmp.eq.s32.totalorder %s34, 0
      %p139 = por %p137, %p138
      %s141 = sadd.s32 %s140, 1
      %p144 = scmp.eq.s32.totalorder %s28, 1
      %p145 = scmp.ne.s32.totalorder %s140, %s142
      %p146 = scmp.eq.s32.totalorder %s28, 0
      %p147 = por %p145, %p146
      %p148 = scmp.ne.s32.totalorder %s140, %s142
      %p149 = scmp.eq.s32.totalorder %s33, 1
      %p150 = por %p148, %p149
      %p151 = scmp.ne.s32.totalorder %s142, %s143
      %p152 = scmp.eq.s32.totalorder %s33, 0
      %p153 = por %p151, %p152
      %p154 = scmp.ne.s32.totalorder %s142, %s143
      %p155 = scmp.eq.s32.totalorder %s34, 1
      %p156 = por %p154, %p155
      %p158 = scmp.ne.s32.totalorder %s143, %s157
      %p159 = scmp.eq.s32.totalorder %s34, 0
      %p160 = por %p158, %p159
      %s162 = sadd.s32 %s161, 1
      %p165 = scmp.eq.s32.totalorder %s28, 1
      %p166 = scmp.ne.s32.totalorder %s161, %s163
      %p167 = scmp.eq.s32.totalorder %s28, 0
      %p168 = por %p166, %p167
      %p169 = scmp.ne.s32.totalorder %s161, %s163
      %p170 = scmp.eq.s32.totalorder %s33, 1
      %p171 = por %p169, %p170
      %p172 = scmp.ne.s32.totalorder %s163, %s164
      %p173 = scmp.eq.s32.totalorder %s33, 0
      %p174 = por %p172, %p173
      %p175 = scmp.ne.s32.totalorder %s163, %s164
      %p176 = scmp.eq.s32.totalorder %s34, 1
      %p177 = por %p175, %p176
      %p179 = scmp.ne.s32.totalorder %s164, %s178
      %p180 = scmp.eq.s32.totalorder %s34, 0
      %p181 = por %p179, %p180
      %s183 = sadd.s32 %s182, 1
      %p186 = scmp.eq.s32.totalorder %s28, 1
      %p187 = scmp.ne.s32.totalorder %s182, %s184
      %p188 = scmp.eq.s32.totalorder %s28, 0
      %p189 = por %p187, %p188
      %p190 = scmp.ne.s32.totalorder %s182, %s184
      %p191 = scmp.eq.s32.totalorder %s33, 1
      %p192 = por %p190, %p191
      %p193 = scmp.ne.s32.totalorder %s184, %s185
      %p194 = scmp.eq.s32.totalorder %s33, 0
      %p195 = por %p193, %p194
      %p196 = scmp.ne.s32.totalorder %s184, %s185
      %p197 = scmp.eq.s32.totalorder %s34, 1
      %p198 = por %p196, %p197
      %p200 = scmp.ne.s32.totalorder %s185, %s199
      %p201 = scmp.eq.s32.totalorder %s34, 0
      %p202 = por %p200, %p201
      %s204 = sadd.s32 %s203, 1
      %p207 = scmp.eq.s32.totalorder %s28, 1
      %p208 = scmp.ne.s32.totalorder %s203, %s205
      %p209 = scmp.eq.s32.totalorder %s28, 0
      %p210 = por %p208, %p209
      %p211 = scmp.ne.s32.totalorder %s203, %s205
      %p212 = scmp.eq.s32.totalorder %s33, 1
      %p213 = por %p211, %p212
      %p214 = scmp.ne.s32.totalorder %s205, %s206
      %p215 = scmp.eq.s32.totalorder %s33, 0
      %p216 = por %p214, %p215
      %p217 = scmp.ne.s32.totalorder %s205, %s206
      %p218 = scmp.eq.s32.totalorder %s34, 1
      %p219 = por %p217, %p218
      %p221 = scmp.ne.s32.totalorder %s206, %s220
      %p222 = scmp.eq.s32.totalorder %s34, 0
      %p223 = por %p221, %p222
      %s225 = sadd.s32 %s224, 1
      %p228 = scmp.eq.s32.totalorder %s28, 1
      %p229 = scmp.ne.s32.totalorder %s224, %s226
      %p230 = scmp.eq.s32.totalorder %s28, 0
      %p231 = por %p229, %p230
      %p232 = scmp.ne.s32.totalorder %s224, %s226
      %p233 = scmp.eq.s32.totalorder %s33, 1
      %p234 = por %p232, %p233
      %p235 = scmp.ne.s32.totalorder %s226, %s227
      %p236 = scmp.eq.s32.totalorder %s33, 0
      %p237 = por %p235, %p236
      %p238 = scmp.ne.s32.totalorder %s226, %s227
      %p239 = scmp.eq.s32.totalorder %s34, 1
      %p240 = por %p238, %p239
      %p242 = scmp.ne.s32.totalorder %s227, %s241
      %p243 = scmp.eq.s32.totalorder %s34, 0
      %p244 = por %p242, %p243
      %s246 = sadd.s32 %s245, 1
      %p249 = scmp.eq.s32.totalorder %s28, 1
      %p250 = scmp.ne.s32.totalorder %s245, %s247
      %p251 = scmp.eq.s32.totalorder %s28, 0
      %p252 = por %p250, %p251
      %p253 = scmp.ne.s32.totalorder %s245, %s247
      %p254 = scmp.eq.s32.totalorder %s33, 1
      %p255 = por %p253, %p254
      %p256 = scmp.ne.s32.totalorder %s247, %s248
      %p257 = scmp.eq.s32.totalorder %s33, 0
      %p258 = por %p256, %p257
      %p259 = scmp.ne.s32.totalorder %s247, %s248
      %p260 = scmp.eq.s32.totalorder %s34, 1
      %p261 = por %p259, %p260
      %p263 = scmp.ne.s32.totalorder %s248, %s262
      %p264 = scmp.eq.s32.totalorder %s34, 0
      %p265 = por %p263, %p264
      %s267 = sadd.s32 %s266, 1
      %p270 = scmp.eq.s32.totalorder %s28, 1
      %p271 = scmp.ne.s32.totalorder %s266, %s268
      %p272 = scmp.eq.s32.totalorder %s28, 0
      %p273 = por %p271, %p272
      %p274 = scmp.ne.s32.totalorder %s266, %s268
      %p275 = scmp.eq.s32.totalorder %s33, 1
      %p276 = por %p274, %p275
      %p277 = scmp.ne.s32.totalorder %s268, %s269
      %p278 = scmp.eq.s32.totalorder %s33, 0
      %p279 = por %p277, %p278
      %p280 = scmp.ne.s32.totalorder %s268, %s269
      %p281 = scmp.eq.s32.totalorder %s34, 1
      %p282 = por %p280, %p281
      %p284 = scmp.ne.s32.totalorder %s269, %s283
      %p285 = scmp.eq.s32.totalorder %s34, 0
      %p286 = por %p284, %p285
      %s288 = sadd.s32 %s287, 1
      %p291 = scmp.eq.s32.totalorder %s28, 1
      %p292 = scmp.ne.s32.totalorder %s287, %s289
      %p293 = scmp.eq.s32.totalorder %s28, 0
      %p294 = por %p292, %p293
      %p295 = scmp.ne.s32.totalorder %s287, %s289
      %p296 = scmp.eq.s32.totalorder %s33, 1
      %p297 = por %p295, %p296
      %p298 = scmp.ne.s32.totalorder %s289, %s290
      %p299 = scmp.eq.s32.totalorder %s33, 0
      %p300 = por %p298, %p299
      %p301 = scmp.ne.s32.totalorder %s289, %s290
      %p302 = scmp.eq.s32.totalorder %s34, 1
      %p303 = por %p301, %p302
      %p305 = scmp.ne.s32.totalorder %s290, %s304
      %p306 = scmp.eq.s32.totalorder %s34, 0
      %p307 = por %p305, %p306
      %s309 = sadd.s32 %s308, 1
      %p312 = scmp.eq.s32.totalorder %s28, 1
      %p313 = scmp.ne.s32.totalorder %s308, %s310
      %p314 = scmp.eq.s32.totalorder %s28, 0
      %p315 = por %p313, %p314
      %p316 = scmp.ne.s32.totalorder %s308, %s310
      %p317 = scmp.eq.s32.totalorder %s33, 1
      %p318 = por %p316, %p317
      %p319 = scmp.ne.s32.totalorder %s310, %s311
      %p320 = scmp.eq.s32.totalorder %s33, 0
      %p321 = por %p319, %p320
      %p322 = scmp.ne.s32.totalorder %s310, %s311
      %p323 = scmp.eq.s32.totalorder %s34, 1
      %p324 = por %p322, %p323
      %p326 = scmp.ne.s32.totalorder %s311, %s325
      %p327 = scmp.eq.s32.totalorder %s34, 0
      %p328 = por %p326, %p327
      %s330 = sadd.s32 %s329, 1
      %p333 = scmp.eq.s32.totalorder %s28, 1
      %p334 = scmp.ne.s32.totalorder %s329, %s331
      %p335 = scmp.eq.s32.totalorder %s28, 0
      %p336 = por %p334, %p335
      %p337 = scmp.ne.s32.totalorder %s329, %s331
      %p338 = scmp.eq.s32.totalorder %s33, 1
      %p339 = por %p337, %p338
      %p340 = scmp.ne.s32.totalorder %s331, %s332
      %p341 = scmp.eq.s32.totalorder %s33, 0
      %p342 = por %p340, %p341
      %p343 = scmp.ne.s32.totalorder %s331, %s332
      %p344 = scmp.eq.s32.totalorder %s34, 1
      %p345 = por %p343, %p344
      %p347 = scmp.ne.s32.totalorder %s332, %s346
      %p348 = scmp.eq.s32.totalorder %s34, 0
      %p349 = por %p347, %p348
      %s351 = sadd.s32 %s350, 1
      %p354 = scmp.eq.s32.totalorder %s28, 1
      %p355 = scmp.ne.s32.totalorder %s350, %s352
      %p356 = scmp.eq.s32.totalorder %s28, 0
      %p357 = por %p355, %p356
      %p358 = scmp.ne.s32.totalorder %s350, %s352
      %p359 = scmp.eq.s32.totalorder %s33, 1
      %p360 = por %p358, %p359
      %p361 = scmp.ne.s32.totalorder %s352, %s353
      %p362 = scmp.eq.s32.totalorder %s33, 0
      %p363 = por %p361, %p362
      %p364 = scmp.ne.s32.totalorder %s352, %s353
      %p365 = scmp.eq.s32.totalorder %s34, 1
      %p366 = por %p364, %p365
      %p368 = scmp.ne.s32.totalorder %s353, %s367
      %p369 = scmp.eq.s32.totalorder %s34, 0
      %p370 = por %p368, %p369
      %s372 = sadd.s32 %s371, 1
      %p375 = scmp.eq.s32.totalorder %s28, 1
      %p376 = scmp.ne.s32.totalorder %s371, %s373
      %p377 = scmp.eq.s32.totalorder %s28, 0
      %p378 = por %p376, %p377
      %p379 = scmp.ne.s32.totalorder %s371, %s373
      %p380 = scmp.eq.s32.totalorder %s33, 1
      %p381 = por %p379, %p380
      %p382 = scmp.ne.s32.totalorder %s373, %s374
      %p383 = scmp.eq.s32.totalorder %s33, 0
      %p384 = por %p382, %p383
      %p385 = scmp.ne.s32.totalorder %s373, %s374
      %p386 = scmp.eq.s32.totalorder %s34, 1
      %p387 = por %p385, %p386
      %p389 = scmp.ne.s32.totalorder %s374, %s388
      %p390 = scmp.eq.s32.totalorder %s34, 0
      %p391 = por %p389, %p390
      %s392 = ssub.s32 %s28, %s35
      %p393 = scmp.eq.s32.totalorder %s392, 0
      %s395 = sadd.s32 %s394, 1
      %s396 = scalar_select %p393, %s394, %s395
      %p399 = pneg %p393
      %p400 = scmp.eq.s32.totalorder %s28, 1
      %p401 = por %p399, %p400
      %p402 = scmp.ne.s32.totalorder %s394, %s397
      %p403 = scmp.eq.s32.totalorder %s28, 0
      %p404 = por %p402, %p403
      %p405 = scmp.ne.s32.totalorder %s394, %s397
      %p406 = scmp.eq.s32.totalorder %s33, 1
      %p407 = por %p405, %p406
      %p408 = scmp.ne.s32.totalorder %s397, %s398
      %p409 = scmp.eq.s32.totalorder %s33, 0
      %p410 = por %p408, %p409
      %p411 = scmp.ne.s32.totalorder %s397, %s398
      %p412 = scmp.eq.s32.totalorder %s34, 1
      %p413 = por %p411, %p412
      %p415 = scmp.ne.s32.totalorder %s398, %s414
      %p416 = scmp.eq.s32.totalorder %s34, 0
      %p417 = por %p415, %p416
      %p418 = scmp.le.s32.totalorder 1, %s28
      %p419 = scmp.lt.s32.totalorder %s28, 3
      %p420 = pnand %p418, %p419
      %p421 = pneg %p420
      // Predicated region
      $region9: #{net_forward.1} parent=5 // pred_check
        _
      $region10: #{net_forward.1} parent=5 // pred_check_branch
        %423 = sbr.rel (%p420) target = $region12
      $region11: #{net_forward.1} parent=5 // pred_region
        %s424 = ssub.s32 %s28, 1
        // Predicated region
        $region13: #{net_forward.1} parent=11 // pred_check
          %p425 = pneg %p153
        $region14: #{net_forward.1} parent=11 // pred_check_branch
          %427 = sbr.rel (%p425) target = $region16
        $region15: #{net_forward.1} parent=11 // pred_region
          _
        $region16: #{net_forward.1} parent=11 // pred_fallthru
          _
        // Predicated region
        $region17: #{net_forward.1} parent=11 // pred_check
          %p428 = pneg %p174
        $region18: #{net_forward.1} parent=11 // pred_check_branch
          %430 = sbr.rel (%p428) target = $region20
        $region19: #{net_forward.1} parent=11 // pred_region
          _
        $region20: #{net_forward.1} parent=11 // pred_fallthru
          _
        // Predicated region
        $region21: #{net_forward.1} parent=11 // pred_check
          %p431 = pneg %p195
        $region22: #{net_forward.1} parent=11 // pred_check_branch
          %433 = sbr.rel (%p431) target = $region24
        $region23: #{net_forward.1} parent=11 // pred_region
          _
        $region24: #{net_forward.1} parent=11 // pred_fallthru
          _
        // Predicated region
        $region25: #{net_forward.1} parent=11 // pred_check
          %p434 = pneg %p216
        $region26: #{net_forward.1} parent=11 // pred_check_branch
          %436 = sbr.rel (%p434) target = $region28
        $region27: #{net_forward.1} parent=11 // pred_region
          %s438 = ssub.s32 6144, 6144
          %439 = vsyncadd [#allocation3], %s438
          %s440 = sshll.u32 [#allocation2], 4
          %s441 = int_to_ptr.vmem [resolvable:$true] %s440
          %446 = dma.hbm_to_vmem [thread:$0]  %s7, 6144, %s441, [#allocation3], 128, 128, 8
        $region28: #{net_forward.1} parent=11 // pred_fallthru
          _
        // Predicated region
        $region29: #{net_forward.1} parent=11 // pred_check
          %p447 = pneg %p237
        $region30: #{net_forward.1} parent=11 // pred_check_branch
          %449 = sbr.rel (%p447) target = $region32
        $region31: #{net_forward.1} parent=11 // pred_region
          %s451 = ssub.s32 6144, 6144
          %452 = vsyncadd [#allocation6], %s451
          %s453 = sshll.u32 [#allocation5], 4
          %s454 = int_to_ptr.vmem [resolvable:$true] %s453
          %459 = dma.hbm_to_vmem [thread:$0]  %s8, 6144, %s454, [#allocation6], 128, 128, 8
        $region32: #{net_forward.1} parent=11 // pred_fallthru
          _
        // Predicated region
        $region33: #{net_forward.1} parent=11 // pred_check
          %p460 = pneg %p258
        $region34: #{net_forward.1} parent=11 // pred_check_branch
          %462 = sbr.rel (%p460) target = $region36
        $region35: #{net_forward.1} parent=11 // pred_region
          _
        $region36: #{net_forward.1} parent=11 // pred_fallthru
          _
        // Predicated region
        $region37: #{net_forward.1} parent=11 // pred_check
          %p463 = pneg %p279
        $region38: #{net_forward.1} parent=11 // pred_check_branch
          %465 = sbr.rel (%p463) target = $region40
        $region39: #{net_forward.1} parent=11 // pred_region
          %s467 = ssub.s32 16384, 16384
          %468 = vsyncadd [#allocation6], %s467
          %s469 = sshll.u32 [#allocation7], 4
          %s470 = int_to_ptr.vmem [resolvable:$true] %s469
          %475 = dma.hbm_to_vmem [thread:$0]  %s10, 16384, %s470, [#allocation6], 128, 128, 8
        $region40: #{net_forward.1} parent=11 // pred_fallthru
          _
        // Predicated region
        $region41: #{net_forward.1} parent=11 // pred_check
          %p476 = pneg %p300
        $region42: #{net_forward.1} parent=11 // pred_check_branch
          %478 = sbr.rel (%p476) target = $region44
        $region43: #{net_forward.1} parent=11 // pred_region
          _
        $region44: #{net_forward.1} parent=11 // pred_fallthru
          _
        // Predicated region
        $region45: #{net_forward.1} parent=11 // pred_check
          %p479 = pneg %p321
        $region46: #{net_forward.1} parent=11 // pred_check_branch
          %481 = sbr.rel (%p479) target = $region48
        $region47: #{net_forward.1} parent=11 // pred_region
          _
        $region48: #{net_forward.1} parent=11 // pred_fallthru
          _
        // Predicated region
        $region49: #{net_forward.1} parent=11 // pred_check
          %p482 = pneg %p342
        $region50: #{net_forward.1} parent=11 // pred_check_branch
          %484 = sbr.rel (%p482) target = $region52
        $region51: #{net_forward.1} parent=11 // pred_region
          _
        $region52: #{net_forward.1} parent=11 // pred_fallthru
          _
        // Predicated region
        $region53: #{net_forward.1} parent=11 // pred_check
          %p485 = pneg %p363
        $region54: #{net_forward.1} parent=11 // pred_check_branch
          %487 = sbr.rel (%p485) target = $region56
        $region55: #{net_forward.1} parent=11 // pred_region
          %s489 = ssub.s32 2048, 2048
          %490 = vsyncadd [#allocation9], %s489
          %s491 = sshll.u32 [#allocation8], 4
          %s492 = int_to_ptr.vmem [resolvable:$true] %s491
          %497 = dma.hbm_to_vmem [thread:$0]  %s14, 2048, %s492, [#allocation9], 128, 128, 8
        $region56: #{net_forward.1} parent=11 // pred_fallthru
          _
        // Predicated region
        $region57: #{net_forward.1} parent=11 // pred_check
          %p498 = pneg %p384
        $region58: #{net_forward.1} parent=11 // pred_check_branch
          %500 = sbr.rel (%p498) target = $region60
        $region59: #{net_forward.1} parent=11 // pred_region
          _
        $region60: #{net_forward.1} parent=11 // pred_fallthru
          _
      $region12: #{net_forward.1} parent=5 // pred_fallthru
        _
      %p501 = scmp.lt.s32.totalorder %s28, 2
      // Predicated region
      $region61: #{net_forward.1} parent=5 // pred_check
        %p502 = pneg %p501
      $region62: #{net_forward.1} parent=5 // pred_check_branch
        %504 = sbr.rel (%p502) target = $region64
      $region63: #{net_forward.1} parent=5 // pred_region
        // Predicated region
        $region65: #{net_forward.1} parent=63 // pred_check
          %p505 = pneg %p48
        $region66: #{net_forward.1} parent=63 // pred_check_branch
          %507 = sbr.rel (%p505) target = $region68
        $region67: #{net_forward.1} parent=63 // pred_region
          %p508 = scmp.lt.s32.totalorder %s28, 1
          %s509 = scalar_select %p508, %s28, 1
          %s510 = smul.addr %s509, 2
          %s511 = smul.addr %s510, 8
          %s512 = scalar_lea.vmem %s0, %s511
        $region68: #{net_forward.1} parent=63 // pred_fallthru
          _
        // Predicated region
        $region69: #{net_forward.1} parent=63 // pred_check
          %p513 = pneg %p74
        $region70: #{net_forward.1} parent=63 // pred_check_branch
          %515 = sbr.rel (%p513) target = $region72
        $region71: #{net_forward.1} parent=63 // pred_region
          %p516 = scmp.lt.s32.totalorder %s28, 1
          %s517 = scalar_select %p516, %s28, 1
          %s518 = smul.addr %s517, 2
          %s519 = smul.addr %s518, 8
          %s520 = scalar_lea.vmem %s1, %s519
        $region72: #{net_forward.1} parent=63 // pred_fallthru
          _
        // Predicated region
        $region73: #{net_forward.1} parent=63 // pred_check
          %p521 = pneg %p100
        $region74: #{net_forward.1} parent=63 // pred_check_branch
          %523 = sbr.rel (%p521) target = $region76
        $region75: #{net_forward.1} parent=63 // pred_region
          %p524 = scmp.lt.s32.totalorder %s28, 1
          %s525 = scalar_select %p524, %s28, 1
          %s526 = smul.addr %s525, 8
          %s527 = scalar_lea.vmem %s2, %s526
        $region76: #{net_forward.1} parent=63 // pred_fallthru
          _
        // Predicated region
        $region77: #{net_forward.1} parent=63 // pred_check
          %p528 = pneg %p126
        $region78: #{net_forward.1} parent=63 // pred_check_branch
          %530 = sbr.rel (%p528) target = $region80
        $region79: #{net_forward.1} parent=63 // pred_region
          %p531 = scmp.lt.s32.totalorder %s28, 1
          %s532 = scalar_select %p531, %s28, 1
          %s533 = smul.addr %s532, 8
          %s534 = scalar_lea.vmem %s3, %s533
        $region80: #{net_forward.1} parent=63 // pred_fallthru
          _
      $region64: #{net_forward.1} parent=5 // pred_fallthru
        _
      %p535 = scmp.le.s32.totalorder 1, %s28
      %p536 = scmp.lt.s32.totalorder %s28, 3
      %p537 = pnand %p535, %p536
      %p538 = pneg %p537
      // Predicated region
      $region81: #{net_forward.1} parent=5 // pred_check
        _
      $region82: #{net_forward.1} parent=5 // pred_check_branch
        %540 = sbr.rel (%p537) target = $region84
      $region83: #{net_forward.1} parent=5 // pred_region
        %s541 = ssub.s32 %s28, 1
        // Predicated region
        $region85: #{net_forward.1} parent=83 // pred_check
          %p542 = pneg %p216
        $region86: #{net_forward.1} parent=83 // pred_check_branch
          %544 = sbr.rel (%p542) target = $region88
        $region87: #{net_forward.1} parent=83 // pred_region
          %545 = dma.done [#allocation3], 6144
        $region88: #{net_forward.1} parent=83 // pred_fallthru
          _
        // Predicated region
        $region89: #{net_forward.1} parent=83 // pred_check
          %p546 = pneg %p237
        $region90: #{net_forward.1} parent=83 // pred_check_branch
          %548 = sbr.rel (%p546) target = $region92
        $region91: #{net_forward.1} parent=83 // pred_region
          %549 = dma.done [#allocation6], 6144
        $region92: #{net_forward.1} parent=83 // pred_fallthru
          _
        // Predicated region
        $region93: #{net_forward.1} parent=83 // pred_check
          %p550 = pneg %p279
        $region94: #{net_forward.1} parent=83 // pred_check_branch
          %552 = sbr.rel (%p550) target = $region96
        $region95: #{net_forward.1} parent=83 // pred_region
          %553 = dma.done [#allocation6], 16384
        $region96: #{net_forward.1} parent=83 // pred_fallthru
          _
        // Predicated region
        $region97: #{net_forward.1} parent=83 // pred_check
          %p554 = pneg %p363
        $region98: #{net_forward.1} parent=83 // pred_check_branch
          %556 = sbr.rel (%p554) target = $region100
        $region99: #{net_forward.1} parent=83 // pred_region
          %557 = dma.done [#allocation9], 2048
        $region100: #{net_forward.1} parent=83 // pred_fallthru
          _
        %p558 = scmp.lt.s32.totalorder %s33, 1
        %s559 = scalar_select %p558, %s33, 1
        %s560 = smul.addr %s559, 2
        %s561 = smul.addr %s560, 8
        %s562 = scalar_lea.vmem %s0, %s561
        %p563 = pneg %p54
        %p564 = pneg %p51
        %p565 = scmp.lt.s32.totalorder %s33, 1
        %s566 = scalar_select %p565, %s33, 1
        %s567 = smul.addr %s566, 2
        %s568 = smul.addr %s567, 8
        %s569 = scalar_lea.vmem %s1, %s568
        %p570 = pneg %p80
        %p571 = pneg %p77
        %p572 = scmp.lt.s32.totalorder %s33, 1
        %s573 = scalar_select %p572, %s33, 1
        %s574 = smul.addr %s573, 8
        %s575 = scalar_lea.vmem %s2, %s574
        %p576 = pneg %p106
        %p577 = pneg %p103
        %p578 = scmp.lt.s32.totalorder %s33, 1
        %s579 = scalar_select %p578, %s33, 1
        %s580 = smul.addr %s579, 8
        %s581 = scalar_lea.vmem %s3, %s580
        %p582 = pneg %p132
        %p583 = pneg %p129
        %p584 = pneg %p153
        %p585 = pneg %p150
        %p586 = pneg %p174
        %p587 = pneg %p171
        %p588 = pneg %p195
        %p589 = pneg %p192
        %p590 = pneg %p216
        %p591 = pneg %p213
        %p592 = pneg %p237
        %p593 = pneg %p234
        %p594 = pneg %p258
        %p595 = pneg %p255
        %p596 = pneg %p279
        %p597 = pneg %p276
        %p598 = pneg %p300
        %p599 = pneg %p297
        %p600 = pneg %p321
        %p601 = pneg %p318
        %p602 = pneg %p342
        %p603 = pneg %p339
        %p604 = pneg %p363
        %p605 = pneg %p360
        %p606 = pneg %p384
        %p607 = pneg %p381
        %p608 = pneg %p410
        %p609 = pneg %p407
        %s610 = sand.u32 %s397, 1
        %s611 = scalar_lea.sflag [#allocation4], %s610
        %s612 = sand.u32 %s397, 1
        %s613 = scalar_lea.vmem [#allocation10], %s612
        %p614 = scmp.lt.s32.totalorder %s33, 1
        %s615 = scalar_select %p614, %s33, 1
        %s616 = smul.addr %s615, 2
        %s617 = smul.addr %s616, 8
        %s618 = scalar_lea.vmem %s0, %s617
        %p619 = scmp.lt.s32.totalorder %s33, 1
        %s620 = scalar_select %p619, %s33, 1
        %s621 = smul.addr %s620, 2
        %s622 = smul.addr %s621, 8
        %s623 = scalar_lea.vmem %s1, %s622
        %p624 = scmp.lt.s32.totalorder %s33, 1
        %s625 = scalar_select %p624, %s33, 1
        %s626 = smul.addr %s625, 8
        %s627 = scalar_lea.vmem %s2, %s626
        %p628 = scmp.lt.s32.totalorder %s33, 1
        %s629 = scalar_select %p628, %s33, 1
        %s630 = smul.addr %s629, 8
        %s631 = scalar_lea.vmem %s3, %s630
        %v632 = vld [vmem:[%s618] sm:$0xff]
        %v633 = vld [vmem:[%s618 + $0x8] sm:$0x1]
        %v634 = vld [vmem:[%s623] sm:$0xff]
        %v635 = vld [vmem:[%s623 + $0x8] sm:$0x1]
        %v636 = vld [vmem:[%s627] sm:$0xff]
        %v637 = vld [vmem:[%s631] sm:$0xff]
        %v638 = vld [vmem:[%s4] sm:$0xff]
        %v639 = vld [vmem:[%s4 + $0x8] sm:$0xff]
        %v640 = vld [vmem:[%s4 + $0x10] sm:$0xff]
        %v641 = vld [vmem:[%s4 + $0x18] sm:$0xff]
        %v642 = vld [vmem:[%s4 + $0x20] sm:$0xff]
        %v643 = vld [vmem:[%s4 + $0x28] sm:$0xff]
        %v644 = vld [vmem:[%s4 + $0x30] sm:$0xff]
        %v645 = vld [vmem:[%s4 + $0x38] sm:$0xff]
        %v646 = vld [vmem:[%s4 + $0x40] sm:$0xff]
        %v647 = vld [vmem:[%s4 + $0x48] sm:$0xff]
        %v648 = vld [vmem:[%s4 + $0x50] sm:$0xff]
        %v649 = vld [vmem:[%s4 + $0x58] sm:$0xff]
        %v650 = vld [vmem:[%s4 + $0x60] sm:$0xff]
        %v651 = vld [vmem:[%s4 + $0x68] sm:$0xff]
        %v652 = vld [vmem:[%s4 + $0x70] sm:$0xff]
        %v653 = vld [vmem:[%s4 + $0x78] sm:$0xff]
        %s654 = scalar_lea.vmem %s4, 128
        %v655 = vld [vmem:[%s654] sm:$0xff]
        %v656 = vld [vmem:[%s654 + $0x8] sm:$0xff]
        %v657 = vld [vmem:[%s654 + $0x10] sm:$0xff]
        %v658 = vld [vmem:[%s654 + $0x18] sm:$0xff]
        %v659 = vld [vmem:[%s654 + $0x20] sm:$0xff]
        %v660 = vld [vmem:[%s654 + $0x28] sm:$0xff]
        %v661 = vld [vmem:[%s654 + $0x30] sm:$0xff]
        %v662 = vld [vmem:[%s654 + $0x38] sm:$0xff]
        %v663 = vld [vmem:[%s654 + $0x40] sm:$0xff]
        %v664 = vld [vmem:[%s654 + $0x48] sm:$0xff]
        %v665 = vld [vmem:[%s654 + $0x50] sm:$0xff]
        %v666 = vld [vmem:[%s654 + $0x58] sm:$0xff]
        %v667 = vld [vmem:[%s654 + $0x60] sm:$0xff]
        %v668 = vld [vmem:[%s654 + $0x68] sm:$0xff]
        %v669 = vld [vmem:[%s654 + $0x70] sm:$0xff]
        %v670 = vld [vmem:[%s654 + $0x78] sm:$0xff]
        %s671 = scalar_lea.vmem %s4, 256
        %v672 = vld [vmem:[%s671] sm:$0xff]
        %v673 = vld [vmem:[%s671 + $0x8] sm:$0xff]
        %v674 = vld [vmem:[%s671 + $0x10] sm:$0xff]
        %v675 = vld [vmem:[%s671 + $0x18] sm:$0xff]
        %v676 = vld [vmem:[%s671 + $0x20] sm:$0xff]
        %v677 = vld [vmem:[%s671 + $0x28] sm:$0xff]
        %v678 = vld [vmem:[%s671 + $0x30] sm:$0xff]
        %v679 = vld [vmem:[%s671 + $0x38] sm:$0xff]
        %v680 = vld [vmem:[%s671 + $0x40] sm:$0xff]
        %v681 = vld [vmem:[%s671 + $0x48] sm:$0xff]
        %v682 = vld [vmem:[%s671 + $0x50] sm:$0xff]
        %v683 = vld [vmem:[%s671 + $0x58] sm:$0xff]
        %v684 = vld [vmem:[%s671 + $0x60] sm:$0xff]
        %v685 = vld [vmem:[%s671 + $0x68] sm:$0xff]
        %v686 = vld [vmem:[%s671 + $0x70] sm:$0xff]
        %v687 = vld [vmem:[%s671 + $0x78] sm:$0xff]
        %v688 = vld [vmem:[%s5] sm:$0xff]
        %v689 = vld [vmem:[%s5 + $0x8] sm:$0xff]
        %v690 = vld [vmem:[%s5 + $0x10] sm:$0xff]
        %v691 = vld [vmem:[%s5 + $0x18] sm:$0xff]
        %v692 = vld [vmem:[%s5 + $0x20] sm:$0xff]
        %v693 = vld [vmem:[%s5 + $0x28] sm:$0xff]
        %v694 = vld [vmem:[%s5 + $0x30] sm:$0xff]
        %v695 = vld [vmem:[%s5 + $0x38] sm:$0xff]
        %v696 = vld [vmem:[%s5 + $0x40] sm:$0xff]
        %v697 = vld [vmem:[%s5 + $0x48] sm:$0xff]
        %v698 = vld [vmem:[%s5 + $0x50] sm:$0xff]
        %v699 = vld [vmem:[%s5 + $0x58] sm:$0xff]
        %v700 = vld [vmem:[%s5 + $0x60] sm:$0xff]
        %v701 = vld [vmem:[%s5 + $0x68] sm:$0xff]
        %v702 = vld [vmem:[%s5 + $0x70] sm:$0xff]
        %v703 = vld [vmem:[%s5 + $0x78] sm:$0xff]
        %s704 = scalar_lea.vmem %s5, 128
        %v705 = vld [vmem:[%s704] sm:$0xff]
        %v706 = vld [vmem:[%s704 + $0x8] sm:$0xff]
        %v707 = vld [vmem:[%s704 + $0x10] sm:$0xff]
        %v708 = vld [vmem:[%s704 + $0x18] sm:$0xff]
        %v709 = vld [vmem:[%s704 + $0x20] sm:$0xff]
        %v710 = vld [vmem:[%s704 + $0x28] sm:$0xff]
        %v711 = vld [vmem:[%s704 + $0x30] sm:$0xff]
        %v712 = vld [vmem:[%s704 + $0x38] sm:$0xff]
        %v713 = vld [vmem:[%s704 + $0x40] sm:$0xff]
        %v714 = vld [vmem:[%s704 + $0x48] sm:$0xff]
        %v715 = vld [vmem:[%s704 + $0x50] sm:$0xff]
        %v716 = vld [vmem:[%s704 + $0x58] sm:$0xff]
        %v717 = vld [vmem:[%s704 + $0x60] sm:$0xff]
        %v718 = vld [vmem:[%s704 + $0x68] sm:$0xff]
        %v719 = vld [vmem:[%s704 + $0x70] sm:$0xff]
        %v720 = vld [vmem:[%s704 + $0x78] sm:$0xff]
        %s721 = scalar_lea.vmem %s5, 256
        %v722 = vld [vmem:[%s721] sm:$0xff]
        %v723 = vld [vmem:[%s721 + $0x8] sm:$0xff]
        %v724 = vld [vmem:[%s721 + $0x10] sm:$0xff]
        %v725 = vld [vmem:[%s721 + $0x18] sm:$0xff]
        %v726 = vld [vmem:[%s721 + $0x20] sm:$0xff]
        %v727 = vld [vmem:[%s721 + $0x28] sm:$0xff]
        %v728 = vld [vmem:[%s721 + $0x30] sm:$0xff]
        %v729 = vld [vmem:[%s721 + $0x38] sm:$0xff]
        %v730 = vld [vmem:[%s721 + $0x40] sm:$0xff]
        %v731 = vld [vmem:[%s721 + $0x48] sm:$0xff]
        %v732 = vld [vmem:[%s721 + $0x50] sm:$0xff]
        %v733 = vld [vmem:[%s721 + $0x58] sm:$0xff]
        %v734 = vld [vmem:[%s721 + $0x60] sm:$0xff]
        %v735 = vld [vmem:[%s721 + $0x68] sm:$0xff]
        %v736 = vld [vmem:[%s721 + $0x70] sm:$0xff]
        %v737 = vld [vmem:[%s721 + $0x78] sm:$0xff]
        %738 = vmatprep.subr.mxu0 0.0
        %739 = vmatpush1.msra.mxu0 %v670
        %740 = vmatprep.subr.mxu0 0.0
        %741 = vmatpush1.msra.mxu0 %v669
        %742 = vmatprep.subr.mxu0 0.0
        %743 = vmatpush1.msra.mxu0 %v668
        %744 = vmatprep.subr.mxu0 0.0
        %745 = vmatpush1.msra.mxu0 %v667
        %746 = vmatprep.subr.mxu0 0.0
        %747 = vmatpush1.msra.mxu0 %v666
        %748 = vmatprep.subr.mxu0 0.0
        %749 = vmatpush1.msra.mxu0 %v665
        %750 = vmatprep.subr.mxu0 0.0
        %751 = vmatpush1.msra.mxu0 %v664
        %752 = vmatprep.subr.mxu0 0.0
        %753 = vmatpush1.msra.mxu0 %v663
        %754 = vmatprep.subr.mxu0 0.0
        %755 = vmatpush1.msra.mxu0 %v662
        %756 = vmatprep.subr.mxu0 0.0
        %757 = vmatpush1.msra.mxu0 %v661
        %758 = vmatprep.subr.mxu0 0.0
        %759 = vmatpush1.msra.mxu0 %v660
        %760 = vmatprep.subr.mxu0 0.0
        %761 = vmatpush1.msra.mxu0 %v659
        %762 = vmatprep.subr.mxu0 0.0
        %763 = vmatpush1.msra.mxu0 %v658
        %764 = vmatprep.subr.mxu0 0.0
        %765 = vmatpush1.msra.mxu0 %v657
        %766 = vmatprep.subr.mxu0 0.0
        %767 = vmatpush1.msra.mxu0 %v656
        %768 = vmatprep.subr.mxu0 0.0
        %769 = vmatpush1.msra.mxu0 %v655
        %770 = vmatprep.subr.mxu0 0.0
        %771 = vmatpush2.msra.mxu0 0.0
        %772 = vmatprep.subr.mxu0 0.0
        %773 = vmatpush2.msra.mxu0 0.0
        %774 = vmatprep.subr.mxu0 0.0
        %775 = vmatpush2.msra.mxu0 0.0
        %776 = vmatprep.subr.mxu0 0.0
        %777 = vmatpush2.msra.mxu0 0.0
        %778 = vmatprep.subr.mxu0 0.0
        %779 = vmatpush2.msra.mxu0 0.0
        %780 = vmatprep.subr.mxu0 0.0
        %781 = vmatpush2.msra.mxu0 0.0
        %782 = vmatprep.subr.mxu0 0.0
        %783 = vmatpush2.msra.mxu0 0.0
        %784 = vmatprep.subr.mxu0 0.0
        %785 = vmatpush2.msra.mxu0 0.0
        %786 = vmatprep.subr.mxu0 0.0
        %787 = vmatpush2.msra.mxu0 0.0
        %788 = vmatprep.subr.mxu0 0.0
        %789 = vmatpush2.msra.mxu0 0.0
        %790 = vmatprep.subr.mxu0 0.0
        %791 = vmatpush2.msra.mxu0 0.0
        %792 = vmatprep.subr.mxu0 0.0
        %793 = vmatpush2.msra.mxu0 0.0
        %794 = vmatprep.subr.mxu0 0.0
        %795 = vmatpush2.msra.mxu0 0.0
        %796 = vmatprep.subr.mxu0 0.0
        %797 = vmatpush2.msra.mxu0 0.0
        %798 = vmatprep.subr.mxu0 0.0
        %799 = vmatpush2.msra.mxu0 0.0
        %800 = vmatprep.subr.mxu0 0.0
        %801 = vmatpush2.msra.mxu0 0.0
        %802 = vmatprep.mubr.f32.mxu0 0.0
        %803 = vmatmul.mubr.f32.gmra.mxu0 %v634
        %v804 = vpop.f32.mrf.mxu0
        %v805 = vadd.f32 0.0, %v804
        %v806 = vpop.f32.mrf.mxu0
        %807 = vdwg.mxu0
        %808 = vmatprep.subr.mxu0 0.0
        %809 = vmatpush1.msra.mxu0 %v653
        %810 = vmatprep.subr.mxu0 0.0
        %811 = vmatpush1.msra.mxu0 %v652
        %812 = vmatprep.subr.mxu0 0.0
        %813 = vmatpush1.msra.mxu0 %v651
        %814 = vmatprep.subr.mxu0 0.0
        %815 = vmatpush1.msra.mxu0 %v650
        %816 = vmatprep.subr.mxu0 0.0
        %817 = vmatpush1.msra.mxu0 %v649
        %818 = vmatprep.subr.mxu0 0.0
        %819 = vmatpush1.msra.mxu0 %v648
        %820 = vmatprep.subr.mxu0 0.0
        %821 = vmatpush1.msra.mxu0 %v647
        %822 = vmatprep.subr.mxu0 0.0
        %823 = vmatpush1.msra.mxu0 %v646
        %824 = vmatprep.subr.mxu0 0.0
        %825 = vmatpush1.msra.mxu0 %v645
        %826 = vmatprep.subr.mxu0 0.0
        %827 = vmatpush1.msra.mxu0 %v644
        %828 = vmatprep.subr.mxu0 0.0
        %829 = vmatpush1.msra.mxu0 %v643
        %830 = vmatprep.subr.mxu0 0.0
        %831 = vmatpush1.msra.mxu0 %v642
        %832 = vmatprep.subr.mxu0 0.0
        %833 = vmatpush1.msra.mxu0 %v641
        %834 = vmatprep.subr.mxu0 0.0
        %835 = vmatpush1.msra.mxu0 %v640
        %836 = vmatprep.subr.mxu0 0.0
        %837 = vmatpush1.msra.mxu0 %v639
        %838 = vmatprep.subr.mxu0 0.0
        %839 = vmatpush1.msra.mxu0 %v638
        %840 = vmatprep.subr.mxu0 0.0
        %841 = vmatpush2.msra.mxu0 0.0
        %842 = vmatprep.subr.mxu0 0.0
        %843 = vmatpush2.msra.mxu0 0.0
        %844 = vmatprep.subr.mxu0 0.0
        %845 = vmatpush2.msra.mxu0 0.0
        %846 = vmatprep.subr.mxu0 0.0
        %847 = vmatpush2.msra.mxu0 0.0
        %848 = vmatprep.subr.mxu0 0.0
        %849 = vmatpush2.msra.mxu0 0.0
        %850 = vmatprep.subr.mxu0 0.0
        %851 = vmatpush2.msra.mxu0 0.0
        %852 = vmatprep.subr.mxu0 0.0
        %853 = vmatpush2.msra.mxu0 0.0
        %854 = vmatprep.subr.mxu0 0.0
        %855 = vmatpush2.msra.mxu0 0.0
        %856 = vmatprep.subr.mxu0 0.0
        %857 = vmatpush2.msra.mxu0 0.0
        %858 = vmatprep.subr.mxu0 0.0
        %859 = vmatpush2.msra.mxu0 0.0
        %860 = vmatprep.subr.mxu0 0.0
        %861 = vmatpush2.msra.mxu0 0.0
        %862 = vmatprep.subr.mxu0 0.0
        %863 = vmatpush2.msra.mxu0 0.0
        %864 = vmatprep.subr.mxu0 0.0
        %865 = vmatpush2.msra.mxu0 0.0
        %866 = vmatprep.subr.mxu0 0.0
        %867 = vmatpush2.msra.mxu0 0.0
        %868 = vmatprep.subr.mxu0 0.0
        %869 = vmatpush2.msra.mxu0 0.0
        %870 = vmatprep.subr.mxu0 0.0
        %871 = vmatpush2.msra.mxu0 0.0
        %872 = vmatprep.mubr.f32.mxu0 0.0
        %873 = vmatmul.mubr.f32.gmra.mxu0 %v632
        %v874 = vpop.f32.mrf.mxu0
        %v875 = vadd.f32 %v805, %v874
        %v876 = vpop.f32.mrf.mxu0
        %877 = vdwg.mxu0
        %878 = vmatprep.subr.mxu0 0.0
        %879 = vmatpush1.msra.mxu0 %v687
        %880 = vmatprep.subr.mxu0 0.0
        %881 = vmatpush1.msra.mxu0 %v686
        %882 = vmatprep.subr.mxu0 0.0
        %883 = vmatpush1.msra.mxu0 %v685
        %884 = vmatprep.subr.mxu0 0.0
        %885 = vmatpush1.msra.mxu0 %v684
        %886 = vmatprep.subr.mxu0 0.0
        %887 = vmatpush1.msra.mxu0 %v683
        %888 = vmatprep.subr.mxu0 0.0
        %889 = vmatpush1.msra.mxu0 %v682
        %890 = vmatprep.subr.mxu0 0.0
        %891 = vmatpush1.msra.mxu0 %v681
        %892 = vmatprep.subr.mxu0 0.0
        %893 = vmatpush1.msra.mxu0 %v680
        %894 = vmatprep.subr.mxu0 0.0
        %895 = vmatpush1.msra.mxu0 %v679
        %896 = vmatprep.subr.mxu0 0.0
        %897 = vmatpush1.msra.mxu0 %v678
        %898 = vmatprep.subr.mxu0 0.0
        %899 = vmatpush1.msra.mxu0 %v677
        %900 = vmatprep.subr.mxu0 0.0
        %901 = vmatpush1.msra.mxu0 %v676
        %902 = vmatprep.subr.mxu0 0.0
        %903 = vmatpush1.msra.mxu0 %v675
        %904 = vmatprep.subr.mxu0 0.0
        %905 = vmatpush1.msra.mxu0 %v674
        %906 = vmatprep.subr.mxu0 0.0
        %907 = vmatpush1.msra.mxu0 %v673
        %908 = vmatprep.subr.mxu0 0.0
        %909 = vmatpush1.msra.mxu0 %v672
        %910 = vmatprep.subr.mxu0 0.0
        %911 = vmatpush2.msra.mxu0 0.0
        %912 = vmatprep.subr.mxu0 0.0
        %913 = vmatpush2.msra.mxu0 0.0
        %914 = vmatprep.subr.mxu0 0.0
        %915 = vmatpush2.msra.mxu0 0.0
        %916 = vmatprep.subr.mxu0 0.0
        %917 = vmatpush2.msra.mxu0 0.0
        %918 = vmatprep.subr.mxu0 0.0
        %919 = vmatpush2.msra.mxu0 0.0
        %920 = vmatprep.subr.mxu0 0.0
        %921 = vmatpush2.msra.mxu0 0.0
        %922 = vmatprep.subr.mxu0 0.0
        %923 = vmatpush2.msra.mxu0 0.0
        %924 = vmatprep.subr.mxu0 0.0
        %925 = vmatpush2.msra.mxu0 0.0
        %926 = vmatprep.subr.mxu0 0.0
        %927 = vmatpush2.msra.mxu0 0.0
        %928 = vmatprep.subr.mxu0 0.0
        %929 = vmatpush2.msra.mxu0 0.0
        %930 = vmatprep.subr.mxu0 0.0
        %931 = vmatpush2.msra.mxu0 0.0
        %932 = vmatprep.subr.mxu0 0.0
        %933 = vmatpush2.msra.mxu0 0.0
        %934 = vmatprep.subr.mxu0 0.0
        %935 = vmatpush2.msra.mxu0 0.0
        %936 = vmatprep.subr.mxu0 0.0
        %937 = vmatpush2.msra.mxu0 0.0
        %938 = vmatprep.subr.mxu0 0.0
        %939 = vmatpush2.msra.mxu0 0.0
        %940 = vmatprep.subr.mxu0 0.0
        %941 = vmatpush2.msra.mxu0 0.0
        %942 = vmatprep.mubr.f32.mxu0 0.0
        %943 = vmatmul.mubr.f32.gmra.mxu0 %v636
        %v944 = vpop.f32.mrf.mxu0
        %v945 = vadd.f32 0.0, %v944
        %v946 = vpop.f32.mrf.mxu0
        %947 = vdwg.mxu0
        %v948 = vadd.f32 %v875, %v945
        %949 = vmatprep.subr.mxu0 0.0
        %950 = vmatpush1.msra.mxu0 %v720
        %951 = vmatprep.subr.mxu0 0.0
        %952 = vmatpush1.msra.mxu0 %v719
        %953 = vmatprep.subr.mxu0 0.0
        %954 = vmatpush1.msra.mxu0 %v718
        %955 = vmatprep.subr.mxu0 0.0
        %956 = vmatpush1.msra.mxu0 %v717
        %957 = vmatprep.subr.mxu0 0.0
        %958 = vmatpush1.msra.mxu0 %v716
        %959 = vmatprep.subr.mxu0 0.0
        %960 = vmatpush1.msra.mxu0 %v715
        %961 = vmatprep.subr.mxu0 0.0
        %962 = vmatpush1.msra.mxu0 %v714
        %963 = vmatprep.subr.mxu0 0.0
        %964 = vmatpush1.msra.mxu0 %v713
        %965 = vmatprep.subr.mxu0 0.0
        %966 = vmatpush1.msra.mxu0 %v712
        %967 = vmatprep.subr.mxu0 0.0
        %968 = vmatpush1.msra.mxu0 %v711
        %969 = vmatprep.subr.mxu0 0.0
        %970 = vmatpush1.msra.mxu0 %v710
        %971 = vmatprep.subr.mxu0 0.0
        %972 = vmatpush1.msra.mxu0 %v709
        %973 = vmatprep.subr.mxu0 0.0
        %974 = vmatpush1.msra.mxu0 %v708
        %975 = vmatprep.subr.mxu0 0.0
        %976 = vmatpush1.msra.mxu0 %v707
        %977 = vmatprep.subr.mxu0 0.0
        %978 = vmatpush1.msra.mxu0 %v706
        %979 = vmatprep.subr.mxu0 0.0
        %980 = vmatpush1.msra.mxu0 %v705
        %981 = vmatprep.subr.mxu0 0.0
        %982 = vmatpush2.msra.mxu0 0.0
        %983 = vmatprep.subr.mxu0 0.0
        %984 = vmatpush2.msra.mxu0 0.0
        %985 = vmatprep.subr.mxu0 0.0
        %986 = vmatpush2.msra.mxu0 0.0
        %987 = vmatprep.subr.mxu0 0.0
        %988 = vmatpush2.msra.mxu0 0.0
        %989 = vmatprep.subr.mxu0 0.0
        %990 = vmatpush2.msra.mxu0 0.0
        %991 = vmatprep.subr.mxu0 0.0
        %992 = vmatpush2.msra.mxu0 0.0
        %993 = vmatprep.subr.mxu0 0.0
        %994 = vmatpush2.msra.mxu0 0.0
        %995 = vmatprep.subr.mxu0 0.0
        %996 = vmatpush2.msra.mxu0 0.0
        %997 = vmatprep.subr.mxu0 0.0
        %998 = vmatpush2.msra.mxu0 0.0
        %999 = vmatprep.subr.mxu0 0.0
        %1000 = vmatpush2.msra.mxu0 0.0
        %1001 = vmatprep.subr.mxu0 0.0
        %1002 = vmatpush2.msra.mxu0 0.0
        %1003 = vmatprep.subr.mxu0 0.0
        %1004 = vmatpush2.msra.mxu0 0.0
        %1005 = vmatprep.subr.mxu0 0.0
        %1006 = vmatpush2.msra.mxu0 0.0
        %1007 = vmatprep.subr.mxu0 0.0
        %1008 = vmatpush2.msra.mxu0 0.0
        %1009 = vmatprep.subr.mxu0 0.0
        %1010 = vmatpush2.msra.mxu0 0.0
        %1011 = vmatprep.subr.mxu0 0.0
        %1012 = vmatpush2.msra.mxu0 0.0
        %1013 = vmatprep.mubr.f32.mxu0 0.0
        %1014 = vmatmul.mubr.f32.gmra.mxu0 %v634
        %v1015 = vpop.f32.mrf.mxu0
        %v1016 = vadd.f32 0.0, %v1015
        %v1017 = vpop.f32.mrf.mxu0
        %1018 = vdwg.mxu0
        %1019 = vmatprep.subr.mxu0 0.0
        %1020 = vmatpush1.msra.mxu0 %v703
        %1021 = vmatprep.subr.mxu0 0.0
        %1022 = vmatpush1.msra.mxu0 %v702
        %1023 = vmatprep.subr.mxu0 0.0
        %1024 = vmatpush1.msra.mxu0 %v701
        %1025 = vmatprep.subr.mxu0 0.0
        %1026 = vmatpush1.msra.mxu0 %v700
        %1027 = vmatprep.subr.mxu0 0.0
        %1028 = vmatpush1.msra.mxu0 %v699
        %1029 = vmatprep.subr.mxu0 0.0
        %1030 = vmatpush1.msra.mxu0 %v698
        %1031 = vmatprep.subr.mxu0 0.0
        %1032 = vmatpush1.msra.mxu0 %v697
        %1033 = vmatprep.subr.mxu0 0.0
        %1034 = vmatpush1.msra.mxu0 %v696
        %1035 = vmatprep.subr.mxu0 0.0
        %1036 = vmatpush1.msra.mxu0 %v695
        %1037 = vmatprep.subr.mxu0 0.0
        %1038 = vmatpush1.msra.mxu0 %v694
        %1039 = vmatprep.subr.mxu0 0.0
        %1040 = vmatpush1.msra.mxu0 %v693
        %1041 = vmatprep.subr.mxu0 0.0
        %1042 = vmatpush1.msra.mxu0 %v692
        %1043 = vmatprep.subr.mxu0 0.0
        %1044 = vmatpush1.msra.mxu0 %v691
        %1045 = vmatprep.subr.mxu0 0.0
        %1046 = vmatpush1.msra.mxu0 %v690
        %1047 = vmatprep.subr.mxu0 0.0
        %1048 = vmatpush1.msra.mxu0 %v689
        %1049 = vmatprep.subr.mxu0 0.0
        %1050 = vmatpush1.msra.mxu0 %v688
        %1051 = vmatprep.subr.mxu0 0.0
        %1052 = vmatpush2.msra.mxu0 0.0
        %1053 = vmatprep.subr.mxu0 0.0
        %1054 = vmatpush2.msra.mxu0 0.0
        %1055 = vmatprep.subr.mxu0 0.0
        %1056 = vmatpush2.msra.mxu0 0.0
        %1057 = vmatprep.subr.mxu0 0.0
        %1058 = vmatpush2.msra.mxu0 0.0
        %1059 = vmatprep.subr.mxu0 0.0
        %1060 = vmatpush2.msra.mxu0 0.0
        %1061 = vmatprep.subr.mxu0 0.0
        %1062 = vmatpush2.msra.mxu0 0.0
        %1063 = vmatprep.subr.mxu0 0.0
        %1064 = vmatpush2.msra.mxu0 0.0
        %1065 = vmatprep.subr.mxu0 0.0
        %1066 = vmatpush2.msra.mxu0 0.0
        %1067 = vmatprep.subr.mxu0 0.0
        %1068 = vmatpush2.msra.mxu0 0.0
        %1069 = vmatprep.subr.mxu0 0.0
        %1070 = vmatpush2.msra.mxu0 0.0
        %1071 = vmatprep.subr.mxu0 0.0
        %1072 = vmatpush2.msra.mxu0 0.0
        %1073 = vmatprep.subr.mxu0 0.0
        %1074 = vmatpush2.msra.mxu0 0.0
        %1075 = vmatprep.subr.mxu0 0.0
        %1076 = vmatpush2.msra.mxu0 0.0
        %1077 = vmatprep.subr.mxu0 0.0
        %1078 = vmatpush2.msra.mxu0 0.0
        %1079 = vmatprep.subr.mxu0 0.0
        %1080 = vmatpush2.msra.mxu0 0.0
        %1081 = vmatprep.subr.mxu0 0.0
        %1082 = vmatpush2.msra.mxu0 0.0
        %1083 = vmatprep.mubr.f32.mxu0 0.0
        %1084 = vmatmul.mubr.f32.gmra.mxu0 %v632
        %v1085 = vpop.f32.mrf.mxu0
        %v1086 = vadd.f32 %v1016, %v1085
        %v1087 = vpop.f32.mrf.mxu0
        %1088 = vdwg.mxu0
        %1089 = vmatprep.subr.mxu0 0.0
        %1090 = vmatpush1.msra.mxu0 %v737
        %1091 = vmatprep.subr.mxu0 0.0
        %1092 = vmatpush1.msra.mxu0 %v736
        %1093 = vmatprep.subr.mxu0 0.0
        %1094 = vmatpush1.msra.mxu0 %v735
        %1095 = vmatprep.subr.mxu0 0.0
        %1096 = vmatpush1.msra.mxu0 %v734
        %1097 = vmatprep.subr.mxu0 0.0
        %1098 = vmatpush1.msra.mxu0 %v733
        %1099 = vmatprep.subr.mxu0 0.0
        %1100 = vmatpush1.msra.mxu0 %v732
        %1101 = vmatprep.subr.mxu0 0.0
        %1102 = vmatpush1.msra.mxu0 %v731
        %1103 = vmatprep.subr.mxu0 0.0
        %1104 = vmatpush1.msra.mxu0 %v730
        %1105 = vmatprep.subr.mxu0 0.0
        %1106 = vmatpush1.msra.mxu0 %v729
        %1107 = vmatprep.subr.mxu0 0.0
        %1108 = vmatpush1.msra.mxu0 %v728
        %1109 = vmatprep.subr.mxu0 0.0
        %1110 = vmatpush1.msra.mxu0 %v727
        %1111 = vmatprep.subr.mxu0 0.0
        %1112 = vmatpush1.msra.mxu0 %v726
        %1113 = vmatprep.subr.mxu0 0.0
        %1114 = vmatpush1.msra.mxu0 %v725
        %1115 = vmatprep.subr.mxu0 0.0
        %1116 = vmatpush1.msra.mxu0 %v724
        %1117 = vmatprep.subr.mxu0 0.0
        %1118 = vmatpush1.msra.mxu0 %v723
        %1119 = vmatprep.subr.mxu0 0.0
        %1120 = vmatpush1.msra.mxu0 %v722
        %1121 = vmatprep.subr.mxu0 0.0
        %1122 = vmatpush2.msra.mxu0 0.0
        %1123 = vmatprep.subr.mxu0 0.0
        %1124 = vmatpush2.msra.mxu0 0.0
        %1125 = vmatprep.subr.mxu0 0.0
        %1126 = vmatpush2.msra.mxu0 0.0
        %1127 = vmatprep.subr.mxu0 0.0
        %1128 = vmatpush2.msra.mxu0 0.0
        %1129 = vmatprep.subr.mxu0 0.0
        %1130 = vmatpush2.msra.mxu0 0.0
        %1131 = vmatprep.subr.mxu0 0.0
        %1132 = vmatpush2.msra.mxu0 0.0
        %1133 = vmatprep.subr.mxu0 0.0
        %1134 = vmatpush2.msra.mxu0 0.0
        %1135 = vmatprep.subr.mxu0 0.0
        %1136 = vmatpush2.msra.mxu0 0.0
        %1137 = vmatprep.subr.mxu0 0.0
        %1138 = vmatpush2.msra.mxu0 0.0
        %1139 = vmatprep.subr.mxu0 0.0
        %1140 = vmatpush2.msra.mxu0 0.0
        %1141 = vmatprep.subr.mxu0 0.0
        %1142 = vmatpush2.msra.mxu0 0.0
        %1143 = vmatprep.subr.mxu0 0.0
        %1144 = vmatpush2.msra.mxu0 0.0
        %1145 = vmatprep.subr.mxu0 0.0
        %1146 = vmatpush2.msra.mxu0 0.0
        %1147 = vmatprep.subr.mxu0 0.0
        %1148 = vmatpush2.msra.mxu0 0.0
        %1149 = vmatprep.subr.mxu0 0.0
        %1150 = vmatpush2.msra.mxu0 0.0
        %1151 = vmatprep.subr.mxu0 0.0
        %1152 = vmatpush2.msra.mxu0 0.0
        %1153 = vmatprep.mubr.f32.mxu0 0.0
        %1154 = vmatmul.mubr.f32.gmra.mxu0 %v636
        %v1155 = vpop.f32.mrf.mxu0
        %v1156 = vadd.f32 0.0, %v1155
        %v1157 = vpop.f32.mrf.mxu0
        %1158 = vdwg.mxu0
        %v1159 = vadd.f32 %v1086, %v1156
        %1160 = vmatprep.subr.mxu0 0.0
        %1161 = vmatpush1.msra.mxu0 %v670
        %1162 = vmatprep.subr.mxu0 0.0
        %1163 = vmatpush1.msra.mxu0 %v669
        %1164 = vmatprep.subr.mxu0 0.0
        %1165 = vmatpush1.msra.mxu0 %v668
        %1166 = vmatprep.subr.mxu0 0.0
        %1167 = vmatpush1.msra.mxu0 %v667
        %1168 = vmatprep.subr.mxu0 0.0
        %1169 = vmatpush1.msra.mxu0 %v666
        %1170 = vmatprep.subr.mxu0 0.0
        %1171 = vmatpush1.msra.mxu0 %v665
        %1172 = vmatprep.subr.mxu0 0.0
        %1173 = vmatpush1.msra.mxu0 %v664
        %1174 = vmatprep.subr.mxu0 0.0
        %1175 = vmatpush1.msra.mxu0 %v663
        %1176 = vmatprep.subr.mxu0 0.0
        %1177 = vmatpush1.msra.mxu0 %v662
        %1178 = vmatprep.subr.mxu0 0.0
        %1179 = vmatpush1.msra.mxu0 %v661
        %1180 = vmatprep.subr.mxu0 0.0
        %1181 = vmatpush1.msra.mxu0 %v660
        %1182 = vmatprep.subr.mxu0 0.0
        %1183 = vmatpush1.msra.mxu0 %v659
        %1184 = vmatprep.subr.mxu0 0.0
        %1185 = vmatpush1.msra.mxu0 %v658
        %1186 = vmatprep.subr.mxu0 0.0
        %1187 = vmatpush1.msra.mxu0 %v657
        %1188 = vmatprep.subr.mxu0 0.0
        %1189 = vmatpush1.msra.mxu0 %v656
        %1190 = vmatprep.subr.mxu0 0.0
        %1191 = vmatpush1.msra.mxu0 %v655
        %1192 = vmatprep.subr.mxu0 0.0
        %1193 = vmatpush2.msra.mxu0 0.0
        %1194 = vmatprep.subr.mxu0 0.0
        %1195 = vmatpush2.msra.mxu0 0.0
        %1196 = vmatprep.subr.mxu0 0.0
        %1197 = vmatpush2.msra.mxu0 0.0
        %1198 = vmatprep.subr.mxu0 0.0
        %1199 = vmatpush2.msra.mxu0 0.0
        %1200 = vmatprep.subr.mxu0 0.0
        %1201 = vmatpush2.msra.mxu0 0.0
        %1202 = vmatprep.subr.mxu0 0.0
        %1203 = vmatpush2.msra.mxu0 0.0
        %1204 = vmatprep.subr.mxu0 0.0
        %1205 = vmatpush2.msra.mxu0 0.0
        %1206 = vmatprep.subr.mxu0 0.0
        %1207 = vmatpush2.msra.mxu0 0.0
        %1208 = vmatprep.subr.mxu0 0.0
        %1209 = vmatpush2.msra.mxu0 0.0
        %1210 = vmatprep.subr.mxu0 0.0
        %1211 = vmatpush2.msra.mxu0 0.0
        %1212 = vmatprep.subr.mxu0 0.0
        %1213 = vmatpush2.msra.mxu0 0.0
        %1214 = vmatprep.subr.mxu0 0.0
        %1215 = vmatpush2.msra.mxu0 0.0
        %1216 = vmatprep.subr.mxu0 0.0
        %1217 = vmatpush2.msra.mxu0 0.0
        %1218 = vmatprep.subr.mxu0 0.0
        %1219 = vmatpush2.msra.mxu0 0.0
        %1220 = vmatprep.subr.mxu0 0.0
        %1221 = vmatpush2.msra.mxu0 0.0
        %1222 = vmatprep.subr.mxu0 0.0
        %1223 = vmatpush2.msra.mxu0 0.0
        %1224 = vmatprep.mubr.f32.mxu0 0.0
        %1225 = vmatmul.mubr.f32.gmra.mxu0 %v636
        %v1226 = vpop.f32.mrf.mxu0
        %v1227 = vadd.f32 0.0, %v1226
        %v1228 = vpop.f32.mrf.mxu0
        %1229 = vdwg.mxu0
        %1230 = vmatprep.subr.mxu0 0.0
        %1231 = vmatpush1.msra.mxu0 %v653
        %1232 = vmatprep.subr.mxu0 0.0
        %1233 = vmatpush1.msra.mxu0 %v652
        %1234 = vmatprep.subr.mxu0 0.0
        %1235 = vmatpush1.msra.mxu0 %v651
        %1236 = vmatprep.subr.mxu0 0.0
        %1237 = vmatpush1.msra.mxu0 %v650
        %1238 = vmatprep.subr.mxu0 0.0
        %1239 = vmatpush1.msra.mxu0 %v649
        %1240 = vmatprep.subr.mxu0 0.0
        %1241 = vmatpush1.msra.mxu0 %v648
        %1242 = vmatprep.subr.mxu0 0.0
        %1243 = vmatpush1.msra.mxu0 %v647
        %1244 = vmatprep.subr.mxu0 0.0
        %1245 = vmatpush1.msra.mxu0 %v646
        %1246 = vmatprep.subr.mxu0 0.0
        %1247 = vmatpush1.msra.mxu0 %v645
        %1248 = vmatprep.subr.mxu0 0.0
        %1249 = vmatpush1.msra.mxu0 %v644
        %1250 = vmatprep.subr.mxu0 0.0
        %1251 = vmatpush1.msra.mxu0 %v643
        %1252 = vmatprep.subr.mxu0 0.0
        %1253 = vmatpush1.msra.mxu0 %v642
        %1254 = vmatprep.subr.mxu0 0.0
        %1255 = vmatpush1.msra.mxu0 %v641
        %1256 = vmatprep.subr.mxu0 0.0
        %1257 = vmatpush1.msra.mxu0 %v640
        %1258 = vmatprep.subr.mxu0 0.0
        %1259 = vmatpush1.msra.mxu0 %v639
        %1260 = vmatprep.subr.mxu0 0.0
        %1261 = vmatpush1.msra.mxu0 %v638
        %1262 = vmatprep.subr.mxu0 0.0
        %1263 = vmatpush2.msra.mxu0 0.0
        %1264 = vmatprep.subr.mxu0 0.0
        %1265 = vmatpush2.msra.mxu0 0.0
        %1266 = vmatprep.subr.mxu0 0.0
        %1267 = vmatpush2.msra.mxu0 0.0
        %1268 = vmatprep.subr.mxu0 0.0
        %1269 = vmatpush2.msra.mxu0 0.0
        %1270 = vmatprep.subr.mxu0 0.0
        %1271 = vmatpush2.msra.mxu0 0.0
        %1272 = vmatprep.subr.mxu0 0.0
        %1273 = vmatpush2.msra.mxu0 0.0
        %1274 = vmatprep.subr.mxu0 0.0
        %1275 = vmatpush2.msra.mxu0 0.0
        %1276 = vmatprep.subr.mxu0 0.0
        %1277 = vmatpush2.msra.mxu0 0.0
        %1278 = vmatprep.subr.mxu0 0.0
        %1279 = vmatpush2.msra.mxu0 0.0
        %1280 = vmatprep.subr.mxu0 0.0
        %1281 = vmatpush2.msra.mxu0 0.0
        %1282 = vmatprep.subr.mxu0 0.0
        %1283 = vmatpush2.msra.mxu0 0.0
        %1284 = vmatprep.subr.mxu0 0.0
        %1285 = vmatpush2.msra.mxu0 0.0
        %1286 = vmatprep.subr.mxu0 0.0
        %1287 = vmatpush2.msra.mxu0 0.0
        %1288 = vmatprep.subr.mxu0 0.0
        %1289 = vmatpush2.msra.mxu0 0.0
        %1290 = vmatprep.subr.mxu0 0.0
        %1291 = vmatpush2.msra.mxu0 0.0
        %1292 = vmatprep.subr.mxu0 0.0
        %1293 = vmatpush2.msra.mxu0 0.0
        %1294 = vmatprep.mubr.f32.mxu0 0.0
        %1295 = vmatmul.mubr.f32.gmra.mxu0 %v634
        %v1296 = vpop.f32.mrf.mxu0
        %v1297 = vadd.f32 %v1227, %v1296
        %v1298 = vpop.f32.mrf.mxu0
        %1299 = vdwg.mxu0
        %1300 = vmatprep.subr.mxu0 0.0
        %1301 = vmatpush1.msra.mxu0 %v687
        %1302 = vmatprep.subr.mxu0 0.0
        %1303 = vmatpush1.msra.mxu0 %v686
        %1304 = vmatprep.subr.mxu0 0.0
        %1305 = vmatpush1.msra.mxu0 %v685
        %1306 = vmatprep.subr.mxu0 0.0
        %1307 = vmatpush1.msra.mxu0 %v684
        %1308 = vmatprep.subr.mxu0 0.0
        %1309 = vmatpush1.msra.mxu0 %v683
        %1310 = vmatprep.subr.mxu0 0.0
        %1311 = vmatpush1.msra.mxu0 %v682
        %1312 = vmatprep.subr.mxu0 0.0
        %1313 = vmatpush1.msra.mxu0 %v681
        %1314 = vmatprep.subr.mxu0 0.0
        %1315 = vmatpush1.msra.mxu0 %v680
        %1316 = vmatprep.subr.mxu0 0.0
        %1317 = vmatpush1.msra.mxu0 %v679
        %1318 = vmatprep.subr.mxu0 0.0
        %1319 = vmatpush1.msra.mxu0 %v678
        %1320 = vmatprep.subr.mxu0 0.0
        %1321 = vmatpush1.msra.mxu0 %v677
        %1322 = vmatprep.subr.mxu0 0.0
        %1323 = vmatpush1.msra.mxu0 %v676
        %1324 = vmatprep.subr.mxu0 0.0
        %1325 = vmatpush1.msra.mxu0 %v675
        %1326 = vmatprep.subr.mxu0 0.0
        %1327 = vmatpush1.msra.mxu0 %v674
        %1328 = vmatprep.subr.mxu0 0.0
        %1329 = vmatpush1.msra.mxu0 %v673
        %1330 = vmatprep.subr.mxu0 0.0
        %1331 = vmatpush1.msra.mxu0 %v672
        %1332 = vmatprep.subr.mxu0 0.0
        %1333 = vmatpush2.msra.mxu0 0.0
        %1334 = vmatprep.subr.mxu0 0.0
        %1335 = vmatpush2.msra.mxu0 0.0
        %1336 = vmatprep.subr.mxu0 0.0
        %1337 = vmatpush2.msra.mxu0 0.0
        %1338 = vmatprep.subr.mxu0 0.0
        %1339 = vmatpush2.msra.mxu0 0.0
        %1340 = vmatprep.subr.mxu0 0.0
        %1341 = vmatpush2.msra.mxu0 0.0
        %1342 = vmatprep.subr.mxu0 0.0
        %1343 = vmatpush2.msra.mxu0 0.0
        %1344 = vmatprep.subr.mxu0 0.0
        %1345 = vmatpush2.msra.mxu0 0.0
        %1346 = vmatprep.subr.mxu0 0.0
        %1347 = vmatpush2.msra.mxu0 0.0
        %1348 = vmatprep.subr.mxu0 0.0
        %1349 = vmatpush2.msra.mxu0 0.0
        %1350 = vmatprep.subr.mxu0 0.0
        %1351 = vmatpush2.msra.mxu0 0.0
        %1352 = vmatprep.subr.mxu0 0.0
        %1353 = vmatpush2.msra.mxu0 0.0
        %1354 = vmatprep.subr.mxu0 0.0
        %1355 = vmatpush2.msra.mxu0 0.0
        %1356 = vmatprep.subr.mxu0 0.0
        %1357 = vmatpush2.msra.mxu0 0.0
        %1358 = vmatprep.subr.mxu0 0.0
        %1359 = vmatpush2.msra.mxu0 0.0
        %1360 = vmatprep.subr.mxu0 0.0
        %1361 = vmatpush2.msra.mxu0 0.0
        %1362 = vmatprep.subr.mxu0 0.0
        %1363 = vmatpush2.msra.mxu0 0.0
        %1364 = vmatprep.mubr.f32.mxu0 0.0
        %1365 = vmatmul.mubr.f32.gmra.mxu0 %v637
        %v1366 = vpop.f32.mrf.mxu0
        %v1367 = vadd.f32 0.0, %v1366
        %v1368 = vpop.f32.mrf.mxu0
        %1369 = vdwg.mxu0
        %v1370 = vadd.f32 %v1297, %v1367
        %1371 = vmatprep.subr.mxu0 0.0
        %1372 = vmatpush1.msra.mxu0 %v720
        %1373 = vmatprep.subr.mxu0 0.0
        %1374 = vmatpush1.msra.mxu0 %v719
        %1375 = vmatprep.subr.mxu0 0.0
        %1376 = vmatpush1.msra.mxu0 %v718
        %1377 = vmatprep.subr.mxu0 0.0
        %1378 = vmatpush1.msra.mxu0 %v717
        %1379 = vmatprep.subr.mxu0 0.0
        %1380 = vmatpush1.msra.mxu0 %v716
        %1381 = vmatprep.subr.mxu0 0.0
        %1382 = vmatpush1.msra.mxu0 %v715
        %1383 = vmatprep.subr.mxu0 0.0
        %1384 = vmatpush1.msra.mxu0 %v714
        %1385 = vmatprep.subr.mxu0 0.0
        %1386 = vmatpush1.msra.mxu0 %v713
        %1387 = vmatprep.subr.mxu0 0.0
        %1388 = vmatpush1.msra.mxu0 %v712
        %1389 = vmatprep.subr.mxu0 0.0
        %1390 = vmatpush1.msra.mxu0 %v711
        %1391 = vmatprep.subr.mxu0 0.0
        %1392 = vmatpush1.msra.mxu0 %v710
        %1393 = vmatprep.subr.mxu0 0.0
        %1394 = vmatpush1.msra.mxu0 %v709
        %1395 = vmatprep.subr.mxu0 0.0
        %1396 = vmatpush1.msra.mxu0 %v708
        %1397 = vmatprep.subr.mxu0 0.0
        %1398 = vmatpush1.msra.mxu0 %v707
        %1399 = vmatprep.subr.mxu0 0.0
        %1400 = vmatpush1.msra.mxu0 %v706
        %1401 = vmatprep.subr.mxu0 0.0
        %1402 = vmatpush1.msra.mxu0 %v705
        %1403 = vmatprep.subr.mxu0 0.0
        %1404 = vmatpush2.msra.mxu0 0.0
        %1405 = vmatprep.subr.mxu0 0.0
        %1406 = vmatpush2.msra.mxu0 0.0
        %1407 = vmatprep.subr.mxu0 0.0
        %1408 = vmatpush2.msra.mxu0 0.0
        %1409 = vmatprep.subr.mxu0 0.0
        %1410 = vmatpush2.msra.mxu0 0.0
        %1411 = vmatprep.subr.mxu0 0.0
        %1412 = vmatpush2.msra.mxu0 0.0
        %1413 = vmatprep.subr.mxu0 0.0
        %1414 = vmatpush2.msra.mxu0 0.0
        %1415 = vmatprep.subr.mxu0 0.0
        %1416 = vmatpush2.msra.mxu0 0.0
        %1417 = vmatprep.subr.mxu0 0.0
        %1418 = vmatpush2.msra.mxu0 0.0
        %1419 = vmatprep.subr.mxu0 0.0
        %1420 = vmatpush2.msra.mxu0 0.0
        %1421 = vmatprep.subr.mxu0 0.0
        %1422 = vmatpush2.msra.mxu0 0.0
        %1423 = vmatprep.subr.mxu0 0.0
        %1424 = vmatpush2.msra.mxu0 0.0
        %1425 = vmatprep.subr.mxu0 0.0
        %1426 = vmatpush2.msra.mxu0 0.0
        %1427 = vmatprep.subr.mxu0 0.0
        %1428 = vmatpush2.msra.mxu0 0.0
        %1429 = vmatprep.subr.mxu0 0.0
        %1430 = vmatpush2.msra.mxu0 0.0
        %1431 = vmatprep.subr.mxu0 0.0
        %1432 = vmatpush2.msra.mxu0 0.0
        %1433 = vmatprep.subr.mxu0 0.0
        %1434 = vmatpush2.msra.mxu0 0.0
        %1435 = vmatprep.mubr.f32.mxu0 0.0
        %1436 = vmatmul.mubr.f32.gmra.mxu0 %v636
        %v1437 = vpop.f32.mrf.mxu0
        %v1438 = vadd.f32 0.0, %v1437
        %v1439 = vpop.f32.mrf.mxu0
        %1440 = vdwg.mxu0
        %1441 = vmatprep.subr.mxu0 0.0
        %1442 = vmatpush1.msra.mxu0 %v703
        %1443 = vmatprep.subr.mxu0 0.0
        %1444 = vmatpush1.msra.mxu0 %v702
        %1445 = vmatprep.subr.mxu0 0.0
        %1446 = vmatpush1.msra.mxu0 %v701
        %1447 = vmatprep.subr.mxu0 0.0
        %1448 = vmatpush1.msra.mxu0 %v700
        %1449 = vmatprep.subr.mxu0 0.0
        %1450 = vmatpush1.msra.mxu0 %v699
        %1451 = vmatprep.subr.mxu0 0.0
        %1452 = vmatpush1.msra.mxu0 %v698
        %1453 = vmatprep.subr.mxu0 0.0
        %1454 = vmatpush1.msra.mxu0 %v697
        %1455 = vmatprep.subr.mxu0 0.0
        %1456 = vmatpush1.msra.mxu0 %v696
        %1457 = vmatprep.subr.mxu0 0.0
        %1458 = vmatpush1.msra.mxu0 %v695
        %1459 = vmatprep.subr.mxu0 0.0
        %1460 = vmatpush1.msra.mxu0 %v694
        %1461 = vmatprep.subr.mxu0 0.0
        %1462 = vmatpush1.msra.mxu0 %v693
        %1463 = vmatprep.subr.mxu0 0.0
        %1464 = vmatpush1.msra.mxu0 %v692
        %1465 = vmatprep.subr.mxu0 0.0
        %1466 = vmatpush1.msra.mxu0 %v691
        %1467 = vmatprep.subr.mxu0 0.0
        %1468 = vmatpush1.msra.mxu0 %v690
        %1469 = vmatprep.subr.mxu0 0.0
        %1470 = vmatpush1.msra.mxu0 %v689
        %1471 = vmatprep.subr.mxu0 0.0
        %1472 = vmatpush1.msra.mxu0 %v688
        %1473 = vmatprep.subr.mxu0 0.0
        %1474 = vmatpush2.msra.mxu0 0.0
        %1475 = vmatprep.subr.mxu0 0.0
        %1476 = vmatpush2.msra.mxu0 0.0
        %1477 = vmatprep.subr.mxu0 0.0
        %1478 = vmatpush2.msra.mxu0 0.0
        %1479 = vmatprep.subr.mxu0 0.0
        %1480 = vmatpush2.msra.mxu0 0.0
        %1481 = vmatprep.subr.mxu0 0.0
        %1482 = vmatpush2.msra.mxu0 0.0
        %1483 = vmatprep.subr.mxu0 0.0
        %1484 = vmatpush2.msra.mxu0 0.0
        %1485 = vmatprep.subr.mxu0 0.0
        %1486 = vmatpush2.msra.mxu0 0.0
        %1487 = vmatprep.subr.mxu0 0.0
        %1488 = vmatpush2.msra.mxu0 0.0
        %1489 = vmatprep.subr.mxu0 0.0
        %1490 = vmatpush2.msra.mxu0 0.0
        %1491 = vmatprep.subr.mxu0 0.0
        %1492 = vmatpush2.msra.mxu0 0.0
        %1493 = vmatprep.subr.mxu0 0.0
        %1494 = vmatpush2.msra.mxu0 0.0
        %1495 = vmatprep.subr.mxu0 0.0
        %1496 = vmatpush2.msra.mxu0 0.0
        %1497 = vmatprep.subr.mxu0 0.0
        %1498 = vmatpush2.msra.mxu0 0.0
        %1499 = vmatprep.subr.mxu0 0.0
        %1500 = vmatpush2.msra.mxu0 0.0
        %1501 = vmatprep.subr.mxu0 0.0
        %1502 = vmatpush2.msra.mxu0 0.0
        %1503 = vmatprep.subr.mxu0 0.0
        %1504 = vmatpush2.msra.mxu0 0.0
        %1505 = vmatprep.mubr.f32.mxu0 0.0
        %1506 = vmatmul.mubr.f32.gmra.mxu0 %v634
        %v1507 = vpop.f32.mrf.mxu0
        %v1508 = vadd.f32 %v1438, %v1507
        %v1509 = vpop.f32.mrf.mxu0
        %1510 = vdwg.mxu0
        %1511 = vmatprep.subr.mxu0 0.0
        %1512 = vmatpush1.msra.mxu0 %v737
        %1513 = vmatprep.subr.mxu0 0.0
        %1514 = vmatpush1.msra.mxu0 %v736
        %1515 = vmatprep.subr.mxu0 0.0
        %1516 = vmatpush1.msra.mxu0 %v735
        %1517 = vmatprep.subr.mxu0 0.0
        %1518 = vmatpush1.msra.mxu0 %v734
        %1519 = vmatprep.subr.mxu0 0.0
        %1520 = vmatpush1.msra.mxu0 %v733
        %1521 = vmatprep.subr.mxu0 0.0
        %1522 = vmatpush1.msra.mxu0 %v732
        %1523 = vmatprep.subr.mxu0 0.0
        %1524 = vmatpush1.msra.mxu0 %v731
        %1525 = vmatprep.subr.mxu0 0.0
        %1526 = vmatpush1.msra.mxu0 %v730
        %1527 = vmatprep.subr.mxu0 0.0
        %1528 = vmatpush1.msra.mxu0 %v729
        %1529 = vmatprep.subr.mxu0 0.0
        %1530 = vmatpush1.msra.mxu0 %v728
        %1531 = vmatprep.subr.mxu0 0.0
        %1532 = vmatpush1.msra.mxu0 %v727
        %1533 = vmatprep.subr.mxu0 0.0
        %1534 = vmatpush1.msra.mxu0 %v726
        %1535 = vmatprep.subr.mxu0 0.0
        %1536 = vmatpush1.msra.mxu0 %v725
        %1537 = vmatprep.subr.mxu0 0.0
        %1538 = vmatpush1.msra.mxu0 %v724
        %1539 = vmatprep.subr.mxu0 0.0
        %1540 = vmatpush1.msra.mxu0 %v723
        %1541 = vmatprep.subr.mxu0 0.0
        %1542 = vmatpush1.msra.mxu0 %v722
        %1543 = vmatprep.subr.mxu0 0.0
        %1544 = vmatpush2.msra.mxu0 0.0
        %1545 = vmatprep.subr.mxu0 0.0
        %1546 = vmatpush2.msra.mxu0 0.0
        %1547 = vmatprep.subr.mxu0 0.0
        %1548 = vmatpush2.msra.mxu0 0.0
        %1549 = vmatprep.subr.mxu0 0.0
        %1550 = vmatpush2.msra.mxu0 0.0
        %1551 = vmatprep.subr.mxu0 0.0
        %1552 = vmatpush2.msra.mxu0 0.0
        %1553 = vmatprep.subr.mxu0 0.0
        %1554 = vmatpush2.msra.mxu0 0.0
        %1555 = vmatprep.subr.mxu0 0.0
        %1556 = vmatpush2.msra.mxu0 0.0
        %1557 = vmatprep.subr.mxu0 0.0
        %1558 = vmatpush2.msra.mxu0 0.0
        %1559 = vmatprep.subr.mxu0 0.0
        %1560 = vmatpush2.msra.mxu0 0.0
        %1561 = vmatprep.subr.mxu0 0.0
        %1562 = vmatpush2.msra.mxu0 0.0
        %1563 = vmatprep.subr.mxu0 0.0
        %1564 = vmatpush2.msra.mxu0 0.0
        %1565 = vmatprep.subr.mxu0 0.0
        %1566 = vmatpush2.msra.mxu0 0.0
        %1567 = vmatprep.subr.mxu0 0.0
        %1568 = vmatpush2.msra.mxu0 0.0
        %1569 = vmatprep.subr.mxu0 0.0
        %1570 = vmatpush2.msra.mxu0 0.0
        %1571 = vmatprep.subr.mxu0 0.0
        %1572 = vmatpush2.msra.mxu0 0.0
        %1573 = vmatprep.subr.mxu0 0.0
        %1574 = vmatpush2.msra.mxu0 0.0
        %1575 = vmatprep.mubr.f32.mxu0 0.0
        %1576 = vmatmul.mubr.f32.gmra.mxu0 %v637
        %v1577 = vpop.f32.mrf.mxu0
        %v1578 = vadd.f32 0.0, %v1577
        %v1579 = vpop.f32.mrf.mxu0
        %1580 = vdwg.mxu0
        %v1581 = vadd.f32 %v1508, %v1578
        %v1582 = vmax.f32 %v948, %v1159
        %v1583 = vmax.f32 %v1370, %v1581
        %v1584 = vmax.f32 %v1582, %v1583
        %v1585 = vld [vmem:[%s6] sm:$0x1]
        %v1587 = vlaneseq
        %v1588 = vshrl.u32 %v1587, 7
        %v1589 = vsub.s32 0, %v1588
        %v1590 = vrot.slane %v1585, %v1589
        %v1592 = vadd.f32 %v1584, %v1590
        %v1593 = vmax.f32 %v1592, 0.0
        %1594 = vmatprep.subr.mxu0 0.0
        %1595 = vmatpush1.msra.mxu0 %v670
        %1596 = vmatprep.subr.mxu0 0.0
        %1597 = vmatpush1.msra.mxu0 %v669
        %1598 = vmatprep.subr.mxu0 0.0
        %1599 = vmatpush1.msra.mxu0 %v668
        %1600 = vmatprep.subr.mxu0 0.0
        %1601 = vmatpush1.msra.mxu0 %v667
        %1602 = vmatprep.subr.mxu0 0.0
        %1603 = vmatpush1.msra.mxu0 %v666
        %1604 = vmatprep.subr.mxu0 0.0
        %1605 = vmatpush1.msra.mxu0 %v665
        %1606 = vmatprep.subr.mxu0 0.0
        %1607 = vmatpush1.msra.mxu0 %v664
        %1608 = vmatprep.subr.mxu0 0.0
        %1609 = vmatpush1.msra.mxu0 %v663
        %1610 = vmatprep.subr.mxu0 0.0
        %1611 = vmatpush1.msra.mxu0 %v662
        %1612 = vmatprep.subr.mxu0 0.0
        %1613 = vmatpush1.msra.mxu0 %v661
        %1614 = vmatprep.subr.mxu0 0.0
        %1615 = vmatpush1.msra.mxu0 %v660
        %1616 = vmatprep.subr.mxu0 0.0
        %1617 = vmatpush1.msra.mxu0 %v659
        %1618 = vmatprep.subr.mxu0 0.0
        %1619 = vmatpush1.msra.mxu0 %v658
        %1620 = vmatprep.subr.mxu0 0.0
        %1621 = vmatpush1.msra.mxu0 %v657
        %1622 = vmatprep.subr.mxu0 0.0
        %1623 = vmatpush1.msra.mxu0 %v656
        %1624 = vmatprep.subr.mxu0 0.0
        %1625 = vmatpush1.msra.mxu0 %v655
        %1626 = vmatprep.subr.mxu0 0.0
        %1627 = vmatpush2.msra.mxu0 0.0
        %1628 = vmatprep.subr.mxu0 0.0
        %1629 = vmatpush2.msra.mxu0 0.0
        %1630 = vmatprep.subr.mxu0 0.0
        %1631 = vmatpush2.msra.mxu0 0.0
        %1632 = vmatprep.subr.mxu0 0.0
        %1633 = vmatpush2.msra.mxu0 0.0
        %1634 = vmatprep.subr.mxu0 0.0
        %1635 = vmatpush2.msra.mxu0 0.0
        %1636 = vmatprep.subr.mxu0 0.0
        %1637 = vmatpush2.msra.mxu0 0.0
        %1638 = vmatprep.subr.mxu0 0.0
        %1639 = vmatpush2.msra.mxu0 0.0
        %1640 = vmatprep.subr.mxu0 0.0
        %1641 = vmatpush2.msra.mxu0 0.0
        %1642 = vmatprep.subr.mxu0 0.0
        %1643 = vmatpush2.msra.mxu0 0.0
        %1644 = vmatprep.subr.mxu0 0.0
        %1645 = vmatpush2.msra.mxu0 0.0
        %1646 = vmatprep.subr.mxu0 0.0
        %1647 = vmatpush2.msra.mxu0 0.0
        %1648 = vmatprep.subr.mxu0 0.0
        %1649 = vmatpush2.msra.mxu0 0.0
        %1650 = vmatprep.subr.mxu0 0.0
        %1651 = vmatpush2.msra.mxu0 0.0
        %1652 = vmatprep.subr.mxu0 0.0
        %1653 = vmatpush2.msra.mxu0 0.0
        %1654 = vmatprep.subr.mxu0 0.0
        %1655 = vmatpush2.msra.mxu0 0.0
        %1656 = vmatprep.subr.mxu0 0.0
        %1657 = vmatpush2.msra.mxu0 0.0
        %1658 = vmatprep.mubr.f32.mxu0 0.0
        %1659 = vmatmul.mubr.f32.gmra.mxu0 %v637
        %v1660 = vpop.f32.mrf.mxu0
        %v1661 = vadd.f32 0.0, %v1660
        %v1662 = vpop.f32.mrf.mxu0
        %1663 = vdwg.mxu0
        %1664 = vmatprep.subr.mxu0 0.0
        %1665 = vmatpush1.msra.mxu0 %v653
        %1666 = vmatprep.subr.mxu0 0.0
        %1667 = vmatpush1.msra.mxu0 %v652
        %1668 = vmatprep.subr.mxu0 0.0
        %1669 = vmatpush1.msra.mxu0 %v651
        %1670 = vmatprep.subr.mxu0 0.0
        %1671 = vmatpush1.msra.mxu0 %v650
        %1672 = vmatprep.subr.mxu0 0.0
        %1673 = vmatpush1.msra.mxu0 %v649
        %1674 = vmatprep.subr.mxu0 0.0
        %1675 = vmatpush1.msra.mxu0 %v648
        %1676 = vmatprep.subr.mxu0 0.0
        %1677 = vmatpush1.msra.mxu0 %v647
        %1678 = vmatprep.subr.mxu0 0.0
        %1679 = vmatpush1.msra.mxu0 %v646
        %1680 = vmatprep.subr.mxu0 0.0
        %1681 = vmatpush1.msra.mxu0 %v645
        %1682 = vmatprep.subr.mxu0 0.0
        %1683 = vmatpush1.msra.mxu0 %v644
        %1684 = vmatprep.subr.mxu0 0.0
        %1685 = vmatpush1.msra.mxu0 %v643
        %1686 = vmatprep.subr.mxu0 0.0
        %1687 = vmatpush1.msra.mxu0 %v642
        %1688 = vmatprep.subr.mxu0 0.0
        %1689 = vmatpush1.msra.mxu0 %v641
        %1690 = vmatprep.subr.mxu0 0.0
        %1691 = vmatpush1.msra.mxu0 %v640
        %1692 = vmatprep.subr.mxu0 0.0
        %1693 = vmatpush1.msra.mxu0 %v639
        %1694 = vmatprep.subr.mxu0 0.0
        %1695 = vmatpush1.msra.mxu0 %v638
        %1696 = vmatprep.subr.mxu0 0.0
        %1697 = vmatpush2.msra.mxu0 0.0
        %1698 = vmatprep.subr.mxu0 0.0
        %1699 = vmatpush2.msra.mxu0 0.0
        %1700 = vmatprep.subr.mxu0 0.0
        %1701 = vmatpush2.msra.mxu0 0.0
        %1702 = vmatprep.subr.mxu0 0.0
        %1703 = vmatpush2.msra.mxu0 0.0
        %1704 = vmatprep.subr.mxu0 0.0
        %1705 = vmatpush2.msra.mxu0 0.0
        %1706 = vmatprep.subr.mxu0 0.0
        %1707 = vmatpush2.msra.mxu0 0.0
        %1708 = vmatprep.subr.mxu0 0.0
        %1709 = vmatpush2.msra.mxu0 0.0
        %1710 = vmatprep.subr.mxu0 0.0
        %1711 = vmatpush2.msra.mxu0 0.0
        %1712 = vmatprep.subr.mxu0 0.0
        %1713 = vmatpush2.msra.mxu0 0.0
        %1714 = vmatprep.subr.mxu0 0.0
        %1715 = vmatpush2.msra.mxu0 0.0
        %1716 = vmatprep.subr.mxu0 0.0
        %1717 = vmatpush2.msra.mxu0 0.0
        %1718 = vmatprep.subr.mxu0 0.0
        %1719 = vmatpush2.msra.mxu0 0.0
        %1720 = vmatprep.subr.mxu0 0.0
        %1721 = vmatpush2.msra.mxu0 0.0
        %1722 = vmatprep.subr.mxu0 0.0
        %1723 = vmatpush2.msra.mxu0 0.0
        %1724 = vmatprep.subr.mxu0 0.0
        %1725 = vmatpush2.msra.mxu0 0.0
        %1726 = vmatprep.subr.mxu0 0.0
        %1727 = vmatpush2.msra.mxu0 0.0
        %1728 = vmatprep.mubr.f32.mxu0 0.0
        %1729 = vmatmul.mubr.f32.gmra.mxu0 %v636
        %v1730 = vpop.f32.mrf.mxu0
        %v1731 = vadd.f32 %v1661, %v1730
        %v1732 = vpop.f32.mrf.mxu0
        %1733 = vdwg.mxu0
        %vm1736 = vcmask 1046528
        %v1737 = vrot.slane %v632, 1
        %v1738 = vrot.slane %v633, 1
        %v1739 = vsel %vm1736, %v1737, %v1738
        %1741 = vmatprep.subr.mxu0 0.0
        %1742 = vmatpush1.msra.mxu0 %v687
        %1743 = vmatprep.subr.mxu0 0.0
        %1744 = vmatpush1.msra.mxu0 %v686
        %1745 = vmatprep.subr.mxu0 0.0
        %1746 = vmatpush1.msra.mxu0 %v685
        %1747 = vmatprep.subr.mxu0 0.0
        %1748 = vmatpush1.msra.mxu0 %v684
        %1749 = vmatprep.subr.mxu0 0.0
        %1750 = vmatpush1.msra.mxu0 %v683
        %1751 = vmatprep.subr.mxu0 0.0
        %1752 = vmatpush1.msra.mxu0 %v682
        %1753 = vmatprep.subr.mxu0 0.0
        %1754 = vmatpush1.msra.mxu0 %v681
        %1755 = vmatprep.subr.mxu0 0.0
        %1756 = vmatpush1.msra.mxu0 %v680
        %1757 = vmatprep.subr.mxu0 0.0
        %1758 = vmatpush1.msra.mxu0 %v679
        %1759 = vmatprep.subr.mxu0 0.0
        %1760 = vmatpush1.msra.mxu0 %v678
        %1761 = vmatprep.subr.mxu0 0.0
        %1762 = vmatpush1.msra.mxu0 %v677
        %1763 = vmatprep.subr.mxu0 0.0
        %1764 = vmatpush1.msra.mxu0 %v676
        %1765 = vmatprep.subr.mxu0 0.0
        %1766 = vmatpush1.msra.mxu0 %v675
        %1767 = vmatprep.subr.mxu0 0.0
        %1768 = vmatpush1.msra.mxu0 %v674
        %1769 = vmatprep.subr.mxu0 0.0
        %1770 = vmatpush1.msra.mxu0 %v673
        %1771 = vmatprep.subr.mxu0 0.0
        %1772 = vmatpush1.msra.mxu0 %v672
        %1773 = vmatprep.subr.mxu0 0.0
        %1774 = vmatpush2.msra.mxu0 0.0
        %1775 = vmatprep.subr.mxu0 0.0
        %1776 = vmatpush2.msra.mxu0 0.0
        %1777 = vmatprep.subr.mxu0 0.0
        %1778 = vmatpush2.msra.mxu0 0.0
        %1779 = vmatprep.subr.mxu0 0.0
        %1780 = vmatpush2.msra.mxu0 0.0
        %1781 = vmatprep.subr.mxu0 0.0
        %1782 = vmatpush2.msra.mxu0 0.0
        %1783 = vmatprep.subr.mxu0 0.0
        %1784 = vmatpush2.msra.mxu0 0.0
        %1785 = vmatprep.subr.mxu0 0.0
        %1786 = vmatpush2.msra.mxu0 0.0
        %1787 = vmatprep.subr.mxu0 0.0
        %1788 = vmatpush2.msra.mxu0 0.0
        %1789 = vmatprep.subr.mxu0 0.0
        %1790 = vmatpush2.msra.mxu0 0.0
        %1791 = vmatprep.subr.mxu0 0.0
        %1792 = vmatpush2.msra.mxu0 0.0
        %1793 = vmatprep.subr.mxu0 0.0
        %1794 = vmatpush2.msra.mxu0 0.0
        %1795 = vmatprep.subr.mxu0 0.0
        %1796 = vmatpush2.msra.mxu0 0.0
        %1797 = vmatprep.subr.mxu0 0.0
        %1798 = vmatpush2.msra.mxu0 0.0
        %1799 = vmatprep.subr.mxu0 0.0
        %1800 = vmatpush2.msra.mxu0 0.0
        %1801 = vmatprep.subr.mxu0 0.0
        %1802 = vmatpush2.msra.mxu0 0.0
        %1803 = vmatprep.subr.mxu0 0.0
        %1804 = vmatpush2.msra.mxu0 0.0
        %1805 = vmatprep.mubr.f32.mxu0 0.0
        %1806 = vmatmul.mubr.f32.gmra.mxu0 %v1739
        %v1807 = vpop.f32.mrf.mxu0
        %v1808 = vadd.f32 0.0, %v1807
        %v1809 = vpop.f32.mrf.mxu0
        %1810 = vdwg.mxu0
        %v1811 = vadd.f32 %v1731, %v1808
        %1812 = vmatprep.subr.mxu0 0.0
        %1813 = vmatpush1.msra.mxu0 %v720
        %1814 = vmatprep.subr.mxu0 0.0
        %1815 = vmatpush1.msra.mxu0 %v719
        %1816 = vmatprep.subr.mxu0 0.0
        %1817 = vmatpush1.msra.mxu0 %v718
        %1818 = vmatprep.subr.mxu0 0.0
        %1819 = vmatpush1.msra.mxu0 %v717
        %1820 = vmatprep.subr.mxu0 0.0
        %1821 = vmatpush1.msra.mxu0 %v716
        %1822 = vmatprep.subr.mxu0 0.0
        %1823 = vmatpush1.msra.mxu0 %v715
        %1824 = vmatprep.subr.mxu0 0.0
        %1825 = vmatpush1.msra.mxu0 %v714
        %1826 = vmatprep.subr.mxu0 0.0
        %1827 = vmatpush1.msra.mxu0 %v713
        %1828 = vmatprep.subr.mxu0 0.0
        %1829 = vmatpush1.msra.mxu0 %v712
        %1830 = vmatprep.subr.mxu0 0.0
        %1831 = vmatpush1.msra.mxu0 %v711
        %1832 = vmatprep.subr.mxu0 0.0
        %1833 = vmatpush1.msra.mxu0 %v710
        %1834 = vmatprep.subr.mxu0 0.0
        %1835 = vmatpush1.msra.mxu0 %v709
        %1836 = vmatprep.subr.mxu0 0.0
        %1837 = vmatpush1.msra.mxu0 %v708
        %1838 = vmatprep.subr.mxu0 0.0
        %1839 = vmatpush1.msra.mxu0 %v707
        %1840 = vmatprep.subr.mxu0 0.0
        %1841 = vmatpush1.msra.mxu0 %v706
        %1842 = vmatprep.subr.mxu0 0.0
        %1843 = vmatpush1.msra.mxu0 %v705
        %1844 = vmatprep.subr.mxu0 0.0
        %1845 = vmatpush2.msra.mxu0 0.0
        %1846 = vmatprep.subr.mxu0 0.0
        %1847 = vmatpush2.msra.mxu0 0.0
        %1848 = vmatprep.subr.mxu0 0.0
        %1849 = vmatpush2.msra.mxu0 0.0
        %1850 = vmatprep.subr.mxu0 0.0
        %1851 = vmatpush2.msra.mxu0 0.0
        %1852 = vmatprep.subr.mxu0 0.0
        %1853 = vmatpush2.msra.mxu0 0.0
        %1854 = vmatprep.subr.mxu0 0.0
        %1855 = vmatpush2.msra.mxu0 0.0
        %1856 = vmatprep.subr.mxu0 0.0
        %1857 = vmatpush2.msra.mxu0 0.0
        %1858 = vmatprep.subr.mxu0 0.0
        %1859 = vmatpush2.msra.mxu0 0.0
        %1860 = vmatprep.subr.mxu0 0.0
        %1861 = vmatpush2.msra.mxu0 0.0
        %1862 = vmatprep.subr.mxu0 0.0
        %1863 = vmatpush2.msra.mxu0 0.0
        %1864 = vmatprep.subr.mxu0 0.0
        %1865 = vmatpush2.msra.mxu0 0.0
        %1866 = vmatprep.subr.mxu0 0.0
        %1867 = vmatpush2.msra.mxu0 0.0
        %1868 = vmatprep.subr.mxu0 0.0
        %1869 = vmatpush2.msra.mxu0 0.0
        %1870 = vmatprep.subr.mxu0 0.0
        %1871 = vmatpush2.msra.mxu0 0.0
        %1872 = vmatprep.subr.mxu0 0.0
        %1873 = vmatpush2.msra.mxu0 0.0
        %1874 = vmatprep.subr.mxu0 0.0
        %1875 = vmatpush2.msra.mxu0 0.0
        %1876 = vmatprep.mubr.f32.mxu0 0.0
        %1877 = vmatmul.mubr.f32.gmra.mxu0 %v637
        %v1878 = vpop.f32.mrf.mxu0
        %v1879 = vadd.f32 0.0, %v1878
        %v1880 = vpop.f32.mrf.mxu0
        %1881 = vdwg.mxu0
        %1882 = vmatprep.subr.mxu0 0.0
        %1883 = vmatpush1.msra.mxu0 %v703
        %1884 = vmatprep.subr.mxu0 0.0
        %1885 = vmatpush1.msra.mxu0 %v702
        %1886 = vmatprep.subr.mxu0 0.0
        %1887 = vmatpush1.msra.mxu0 %v701
        %1888 = vmatprep.subr.mxu0 0.0
        %1889 = vmatpush1.msra.mxu0 %v700
        %1890 = vmatprep.subr.mxu0 0.0
        %1891 = vmatpush1.msra.mxu0 %v699
        %1892 = vmatprep.subr.mxu0 0.0
        %1893 = vmatpush1.msra.mxu0 %v698
        %1894 = vmatprep.subr.mxu0 0.0
        %1895 = vmatpush1.msra.mxu0 %v697
        %1896 = vmatprep.subr.mxu0 0.0
        %1897 = vmatpush1.msra.mxu0 %v696
        %1898 = vmatprep.subr.mxu0 0.0
        %1899 = vmatpush1.msra.mxu0 %v695
        %1900 = vmatprep.subr.mxu0 0.0
        %1901 = vmatpush1.msra.mxu0 %v694
        %1902 = vmatprep.subr.mxu0 0.0
        %1903 = vmatpush1.msra.mxu0 %v693
        %1904 = vmatprep.subr.mxu0 0.0
        %1905 = vmatpush1.msra.mxu0 %v692
        %1906 = vmatprep.subr.mxu0 0.0
        %1907 = vmatpush1.msra.mxu0 %v691
        %1908 = vmatprep.subr.mxu0 0.0
        %1909 = vmatpush1.msra.mxu0 %v690
        %1910 = vmatprep.subr.mxu0 0.0
        %1911 = vmatpush1.msra.mxu0 %v689
        %1912 = vmatprep.subr.mxu0 0.0
        %1913 = vmatpush1.msra.mxu0 %v688
        %1914 = vmatprep.subr.mxu0 0.0
        %1915 = vmatpush2.msra.mxu0 0.0
        %1916 = vmatprep.subr.mxu0 0.0
        %1917 = vmatpush2.msra.mxu0 0.0
        %1918 = vmatprep.subr.mxu0 0.0
        %1919 = vmatpush2.msra.mxu0 0.0
        %1920 = vmatprep.subr.mxu0 0.0
        %1921 = vmatpush2.msra.mxu0 0.0
        %1922 = vmatprep.subr.mxu0 0.0
        %1923 = vmatpush2.msra.mxu0 0.0
        %1924 = vmatprep.subr.mxu0 0.0
        %1925 = vmatpush2.msra.mxu0 0.0
        %1926 = vmatprep.subr.mxu0 0.0
        %1927 = vmatpush2.msra.mxu0 0.0
        %1928 = vmatprep.subr.mxu0 0.0
        %1929 = vmatpush2.msra.mxu0 0.0
        %1930 = vmatprep.subr.mxu0 0.0
        %1931 = vmatpush2.msra.mxu0 0.0
        %1932 = vmatprep.subr.mxu0 0.0
        %1933 = vmatpush2.msra.mxu0 0.0
        %1934 = vmatprep.subr.mxu0 0.0
        %1935 = vmatpush2.msra.mxu0 0.0
        %1936 = vmatprep.subr.mxu0 0.0
        %1937 = vmatpush2.msra.mxu0 0.0
        %1938 = vmatprep.subr.mxu0 0.0
        %1939 = vmatpush2.msra.mxu0 0.0
        %1940 = vmatprep.subr.mxu0 0.0
        %1941 = vmatpush2.msra.mxu0 0.0
        %1942 = vmatprep.subr.mxu0 0.0
        %1943 = vmatpush2.msra.mxu0 0.0
        %1944 = vmatprep.subr.mxu0 0.0
        %1945 = vmatpush2.msra.mxu0 0.0
        %1946 = vmatprep.mubr.f32.mxu0 0.0
        %1947 = vmatmul.mubr.f32.gmra.mxu0 %v636
        %v1948 = vpop.f32.mrf.mxu0
        %v1949 = vadd.f32 %v1879, %v1948
        %v1950 = vpop.f32.mrf.mxu0
        %1951 = vdwg.mxu0
        %1952 = vmatprep.subr.mxu0 0.0
        %1953 = vmatpush1.msra.mxu0 %v737
        %1954 = vmatprep.subr.mxu0 0.0
        %1955 = vmatpush1.msra.mxu0 %v736
        %1956 = vmatprep.subr.mxu0 0.0
        %1957 = vmatpush1.msra.mxu0 %v735
        %1958 = vmatprep.subr.mxu0 0.0
        %1959 = vmatpush1.msra.mxu0 %v734
        %1960 = vmatprep.subr.mxu0 0.0
        %1961 = vmatpush1.msra.mxu0 %v733
        %1962 = vmatprep.subr.mxu0 0.0
        %1963 = vmatpush1.msra.mxu0 %v732
        %1964 = vmatprep.subr.mxu0 0.0
        %1965 = vmatpush1.msra.mxu0 %v731
        %1966 = vmatprep.subr.mxu0 0.0
        %1967 = vmatpush1.msra.mxu0 %v730
        %1968 = vmatprep.subr.mxu0 0.0
        %1969 = vmatpush1.msra.mxu0 %v729
        %1970 = vmatprep.subr.mxu0 0.0
        %1971 = vmatpush1.msra.mxu0 %v728
        %1972 = vmatprep.subr.mxu0 0.0
        %1973 = vmatpush1.msra.mxu0 %v727
        %1974 = vmatprep.subr.mxu0 0.0
        %1975 = vmatpush1.msra.mxu0 %v726
        %1976 = vmatprep.subr.mxu0 0.0
        %1977 = vmatpush1.msra.mxu0 %v725
        %1978 = vmatprep.subr.mxu0 0.0
        %1979 = vmatpush1.msra.mxu0 %v724
        %1980 = vmatprep.subr.mxu0 0.0
        %1981 = vmatpush1.msra.mxu0 %v723
        %1982 = vmatprep.subr.mxu0 0.0
        %1983 = vmatpush1.msra.mxu0 %v722
        %1984 = vmatprep.subr.mxu0 0.0
        %1985 = vmatpush2.msra.mxu0 0.0
        %1986 = vmatprep.subr.mxu0 0.0
        %1987 = vmatpush2.msra.mxu0 0.0
        %1988 = vmatprep.subr.mxu0 0.0
        %1989 = vmatpush2.msra.mxu0 0.0
        %1990 = vmatprep.subr.mxu0 0.0
        %1991 = vmatpush2.msra.mxu0 0.0
        %1992 = vmatprep.subr.mxu0 0.0
        %1993 = vmatpush2.msra.mxu0 0.0
        %1994 = vmatprep.subr.mxu0 0.0
        %1995 = vmatpush2.msra.mxu0 0.0
        %1996 = vmatprep.subr.mxu0 0.0
        %1997 = vmatpush2.msra.mxu0 0.0
        %1998 = vmatprep.subr.mxu0 0.0
        %1999 = vmatpush2.msra.mxu0 0.0
        %2000 = vmatprep.subr.mxu0 0.0
        %2001 = vmatpush2.msra.mxu0 0.0
        %2002 = vmatprep.subr.mxu0 0.0
        %2003 = vmatpush2.msra.mxu0 0.0
        %2004 = vmatprep.subr.mxu0 0.0
        %2005 = vmatpush2.msra.mxu0 0.0
        %2006 = vmatprep.subr.mxu0 0.0
        %2007 = vmatpush2.msra.mxu0 0.0
        %2008 = vmatprep.subr.mxu0 0.0
        %2009 = vmatpush2.msra.mxu0 0.0
        %2010 = vmatprep.subr.mxu0 0.0
        %2011 = vmatpush2.msra.mxu0 0.0
        %2012 = vmatprep.subr.mxu0 0.0
        %2013 = vmatpush2.msra.mxu0 0.0
        %2014 = vmatprep.subr.mxu0 0.0
        %2015 = vmatpush2.msra.mxu0 0.0
        %2016 = vmatprep.mubr.f32.mxu0 0.0
        %2017 = vmatmul.mubr.f32.gmra.mxu0 %v1739
        %v2018 = vpop.f32.mrf.mxu0
        %v2019 = vadd.f32 0.0, %v2018
        %v2020 = vpop.f32.mrf.mxu0
        %2021 = vdwg.mxu0
        %v2022 = vadd.f32 %v1949, %v2019
        %2023 = vmatprep.subr.mxu0 0.0
        %2024 = vmatpush1.msra.mxu0 %v670
        %2025 = vmatprep.subr.mxu0 0.0
        %2026 = vmatpush1.msra.mxu0 %v669
        %2027 = vmatprep.subr.mxu0 0.0
        %2028 = vmatpush1.msra.mxu0 %v668
        %2029 = vmatprep.subr.mxu0 0.0
        %2030 = vmatpush1.msra.mxu0 %v667
        %2031 = vmatprep.subr.mxu0 0.0
        %2032 = vmatpush1.msra.mxu0 %v666
        %2033 = vmatprep.subr.mxu0 0.0
        %2034 = vmatpush1.msra.mxu0 %v665
        %2035 = vmatprep.subr.mxu0 0.0
        %2036 = vmatpush1.msra.mxu0 %v664
        %2037 = vmatprep.subr.mxu0 0.0
        %2038 = vmatpush1.msra.mxu0 %v663
        %2039 = vmatprep.subr.mxu0 0.0
        %2040 = vmatpush1.msra.mxu0 %v662
        %2041 = vmatprep.subr.mxu0 0.0
        %2042 = vmatpush1.msra.mxu0 %v661
        %2043 = vmatprep.subr.mxu0 0.0
        %2044 = vmatpush1.msra.mxu0 %v660
        %2045 = vmatprep.subr.mxu0 0.0
        %2046 = vmatpush1.msra.mxu0 %v659
        %2047 = vmatprep.subr.mxu0 0.0
        %2048 = vmatpush1.msra.mxu0 %v658
        %2049 = vmatprep.subr.mxu0 0.0
        %2050 = vmatpush1.msra.mxu0 %v657
        %2051 = vmatprep.subr.mxu0 0.0
        %2052 = vmatpush1.msra.mxu0 %v656
        %2053 = vmatprep.subr.mxu0 0.0
        %2054 = vmatpush1.msra.mxu0 %v655
        %2055 = vmatprep.subr.mxu0 0.0
        %2056 = vmatpush2.msra.mxu0 0.0
        %2057 = vmatprep.subr.mxu0 0.0
        %2058 = vmatpush2.msra.mxu0 0.0
        %2059 = vmatprep.subr.mxu0 0.0
        %2060 = vmatpush2.msra.mxu0 0.0
        %2061 = vmatprep.subr.mxu0 0.0
        %2062 = vmatpush2.msra.mxu0 0.0
        %2063 = vmatprep.subr.mxu0 0.0
        %2064 = vmatpush2.msra.mxu0 0.0
        %2065 = vmatprep.subr.mxu0 0.0
        %2066 = vmatpush2.msra.mxu0 0.0
        %2067 = vmatprep.subr.mxu0 0.0
        %2068 = vmatpush2.msra.mxu0 0.0
        %2069 = vmatprep.subr.mxu0 0.0
        %2070 = vmatpush2.msra.mxu0 0.0
        %2071 = vmatprep.subr.mxu0 0.0
        %2072 = vmatpush2.msra.mxu0 0.0
        %2073 = vmatprep.subr.mxu0 0.0
        %2074 = vmatpush2.msra.mxu0 0.0
        %2075 = vmatprep.subr.mxu0 0.0
        %2076 = vmatpush2.msra.mxu0 0.0
        %2077 = vmatprep.subr.mxu0 0.0
        %2078 = vmatpush2.msra.mxu0 0.0
        %2079 = vmatprep.subr.mxu0 0.0
        %2080 = vmatpush2.msra.mxu0 0.0
        %2081 = vmatprep.subr.mxu0 0.0
        %2082 = vmatpush2.msra.mxu0 0.0
        %2083 = vmatprep.subr.mxu0 0.0
        %2084 = vmatpush2.msra.mxu0 0.0
        %2085 = vmatprep.subr.mxu0 0.0
        %2086 = vmatpush2.msra.mxu0 0.0
        %2087 = vmatprep.mubr.f32.mxu0 0.0
        %2088 = vmatmul.mubr.f32.gmra.mxu0 %v1739
        %v2089 = vpop.f32.mrf.mxu0
        %v2090 = vadd.f32 0.0, %v2089
        %v2091 = vpop.f32.mrf.mxu0
        %2092 = vdwg.mxu0
        %2093 = vmatprep.subr.mxu0 0.0
        %2094 = vmatpush1.msra.mxu0 %v653
        %2095 = vmatprep.subr.mxu0 0.0
        %2096 = vmatpush1.msra.mxu0 %v652
        %2097 = vmatprep.subr.mxu0 0.0
        %2098 = vmatpush1.msra.mxu0 %v651
        %2099 = vmatprep.subr.mxu0 0.0
        %2100 = vmatpush1.msra.mxu0 %v650
        %2101 = vmatprep.subr.mxu0 0.0
        %2102 = vmatpush1.msra.mxu0 %v649
        %2103 = vmatprep.subr.mxu0 0.0
        %2104 = vmatpush1.msra.mxu0 %v648
        %2105 = vmatprep.subr.mxu0 0.0
        %2106 = vmatpush1.msra.mxu0 %v647
        %2107 = vmatprep.subr.mxu0 0.0
        %2108 = vmatpush1.msra.mxu0 %v646
        %2109 = vmatprep.subr.mxu0 0.0
        %2110 = vmatpush1.msra.mxu0 %v645
        %2111 = vmatprep.subr.mxu0 0.0
        %2112 = vmatpush1.msra.mxu0 %v644
        %2113 = vmatprep.subr.mxu0 0.0
        %2114 = vmatpush1.msra.mxu0 %v643
        %2115 = vmatprep.subr.mxu0 0.0
        %2116 = vmatpush1.msra.mxu0 %v642
        %2117 = vmatprep.subr.mxu0 0.0
        %2118 = vmatpush1.msra.mxu0 %v641
        %2119 = vmatprep.subr.mxu0 0.0
        %2120 = vmatpush1.msra.mxu0 %v640
        %2121 = vmatprep.subr.mxu0 0.0
        %2122 = vmatpush1.msra.mxu0 %v639
        %2123 = vmatprep.subr.mxu0 0.0
        %2124 = vmatpush1.msra.mxu0 %v638
        %2125 = vmatprep.subr.mxu0 0.0
        %2126 = vmatpush2.msra.mxu0 0.0
        %2127 = vmatprep.subr.mxu0 0.0
        %2128 = vmatpush2.msra.mxu0 0.0
        %2129 = vmatprep.subr.mxu0 0.0
        %2130 = vmatpush2.msra.mxu0 0.0
        %2131 = vmatprep.subr.mxu0 0.0
        %2132 = vmatpush2.msra.mxu0 0.0
        %2133 = vmatprep.subr.mxu0 0.0
        %2134 = vmatpush2.msra.mxu0 0.0
        %2135 = vmatprep.subr.mxu0 0.0
        %2136 = vmatpush2.msra.mxu0 0.0
        %2137 = vmatprep.subr.mxu0 0.0
        %2138 = vmatpush2.msra.mxu0 0.0
        %2139 = vmatprep.subr.mxu0 0.0
        %2140 = vmatpush2.msra.mxu0 0.0
        %2141 = vmatprep.subr.mxu0 0.0
        %2142 = vmatpush2.msra.mxu0 0.0
        %2143 = vmatprep.subr.mxu0 0.0
        %2144 = vmatpush2.msra.mxu0 0.0
        %2145 = vmatprep.subr.mxu0 0.0
        %2146 = vmatpush2.msra.mxu0 0.0
        %2147 = vmatprep.subr.mxu0 0.0
        %2148 = vmatpush2.msra.mxu0 0.0
        %2149 = vmatprep.subr.mxu0 0.0
        %2150 = vmatpush2.msra.mxu0 0.0
        %2151 = vmatprep.subr.mxu0 0.0
        %2152 = vmatpush2.msra.mxu0 0.0
        %2153 = vmatprep.subr.mxu0 0.0
        %2154 = vmatpush2.msra.mxu0 0.0
        %2155 = vmatprep.subr.mxu0 0.0
        %2156 = vmatpush2.msra.mxu0 0.0
        %2157 = vmatprep.mubr.f32.mxu0 0.0
        %2158 = vmatmul.mubr.f32.gmra.mxu0 %v637
        %v2159 = vpop.f32.mrf.mxu0
        %v2160 = vadd.f32 %v2090, %v2159
        %v2161 = vpop.f32.mrf.mxu0
        %2162 = vdwg.mxu0
        %v2165 = vrot.slane %v634, 1
        %v2166 = vrot.slane %v635, 1
        %v2167 = vsel %vm1736, %v2165, %v2166
        %2169 = vmatprep.subr.mxu0 0.0
        %2170 = vmatpush1.msra.mxu0 %v687
        %2171 = vmatprep.subr.mxu0 0.0
        %2172 = vmatpush1.msra.mxu0 %v686
        %2173 = vmatprep.subr.mxu0 0.0
        %2174 = vmatpush1.msra.mxu0 %v685
        %2175 = vmatprep.subr.mxu0 0.0
        %2176 = vmatpush1.msra.mxu0 %v684
        %2177 = vmatprep.subr.mxu0 0.0
        %2178 = vmatpush1.msra.mxu0 %v683
        %2179 = vmatprep.subr.mxu0 0.0
        %2180 = vmatpush1.msra.mxu0 %v682
        %2181 = vmatprep.subr.mxu0 0.0
        %2182 = vmatpush1.msra.mxu0 %v681
        %2183 = vmatprep.subr.mxu0 0.0
        %2184 = vmatpush1.msra.mxu0 %v680
        %2185 = vmatprep.subr.mxu0 0.0
        %2186 = vmatpush1.msra.mxu0 %v679
        %2187 = vmatprep.subr.mxu0 0.0
        %2188 = vmatpush1.msra.mxu0 %v678
        %2189 = vmatprep.subr.mxu0 0.0
        %2190 = vmatpush1.msra.mxu0 %v677
        %2191 = vmatprep.subr.mxu0 0.0
        %2192 = vmatpush1.msra.mxu0 %v676
        %2193 = vmatprep.subr.mxu0 0.0
        %2194 = vmatpush1.msra.mxu0 %v675
        %2195 = vmatprep.subr.mxu0 0.0
        %2196 = vmatpush1.msra.mxu0 %v674
        %2197 = vmatprep.subr.mxu0 0.0
        %2198 = vmatpush1.msra.mxu0 %v673
        %2199 = vmatprep.subr.mxu0 0.0
        %2200 = vmatpush1.msra.mxu0 %v672
        %2201 = vmatprep.subr.mxu0 0.0
        %2202 = vmatpush2.msra.mxu0 0.0
        %2203 = vmatprep.subr.mxu0 0.0
        %2204 = vmatpush2.msra.mxu0 0.0
        %2205 = vmatprep.subr.mxu0 0.0
        %2206 = vmatpush2.msra.mxu0 0.0
        %2207 = vmatprep.subr.mxu0 0.0
        %2208 = vmatpush2.msra.mxu0 0.0
        %2209 = vmatprep.subr.mxu0 0.0
        %2210 = vmatpush2.msra.mxu0 0.0
        %2211 = vmatprep.subr.mxu0 0.0
        %2212 = vmatpush2.msra.mxu0 0.0
        %2213 = vmatprep.subr.mxu0 0.0
        %2214 = vmatpush2.msra.mxu0 0.0
        %2215 = vmatprep.subr.mxu0 0.0
        %2216 = vmatpush2.msra.mxu0 0.0
        %2217 = vmatprep.subr.mxu0 0.0
        %2218 = vmatpush2.msra.mxu0 0.0
        %2219 = vmatprep.subr.mxu0 0.0
        %2220 = vmatpush2.msra.mxu0 0.0
        %2221 = vmatprep.subr.mxu0 0.0
        %2222 = vmatpush2.msra.mxu0 0.0
        %2223 = vmatprep.subr.mxu0 0.0
        %2224 = vmatpush2.msra.mxu0 0.0
        %2225 = vmatprep.subr.mxu0 0.0
        %2226 = vmatpush2.msra.mxu0 0.0
        %2227 = vmatprep.subr.mxu0 0.0
        %2228 = vmatpush2.msra.mxu0 0.0
        %2229 = vmatprep.subr.mxu0 0.0
        %2230 = vmatpush2.msra.mxu0 0.0
        %2231 = vmatprep.subr.mxu0 0.0
        %2232 = vmatpush2.msra.mxu0 0.0
        %2233 = vmatprep.mubr.f32.mxu0 0.0
        %2234 = vmatmul.mubr.f32.gmra.mxu0 %v2167
        %v2235 = vpop.f32.mrf.mxu0
        %v2236 = vadd.f32 0.0, %v2235
        %v2237 = vpop.f32.mrf.mxu0
        %2238 = vdwg.mxu0
        %v2239 = vadd.f32 %v2160, %v2236
        %2240 = vmatprep.subr.mxu0 0.0
        %2241 = vmatpush1.msra.mxu0 %v720
        %2242 = vmatprep.subr.mxu0 0.0
        %2243 = vmatpush1.msra.mxu0 %v719
        %2244 = vmatprep.subr.mxu0 0.0
        %2245 = vmatpush1.msra.mxu0 %v718
        %2246 = vmatprep.subr.mxu0 0.0
        %2247 = vmatpush1.msra.mxu0 %v717
        %2248 = vmatprep.subr.mxu0 0.0
        %2249 = vmatpush1.msra.mxu0 %v716
        %2250 = vmatprep.subr.mxu0 0.0
        %2251 = vmatpush1.msra.mxu0 %v715
        %2252 = vmatprep.subr.mxu0 0.0
        %2253 = vmatpush1.msra.mxu0 %v714
        %2254 = vmatprep.subr.mxu0 0.0
        %2255 = vmatpush1.msra.mxu0 %v713
        %2256 = vmatprep.subr.mxu0 0.0
        %2257 = vmatpush1.msra.mxu0 %v712
        %2258 = vmatprep.subr.mxu0 0.0
        %2259 = vmatpush1.msra.mxu0 %v711
        %2260 = vmatprep.subr.mxu0 0.0
        %2261 = vmatpush1.msra.mxu0 %v710
        %2262 = vmatprep.subr.mxu0 0.0
        %2263 = vmatpush1.msra.mxu0 %v709
        %2264 = vmatprep.subr.mxu0 0.0
        %2265 = vmatpush1.msra.mxu0 %v708
        %2266 = vmatprep.subr.mxu0 0.0
        %2267 = vmatpush1.msra.mxu0 %v707
        %2268 = vmatprep.subr.mxu0 0.0
        %2269 = vmatpush1.msra.mxu0 %v706
        %2270 = vmatprep.subr.mxu0 0.0
        %2271 = vmatpush1.msra.mxu0 %v705
        %2272 = vmatprep.subr.mxu0 0.0
        %2273 = vmatpush2.msra.mxu0 0.0
        %2274 = vmatprep.subr.mxu0 0.0
        %2275 = vmatpush2.msra.mxu0 0.0
        %2276 = vmatprep.subr.mxu0 0.0
        %2277 = vmatpush2.msra.mxu0 0.0
        %2278 = vmatprep.subr.mxu0 0.0
        %2279 = vmatpush2.msra.mxu0 0.0
        %2280 = vmatprep.subr.mxu0 0.0
        %2281 = vmatpush2.msra.mxu0 0.0
        %2282 = vmatprep.subr.mxu0 0.0
        %2283 = vmatpush2.msra.mxu0 0.0
        %2284 = vmatprep.subr.mxu0 0.0
        %2285 = vmatpush2.msra.mxu0 0.0
        %2286 = vmatprep.subr.mxu0 0.0
        %2287 = vmatpush2.msra.mxu0 0.0
        %2288 = vmatprep.subr.mxu0 0.0
        %2289 = vmatpush2.msra.mxu0 0.0
        %2290 = vmatprep.subr.mxu0 0.0
        %2291 = vmatpush2.msra.mxu0 0.0
        %2292 = vmatprep.subr.mxu0 0.0
        %2293 = vmatpush2.msra.mxu0 0.0
        %2294 = vmatprep.subr.mxu0 0.0
        %2295 = vmatpush2.msra.mxu0 0.0
        %2296 = vmatprep.subr.mxu0 0.0
        %2297 = vmatpush2.msra.mxu0 0.0
        %2298 = vmatprep.subr.mxu0 0.0
        %2299 = vmatpush2.msra.mxu0 0.0
        %2300 = vmatprep.subr.mxu0 0.0
        %2301 = vmatpush2.msra.mxu0 0.0
        %2302 = vmatprep.subr.mxu0 0.0
        %2303 = vmatpush2.msra.mxu0 0.0
        %2304 = vmatprep.mubr.f32.mxu0 0.0
        %2305 = vmatmul.mubr.f32.gmra.mxu0 %v1739
        %v2306 = vpop.f32.mrf.mxu0
        %v2307 = vadd.f32 0.0, %v2306
        %v2308 = vpop.f32.mrf.mxu0
        %2309 = vdwg.mxu0
        %2310 = vmatprep.subr.mxu0 0.0
        %2311 = vmatpush1.msra.mxu0 %v703
        %2312 = vmatprep.subr.mxu0 0.0
        %2313 = vmatpush1.msra.mxu0 %v702
        %2314 = vmatprep.subr.mxu0 0.0
        %2315 = vmatpush1.msra.mxu0 %v701
        %2316 = vmatprep.subr.mxu0 0.0
        %2317 = vmatpush1.msra.mxu0 %v700
        %2318 = vmatprep.subr.mxu0 0.0
        %2319 = vmatpush1.msra.mxu0 %v699
        %2320 = vmatprep.subr.mxu0 0.0
        %2321 = vmatpush1.msra.mxu0 %v698
        %2322 = vmatprep.subr.mxu0 0.0
        %2323 = vmatpush1.msra.mxu0 %v697
        %2324 = vmatprep.subr.mxu0 0.0
        %2325 = vmatpush1.msra.mxu0 %v696
        %2326 = vmatprep.subr.mxu0 0.0
        %2327 = vmatpush1.msra.mxu0 %v695
        %2328 = vmatprep.subr.mxu0 0.0
        %2329 = vmatpush1.msra.mxu0 %v694
        %2330 = vmatprep.subr.mxu0 0.0
        %2331 = vmatpush1.msra.mxu0 %v693
        %2332 = vmatprep.subr.mxu0 0.0
        %2333 = vmatpush1.msra.mxu0 %v692
        %2334 = vmatprep.subr.mxu0 0.0
        %2335 = vmatpush1.msra.mxu0 %v691
        %2336 = vmatprep.subr.mxu0 0.0
        %2337 = vmatpush1.msra.mxu0 %v690
        %2338 = vmatprep.subr.mxu0 0.0
        %2339 = vmatpush1.msra.mxu0 %v689
        %2340 = vmatprep.subr.mxu0 0.0
        %2341 = vmatpush1.msra.mxu0 %v688
        %2342 = vmatprep.subr.mxu0 0.0
        %2343 = vmatpush2.msra.mxu0 0.0
        %2344 = vmatprep.subr.mxu0 0.0
        %2345 = vmatpush2.msra.mxu0 0.0
        %2346 = vmatprep.subr.mxu0 0.0
        %2347 = vmatpush2.msra.mxu0 0.0
        %2348 = vmatprep.subr.mxu0 0.0
        %2349 = vmatpush2.msra.mxu0 0.0
        %2350 = vmatprep.subr.mxu0 0.0
        %2351 = vmatpush2.msra.mxu0 0.0
        %2352 = vmatprep.subr.mxu0 0.0
        %2353 = vmatpush2.msra.mxu0 0.0
        %2354 = vmatprep.subr.mxu0 0.0
        %2355 = vmatpush2.msra.mxu0 0.0
        %2356 = vmatprep.subr.mxu0 0.0
        %2357 = vmatpush2.msra.mxu0 0.0
        %2358 = vmatprep.subr.mxu0 0.0
        %2359 = vmatpush2.msra.mxu0 0.0
        %2360 = vmatprep.subr.mxu0 0.0
        %2361 = vmatpush2.msra.mxu0 0.0
        %2362 = vmatprep.subr.mxu0 0.0
        %2363 = vmatpush2.msra.mxu0 0.0
        %2364 = vmatprep.subr.mxu0 0.0
        %2365 = vmatpush2.msra.mxu0 0.0
        %2366 = vmatprep.subr.mxu0 0.0
        %2367 = vmatpush2.msra.mxu0 0.0
        %2368 = vmatprep.subr.mxu0 0.0
        %2369 = vmatpush2.msra.mxu0 0.0
        %2370 = vmatprep.subr.mxu0 0.0
        %2371 = vmatpush2.msra.mxu0 0.0
        %2372 = vmatprep.subr.mxu0 0.0
        %2373 = vmatpush2.msra.mxu0 0.0
        %2374 = vmatprep.mubr.f32.mxu0 0.0
        %2375 = vmatmul.mubr.f32.gmra.mxu0 %v637
        %v2376 = vpop.f32.mrf.mxu0
        %v2377 = vadd.f32 %v2307, %v2376
        %v2378 = vpop.f32.mrf.mxu0
        %2379 = vdwg.mxu0
        %2380 = vmatprep.subr.mxu0 0.0
        %2381 = vmatpush1.msra.mxu0 %v737
        %2382 = vmatprep.subr.mxu0 0.0
        %2383 = vmatpush1.msra.mxu0 %v736
        %2384 = vmatprep.subr.mxu0 0.0
        %2385 = vmatpush1.msra.mxu0 %v735
        %2386 = vmatprep.subr.mxu0 0.0
        %2387 = vmatpush1.msra.mxu0 %v734
        %2388 = vmatprep.subr.mxu0 0.0
        %2389 = vmatpush1.msra.mxu0 %v733
        %2390 = vmatprep.subr.mxu0 0.0
        %2391 = vmatpush1.msra.mxu0 %v732
        %2392 = vmatprep.subr.mxu0 0.0
        %2393 = vmatpush1.msra.mxu0 %v731
        %2394 = vmatprep.subr.mxu0 0.0
        %2395 = vmatpush1.msra.mxu0 %v730
        %2396 = vmatprep.subr.mxu0 0.0
        %2397 = vmatpush1.msra.mxu0 %v729
        %2398 = vmatprep.subr.mxu0 0.0
        %2399 = vmatpush1.msra.mxu0 %v728
        %2400 = vmatprep.subr.mxu0 0.0
        %2401 = vmatpush1.msra.mxu0 %v727
        %2402 = vmatprep.subr.mxu0 0.0
        %2403 = vmatpush1.msra.mxu0 %v726
        %2404 = vmatprep.subr.mxu0 0.0
        %2405 = vmatpush1.msra.mxu0 %v725
        %2406 = vmatprep.subr.mxu0 0.0
        %2407 = vmatpush1.msra.mxu0 %v724
        %2408 = vmatprep.subr.mxu0 0.0
        %2409 = vmatpush1.msra.mxu0 %v723
        %2410 = vmatprep.subr.mxu0 0.0
        %2411 = vmatpush1.msra.mxu0 %v722
        %2412 = vmatprep.subr.mxu0 0.0
        %2413 = vmatpush2.msra.mxu0 0.0
        %2414 = vmatprep.subr.mxu0 0.0
        %2415 = vmatpush2.msra.mxu0 0.0
        %2416 = vmatprep.subr.mxu0 0.0
        %2417 = vmatpush2.msra.mxu0 0.0
        %2418 = vmatprep.subr.mxu0 0.0
        %2419 = vmatpush2.msra.mxu0 0.0
        %2420 = vmatprep.subr.mxu0 0.0
        %2421 = vmatpush2.msra.mxu0 0.0
        %2422 = vmatprep.subr.mxu0 0.0
        %2423 = vmatpush2.msra.mxu0 0.0
        %2424 = vmatprep.subr.mxu0 0.0
        %2425 = vmatpush2.msra.mxu0 0.0
        %2426 = vmatprep.subr.mxu0 0.0
        %2427 = vmatpush2.msra.mxu0 0.0
        %2428 = vmatprep.subr.mxu0 0.0
        %2429 = vmatpush2.msra.mxu0 0.0
        %2430 = vmatprep.subr.mxu0 0.0
        %2431 = vmatpush2.msra.mxu0 0.0
        %2432 = vmatprep.subr.mxu0 0.0
        %2433 = vmatpush2.msra.mxu0 0.0
        %2434 = vmatprep.subr.mxu0 0.0
        %2435 = vmatpush2.msra.mxu0 0.0
        %2436 = vmatprep.subr.mxu0 0.0
        %2437 = vmatpush2.msra.mxu0 0.0
        %2438 = vmatprep.subr.mxu0 0.0
        %2439 = vmatpush2.msra.mxu0 0.0
        %2440 = vmatprep.subr.mxu0 0.0
        %2441 = vmatpush2.msra.mxu0 0.0
        %2442 = vmatprep.subr.mxu0 0.0
        %2443 = vmatpush2.msra.mxu0 0.0
        %2444 = vmatprep.mubr.f32.mxu0 0.0
        %2445 = vmatmul.mubr.f32.gmra.mxu0 %v2167
        %v2446 = vpop.f32.mrf.mxu0
        %v2447 = vadd.f32 0.0, %v2446
        %v2448 = vpop.f32.mrf.mxu0
        %2449 = vdwg.mxu0
        %v2450 = vadd.f32 %v2377, %v2447
        %v2451 = vmax.f32 %v1811, %v2022
        %v2452 = vmax.f32 %v2239, %v2450
        %v2453 = vmax.f32 %v2451, %v2452
        %v2454 = vadd.f32 %v2453, %v1590
        %v2455 = vmax.f32 %v2454, 0.0
        %v2457 = vrot.slane %v2455, 7
        %vm2459 = vcmask 1040384
        %v2460 = vsel %vm2459, 0.0, %v2457
        %v2462 = vrot.slane %v1593, 1
        %v2464 = vsel %vm1736, %v2462, 0.0
        %v2465 = vld [vmem:[#allocation2] sm:$0xff]
        %v2466 = vld [vmem:[#allocation2 + $0x8] sm:$0xff]
        %v2467 = vld [vmem:[#allocation2 + $0x10] sm:$0xff]
        %v2468 = vld [vmem:[#allocation2 + $0x18] sm:$0xff]
        %v2469 = vld [vmem:[#allocation2 + $0x20] sm:$0xff]
        %v2470 = vld [vmem:[#allocation2 + $0x28] sm:$0xff]
        %v2471 = vld [vmem:[#allocation2 + $0x30] sm:$0xff]
        %v2472 = vld [vmem:[#allocation2 + $0x38] sm:$0xff]
        %v2473 = vld [vmem:[#allocation2 + $0x40] sm:$0xff]
        %v2474 = vld [vmem:[#allocation2 + $0x48] sm:$0xff]
        %v2475 = vld [vmem:[#allocation2 + $0x50] sm:$0xff]
        %v2476 = vld [vmem:[#allocation2 + $0x58] sm:$0xff]
        %v2477 = vld [vmem:[#allocation2 + $0x60] sm:$0xff]
        %v2478 = vld [vmem:[#allocation2 + $0x68] sm:$0xff]
        %v2479 = vld [vmem:[#allocation2 + $0x70] sm:$0xff]
        %v2480 = vld [vmem:[#allocation2 + $0x78] sm:$0xff]
        %s2481 = scalar_lea.vmem [#allocation2], 128
        %v2482 = vld [vmem:[%s2481] sm:$0xff]
        %v2483 = vld [vmem:[%s2481 + $0x8] sm:$0xff]
        %v2484 = vld [vmem:[%s2481 + $0x10] sm:$0xff]
        %v2485 = vld [vmem:[%s2481 + $0x18] sm:$0xff]
        %v2486 = vld [vmem:[%s2481 + $0x20] sm:$0xff]
        %v2487 = vld [vmem:[%s2481 + $0x28] sm:$0xff]
        %v2488 = vld [vmem:[%s2481 + $0x30] sm:$0xff]
        %v2489 = vld [vmem:[%s2481 + $0x38] sm:$0xff]
        %v2490 = vld [vmem:[%s2481 + $0x40] sm:$0xff]
        %v2491 = vld [vmem:[%s2481 + $0x48] sm:$0xff]
        %v2492 = vld [vmem:[%s2481 + $0x50] sm:$0xff]
        %v2493 = vld [vmem:[%s2481 + $0x58] sm:$0xff]
        %v2494 = vld [vmem:[%s2481 + $0x60] sm:$0xff]
        %v2495 = vld [vmem:[%s2481 + $0x68] sm:$0xff]
        %v2496 = vld [vmem:[%s2481 + $0x70] sm:$0xff]
        %v2497 = vld [vmem:[%s2481 + $0x78] sm:$0xff]
        %s2498 = scalar_lea.vmem [#allocation2], 256
        %v2499 = vld [vmem:[%s2498] sm:$0xff]
        %v2500 = vld [vmem:[%s2498 + $0x8] sm:$0xff]
        %v2501 = vld [vmem:[%s2498 + $0x10] sm:$0xff]
        %v2502 = vld [vmem:[%s2498 + $0x18] sm:$0xff]
        %v2503 = vld [vmem:[%s2498 + $0x20] sm:$0xff]
        %v2504 = vld [vmem:[%s2498 + $0x28] sm:$0xff]
        %v2505 = vld [vmem:[%s2498 + $0x30] sm:$0xff]
        %v2506 = vld [vmem:[%s2498 + $0x38] sm:$0xff]
        %v2507 = vld [vmem:[%s2498 + $0x40] sm:$0xff]
        %v2508 = vld [vmem:[%s2498 + $0x48] sm:$0xff]
        %v2509 = vld [vmem:[%s2498 + $0x50] sm:$0xff]
        %v2510 = vld [vmem:[%s2498 + $0x58] sm:$0xff]
        %v2511 = vld [vmem:[%s2498 + $0x60] sm:$0xff]
        %v2512 = vld [vmem:[%s2498 + $0x68] sm:$0xff]
        %v2513 = vld [vmem:[%s2498 + $0x70] sm:$0xff]
        %v2514 = vld [vmem:[%s2498 + $0x78] sm:$0xff]
        %v2515 = vld [vmem:[#allocation5] sm:$0xff]
        %v2516 = vld [vmem:[#allocation5 + $0x8] sm:$0xff]
        %v2517 = vld [vmem:[#allocation5 + $0x10] sm:$0xff]
        %v2518 = vld [vmem:[#allocation5 + $0x18] sm:$0xff]
        %v2519 = vld [vmem:[#allocation5 + $0x20] sm:$0xff]
        %v2520 = vld [vmem:[#allocation5 + $0x28] sm:$0xff]
        %v2521 = vld [vmem:[#allocation5 + $0x30] sm:$0xff]
        %v2522 = vld [vmem:[#allocation5 + $0x38] sm:$0xff]
        %v2523 = vld [vmem:[#allocation5 + $0x40] sm:$0xff]
        %v2524 = vld [vmem:[#allocation5 + $0x48] sm:$0xff]
        %v2525 = vld [vmem:[#allocation5 + $0x50] sm:$0xff]
        %v2526 = vld [vmem:[#allocation5 + $0x58] sm:$0xff]
        %v2527 = vld [vmem:[#allocation5 + $0x60] sm:$0xff]
        %v2528 = vld [vmem:[#allocation5 + $0x68] sm:$0xff]
        %v2529 = vld [vmem:[#allocation5 + $0x70] sm:$0xff]
        %v2530 = vld [vmem:[#allocation5 + $0x78] sm:$0xff]
        %s2531 = scalar_lea.vmem [#allocation5], 128
        %v2532 = vld [vmem:[%s2531] sm:$0xff]
        %v2533 = vld [vmem:[%s2531 + $0x8] sm:$0xff]
        %v2534 = vld [vmem:[%s2531 + $0x10] sm:$0xff]
        %v2535 = vld [vmem:[%s2531 + $0x18] sm:$0xff]
        %v2536 = vld [vmem:[%s2531 + $0x20] sm:$0xff]
        %v2537 = vld [vmem:[%s2531 + $0x28] sm:$0xff]
        %v2538 = vld [vmem:[%s2531 + $0x30] sm:$0xff]
        %v2539 = vld [vmem:[%s2531 + $0x38] sm:$0xff]
        %v2540 = vld [vmem:[%s2531 + $0x40] sm:$0xff]
        %v2541 = vld [vmem:[%s2531 + $0x48] sm:$0xff]
        %v2542 = vld [vmem:[%s2531 + $0x50] sm:$0xff]
        %v2543 = vld [vmem:[%s2531 + $0x58] sm:$0xff]
        %v2544 = vld [vmem:[%s2531 + $0x60] sm:$0xff]
        %v2545 = vld [vmem:[%s2531 + $0x68] sm:$0xff]
        %v2546 = vld [vmem:[%s2531 + $0x70] sm:$0xff]
        %v2547 = vld [vmem:[%s2531 + $0x78] sm:$0xff]
        %s2548 = scalar_lea.vmem [#allocation5], 256
        %v2549 = vld [vmem:[%s2548] sm:$0xff]
        %v2550 = vld [vmem:[%s2548 + $0x8] sm:$0xff]
        %v2551 = vld [vmem:[%s2548 + $0x10] sm:$0xff]
        %v2552 = vld [vmem:[%s2548 + $0x18] sm:$0xff]
        %v2553 = vld [vmem:[%s2548 + $0x20] sm:$0xff]
        %v2554 = vld [vmem:[%s2548 + $0x28] sm:$0xff]
        %v2555 = vld [vmem:[%s2548 + $0x30] sm:$0xff]
        %v2556 = vld [vmem:[%s2548 + $0x38] sm:$0xff]
        %v2557 = vld [vmem:[%s2548 + $0x40] sm:$0xff]
        %v2558 = vld [vmem:[%s2548 + $0x48] sm:$0xff]
        %v2559 = vld [vmem:[%s2548 + $0x50] sm:$0xff]
        %v2560 = vld [vmem:[%s2548 + $0x58] sm:$0xff]
        %v2561 = vld [vmem:[%s2548 + $0x60] sm:$0xff]
        %v2562 = vld [vmem:[%s2548 + $0x68] sm:$0xff]
        %v2563 = vld [vmem:[%s2548 + $0x70] sm:$0xff]
        %v2564 = vld [vmem:[%s2548 + $0x78] sm:$0xff]
        %2565 = vmatprep.subr.mxu0 0.0
        %2566 = vmatpush1.msra.mxu0 %v2497
        %2567 = vmatprep.subr.mxu0 0.0
        %2568 = vmatpush1.msra.mxu0 %v2496
        %2569 = vmatprep.subr.mxu0 0.0
        %2570 = vmatpush1.msra.mxu0 %v2495
        %2571 = vmatprep.subr.mxu0 0.0
        %2572 = vmatpush1.msra.mxu0 %v2494
        %2573 = vmatprep.subr.mxu0 0.0
        %2574 = vmatpush1.msra.mxu0 %v2493
        %2575 = vmatprep.subr.mxu0 0.0
        %2576 = vmatpush1.msra.mxu0 %v2492
        %2577 = vmatprep.subr.mxu0 0.0
        %2578 = vmatpush1.msra.mxu0 %v2491
        %2579 = vmatprep.subr.mxu0 0.0
        %2580 = vmatpush1.msra.mxu0 %v2490
        %2581 = vmatprep.subr.mxu0 0.0
        %2582 = vmatpush1.msra.mxu0 %v2489
        %2583 = vmatprep.subr.mxu0 0.0
        %2584 = vmatpush1.msra.mxu0 %v2488
        %2585 = vmatprep.subr.mxu0 0.0
        %2586 = vmatpush1.msra.mxu0 %v2487
        %2587 = vmatprep.subr.mxu0 0.0
        %2588 = vmatpush1.msra.mxu0 %v2486
        %2589 = vmatprep.subr.mxu0 0.0
        %2590 = vmatpush1.msra.mxu0 %v2485
        %2591 = vmatprep.subr.mxu0 0.0
        %2592 = vmatpush1.msra.mxu0 %v2484
        %2593 = vmatprep.subr.mxu0 0.0
        %2594 = vmatpush1.msra.mxu0 %v2483
        %2595 = vmatprep.subr.mxu0 0.0
        %2596 = vmatpush1.msra.mxu0 %v2482
        %2597 = vmatprep.subr.mxu0 0.0
        %2598 = vmatpush2.msra.mxu0 0.0
        %2599 = vmatprep.subr.mxu0 0.0
        %2600 = vmatpush2.msra.mxu0 0.0
        %2601 = vmatprep.subr.mxu0 0.0
        %2602 = vmatpush2.msra.mxu0 0.0
        %2603 = vmatprep.subr.mxu0 0.0
        %2604 = vmatpush2.msra.mxu0 0.0
        %2605 = vmatprep.subr.mxu0 0.0
        %2606 = vmatpush2.msra.mxu0 0.0
        %2607 = vmatprep.subr.mxu0 0.0
        %2608 = vmatpush2.msra.mxu0 0.0
        %2609 = vmatprep.subr.mxu0 0.0
        %2610 = vmatpush2.msra.mxu0 0.0
        %2611 = vmatprep.subr.mxu0 0.0
        %2612 = vmatpush2.msra.mxu0 0.0
        %2613 = vmatprep.subr.mxu0 0.0
        %2614 = vmatpush2.msra.mxu0 0.0
        %2615 = vmatprep.subr.mxu0 0.0
        %2616 = vmatpush2.msra.mxu0 0.0
        %2617 = vmatprep.subr.mxu0 0.0
        %2618 = vmatpush2.msra.mxu0 0.0
        %2619 = vmatprep.subr.mxu0 0.0
        %2620 = vmatpush2.msra.mxu0 0.0
        %2621 = vmatprep.subr.mxu0 0.0
        %2622 = vmatpush2.msra.mxu0 0.0
        %2623 = vmatprep.subr.mxu0 0.0
        %2624 = vmatpush2.msra.mxu0 0.0
        %2625 = vmatprep.subr.mxu0 0.0
        %2626 = vmatpush2.msra.mxu0 0.0
        %2627 = vmatprep.subr.mxu0 0.0
        %2628 = vmatpush2.msra.mxu0 0.0
        %2629 = vmatprep.mubr.f32.mxu0 0.0
        %2630 = vmatmul.mubr.f32.gmra.mxu0 %v1593
        %v2631 = vpop.f32.mrf.mxu0
        %v2632 = vadd.f32 0.0, %v2631
        %v2633 = vpop.f32.mrf.mxu0
        %2634 = vdwg.mxu0
        %2635 = vmatprep.subr.mxu0 0.0
        %2636 = vmatpush1.msra.mxu0 %v2480
        %2637 = vmatprep.subr.mxu0 0.0
        %2638 = vmatpush1.msra.mxu0 %v2479
        %2639 = vmatprep.subr.mxu0 0.0
        %2640 = vmatpush1.msra.mxu0 %v2478
        %2641 = vmatprep.subr.mxu0 0.0
        %2642 = vmatpush1.msra.mxu0 %v2477
        %2643 = vmatprep.subr.mxu0 0.0
        %2644 = vmatpush1.msra.mxu0 %v2476
        %2645 = vmatprep.subr.mxu0 0.0
        %2646 = vmatpush1.msra.mxu0 %v2475
        %2647 = vmatprep.subr.mxu0 0.0
        %2648 = vmatpush1.msra.mxu0 %v2474
        %2649 = vmatprep.subr.mxu0 0.0
        %2650 = vmatpush1.msra.mxu0 %v2473
        %2651 = vmatprep.subr.mxu0 0.0
        %2652 = vmatpush1.msra.mxu0 %v2472
        %2653 = vmatprep.subr.mxu0 0.0
        %2654 = vmatpush1.msra.mxu0 %v2471
        %2655 = vmatprep.subr.mxu0 0.0
        %2656 = vmatpush1.msra.mxu0 %v2470
        %2657 = vmatprep.subr.mxu0 0.0
        %2658 = vmatpush1.msra.mxu0 %v2469
        %2659 = vmatprep.subr.mxu0 0.0
        %2660 = vmatpush1.msra.mxu0 %v2468
        %2661 = vmatprep.subr.mxu0 0.0
        %2662 = vmatpush1.msra.mxu0 %v2467
        %2663 = vmatprep.subr.mxu0 0.0
        %2664 = vmatpush1.msra.mxu0 %v2466
        %2665 = vmatprep.subr.mxu0 0.0
        %2666 = vmatpush1.msra.mxu0 %v2465
        %2667 = vmatprep.subr.mxu0 0.0
        %2668 = vmatpush2.msra.mxu0 0.0
        %2669 = vmatprep.subr.mxu0 0.0
        %2670 = vmatpush2.msra.mxu0 0.0
        %2671 = vmatprep.subr.mxu0 0.0
        %2672 = vmatpush2.msra.mxu0 0.0
        %2673 = vmatprep.subr.mxu0 0.0
        %2674 = vmatpush2.msra.mxu0 0.0
        %2675 = vmatprep.subr.mxu0 0.0
        %2676 = vmatpush2.msra.mxu0 0.0
        %2677 = vmatprep.subr.mxu0 0.0
        %2678 = vmatpush2.msra.mxu0 0.0
        %2679 = vmatprep.subr.mxu0 0.0
        %2680 = vmatpush2.msra.mxu0 0.0
        %2681 = vmatprep.subr.mxu0 0.0
        %2682 = vmatpush2.msra.mxu0 0.0
        %2683 = vmatprep.subr.mxu0 0.0
        %2684 = vmatpush2.msra.mxu0 0.0
        %2685 = vmatprep.subr.mxu0 0.0
        %2686 = vmatpush2.msra.mxu0 0.0
        %2687 = vmatprep.subr.mxu0 0.0
        %2688 = vmatpush2.msra.mxu0 0.0
        %2689 = vmatprep.subr.mxu0 0.0
        %2690 = vmatpush2.msra.mxu0 0.0
        %2691 = vmatprep.subr.mxu0 0.0
        %2692 = vmatpush2.msra.mxu0 0.0
        %2693 = vmatprep.subr.mxu0 0.0
        %2694 = vmatpush2.msra.mxu0 0.0
        %2695 = vmatprep.subr.mxu0 0.0
        %2696 = vmatpush2.msra.mxu0 0.0
        %2697 = vmatprep.subr.mxu0 0.0
        %2698 = vmatpush2.msra.mxu0 0.0
        %2699 = vmatprep.mubr.f32.mxu0 0.0
        %2700 = vmatmul.mubr.f32.gmra.mxu0 %v2460
        %v2701 = vpop.f32.mrf.mxu0
        %v2702 = vadd.f32 %v2632, %v2701
        %v2703 = vpop.f32.mrf.mxu0
        %2704 = vdwg.mxu0
        %2705 = vmatprep.subr.mxu0 0.0
        %2706 = vmatpush1.msra.mxu0 %v2514
        %2707 = vmatprep.subr.mxu0 0.0
        %2708 = vmatpush1.msra.mxu0 %v2513
        %2709 = vmatprep.subr.mxu0 0.0
        %2710 = vmatpush1.msra.mxu0 %v2512
        %2711 = vmatprep.subr.mxu0 0.0
        %2712 = vmatpush1.msra.mxu0 %v2511
        %2713 = vmatprep.subr.mxu0 0.0
        %2714 = vmatpush1.msra.mxu0 %v2510
        %2715 = vmatprep.subr.mxu0 0.0
        %2716 = vmatpush1.msra.mxu0 %v2509
        %2717 = vmatprep.subr.mxu0 0.0
        %2718 = vmatpush1.msra.mxu0 %v2508
        %2719 = vmatprep.subr.mxu0 0.0
        %2720 = vmatpush1.msra.mxu0 %v2507
        %2721 = vmatprep.subr.mxu0 0.0
        %2722 = vmatpush1.msra.mxu0 %v2506
        %2723 = vmatprep.subr.mxu0 0.0
        %2724 = vmatpush1.msra.mxu0 %v2505
        %2725 = vmatprep.subr.mxu0 0.0
        %2726 = vmatpush1.msra.mxu0 %v2504
        %2727 = vmatprep.subr.mxu0 0.0
        %2728 = vmatpush1.msra.mxu0 %v2503
        %2729 = vmatprep.subr.mxu0 0.0
        %2730 = vmatpush1.msra.mxu0 %v2502
        %2731 = vmatprep.subr.mxu0 0.0
        %2732 = vmatpush1.msra.mxu0 %v2501
        %2733 = vmatprep.subr.mxu0 0.0
        %2734 = vmatpush1.msra.mxu0 %v2500
        %2735 = vmatprep.subr.mxu0 0.0
        %2736 = vmatpush1.msra.mxu0 %v2499
        %2737 = vmatprep.subr.mxu0 0.0
        %2738 = vmatpush2.msra.mxu0 0.0
        %2739 = vmatprep.subr.mxu0 0.0
        %2740 = vmatpush2.msra.mxu0 0.0
        %2741 = vmatprep.subr.mxu0 0.0
        %2742 = vmatpush2.msra.mxu0 0.0
        %2743 = vmatprep.subr.mxu0 0.0
        %2744 = vmatpush2.msra.mxu0 0.0
        %2745 = vmatprep.subr.mxu0 0.0
        %2746 = vmatpush2.msra.mxu0 0.0
        %2747 = vmatprep.subr.mxu0 0.0
        %2748 = vmatpush2.msra.mxu0 0.0
        %2749 = vmatprep.subr.mxu0 0.0
        %2750 = vmatpush2.msra.mxu0 0.0
        %2751 = vmatprep.subr.mxu0 0.0
        %2752 = vmatpush2.msra.mxu0 0.0
        %2753 = vmatprep.subr.mxu0 0.0
        %2754 = vmatpush2.msra.mxu0 0.0
        %2755 = vmatprep.subr.mxu0 0.0
        %2756 = vmatpush2.msra.mxu0 0.0
        %2757 = vmatprep.subr.mxu0 0.0
        %2758 = vmatpush2.msra.mxu0 0.0
        %2759 = vmatprep.subr.mxu0 0.0
        %2760 = vmatpush2.msra.mxu0 0.0
        %2761 = vmatprep.subr.mxu0 0.0
        %2762 = vmatpush2.msra.mxu0 0.0
        %2763 = vmatprep.subr.mxu0 0.0
        %2764 = vmatpush2.msra.mxu0 0.0
        %2765 = vmatprep.subr.mxu0 0.0
        %2766 = vmatpush2.msra.mxu0 0.0
        %2767 = vmatprep.subr.mxu0 0.0
        %2768 = vmatpush2.msra.mxu0 0.0
        %2769 = vmatprep.mubr.f32.mxu0 0.0
        %2770 = vmatmul.mubr.f32.gmra.mxu0 %v2455
        %v2771 = vpop.f32.mrf.mxu0
        %v2772 = vadd.f32 0.0, %v2771
        %v2773 = vpop.f32.mrf.mxu0
        %2774 = vdwg.mxu0
        %v2775 = vadd.f32 %v2702, %v2772
        %2776 = vmatprep.subr.mxu0 0.0
        %2777 = vmatpush1.msra.mxu0 %v2547
        %2778 = vmatprep.subr.mxu0 0.0
        %2779 = vmatpush1.msra.mxu0 %v2546
        %2780 = vmatprep.subr.mxu0 0.0
        %2781 = vmatpush1.msra.mxu0 %v2545
        %2782 = vmatprep.subr.mxu0 0.0
        %2783 = vmatpush1.msra.mxu0 %v2544
        %2784 = vmatprep.subr.mxu0 0.0
        %2785 = vmatpush1.msra.mxu0 %v2543
        %2786 = vmatprep.subr.mxu0 0.0
        %2787 = vmatpush1.msra.mxu0 %v2542
        %2788 = vmatprep.subr.mxu0 0.0
        %2789 = vmatpush1.msra.mxu0 %v2541
        %2790 = vmatprep.subr.mxu0 0.0
        %2791 = vmatpush1.msra.mxu0 %v2540
        %2792 = vmatprep.subr.mxu0 0.0
        %2793 = vmatpush1.msra.mxu0 %v2539
        %2794 = vmatprep.subr.mxu0 0.0
        %2795 = vmatpush1.msra.mxu0 %v2538
        %2796 = vmatprep.subr.mxu0 0.0
        %2797 = vmatpush1.msra.mxu0 %v2537
        %2798 = vmatprep.subr.mxu0 0.0
        %2799 = vmatpush1.msra.mxu0 %v2536
        %2800 = vmatprep.subr.mxu0 0.0
        %2801 = vmatpush1.msra.mxu0 %v2535
        %2802 = vmatprep.subr.mxu0 0.0
        %2803 = vmatpush1.msra.mxu0 %v2534
        %2804 = vmatprep.subr.mxu0 0.0
        %2805 = vmatpush1.msra.mxu0 %v2533
        %2806 = vmatprep.subr.mxu0 0.0
        %2807 = vmatpush1.msra.mxu0 %v2532
        %2808 = vmatprep.subr.mxu0 0.0
        %2809 = vmatpush2.msra.mxu0 0.0
        %2810 = vmatprep.subr.mxu0 0.0
        %2811 = vmatpush2.msra.mxu0 0.0
        %2812 = vmatprep.subr.mxu0 0.0
        %2813 = vmatpush2.msra.mxu0 0.0
        %2814 = vmatprep.subr.mxu0 0.0
        %2815 = vmatpush2.msra.mxu0 0.0
        %2816 = vmatprep.subr.mxu0 0.0
        %2817 = vmatpush2.msra.mxu0 0.0
        %2818 = vmatprep.subr.mxu0 0.0
        %2819 = vmatpush2.msra.mxu0 0.0
        %2820 = vmatprep.subr.mxu0 0.0
        %2821 = vmatpush2.msra.mxu0 0.0
        %2822 = vmatprep.subr.mxu0 0.0
        %2823 = vmatpush2.msra.mxu0 0.0
        %2824 = vmatprep.subr.mxu0 0.0
        %2825 = vmatpush2.msra.mxu0 0.0
        %2826 = vmatprep.subr.mxu0 0.0
        %2827 = vmatpush2.msra.mxu0 0.0
        %2828 = vmatprep.subr.mxu0 0.0
        %2829 = vmatpush2.msra.mxu0 0.0
        %2830 = vmatprep.subr.mxu0 0.0
        %2831 = vmatpush2.msra.mxu0 0.0
        %2832 = vmatprep.subr.mxu0 0.0
        %2833 = vmatpush2.msra.mxu0 0.0
        %2834 = vmatprep.subr.mxu0 0.0
        %2835 = vmatpush2.msra.mxu0 0.0
        %2836 = vmatprep.subr.mxu0 0.0
        %2837 = vmatpush2.msra.mxu0 0.0
        %2838 = vmatprep.subr.mxu0 0.0
        %2839 = vmatpush2.msra.mxu0 0.0
        %2840 = vmatprep.mubr.f32.mxu0 0.0
        %2841 = vmatmul.mubr.f32.gmra.mxu0 %v1593
        %v2842 = vpop.f32.mrf.mxu0
        %v2843 = vadd.f32 0.0, %v2842
        %v2844 = vpop.f32.mrf.mxu0
        %2845 = vdwg.mxu0
        %2846 = vmatprep.subr.mxu0 0.0
        %2847 = vmatpush1.msra.mxu0 %v2530
        %2848 = vmatprep.subr.mxu0 0.0
        %2849 = vmatpush1.msra.mxu0 %v2529
        %2850 = vmatprep.subr.mxu0 0.0
        %2851 = vmatpush1.msra.mxu0 %v2528
        %2852 = vmatprep.subr.mxu0 0.0
        %2853 = vmatpush1.msra.mxu0 %v2527
        %2854 = vmatprep.subr.mxu0 0.0
        %2855 = vmatpush1.msra.mxu0 %v2526
        %2856 = vmatprep.subr.mxu0 0.0
        %2857 = vmatpush1.msra.mxu0 %v2525
        %2858 = vmatprep.subr.mxu0 0.0
        %2859 = vmatpush1.msra.mxu0 %v2524
        %2860 = vmatprep.subr.mxu0 0.0
        %2861 = vmatpush1.msra.mxu0 %v2523
        %2862 = vmatprep.subr.mxu0 0.0
        %2863 = vmatpush1.msra.mxu0 %v2522
        %2864 = vmatprep.subr.mxu0 0.0
        %2865 = vmatpush1.msra.mxu0 %v2521
        %2866 = vmatprep.subr.mxu0 0.0
        %2867 = vmatpush1.msra.mxu0 %v2520
        %2868 = vmatprep.subr.mxu0 0.0
        %2869 = vmatpush1.msra.mxu0 %v2519
        %2870 = vmatprep.subr.mxu0 0.0
        %2871 = vmatpush1.msra.mxu0 %v2518
        %2872 = vmatprep.subr.mxu0 0.0
        %2873 = vmatpush1.msra.mxu0 %v2517
        %2874 = vmatprep.subr.mxu0 0.0
        %2875 = vmatpush1.msra.mxu0 %v2516
        %2876 = vmatprep.subr.mxu0 0.0
        %2877 = vmatpush1.msra.mxu0 %v2515
        %2878 = vmatprep.subr.mxu0 0.0
        %2879 = vmatpush2.msra.mxu0 0.0
        %2880 = vmatprep.subr.mxu0 0.0
        %2881 = vmatpush2.msra.mxu0 0.0
        %2882 = vmatprep.subr.mxu0 0.0
        %2883 = vmatpush2.msra.mxu0 0.0
        %2884 = vmatprep.subr.mxu0 0.0
        %2885 = vmatpush2.msra.mxu0 0.0
        %2886 = vmatprep.subr.mxu0 0.0
        %2887 = vmatpush2.msra.mxu0 0.0
        %2888 = vmatprep.subr.mxu0 0.0
        %2889 = vmatpush2.msra.mxu0 0.0
        %2890 = vmatprep.subr.mxu0 0.0
        %2891 = vmatpush2.msra.mxu0 0.0
        %2892 = vmatprep.subr.mxu0 0.0
        %2893 = vmatpush2.msra.mxu0 0.0
        %2894 = vmatprep.subr.mxu0 0.0
        %2895 = vmatpush2.msra.mxu0 0.0
        %2896 = vmatprep.subr.mxu0 0.0
        %2897 = vmatpush2.msra.mxu0 0.0
        %2898 = vmatprep.subr.mxu0 0.0
        %2899 = vmatpush2.msra.mxu0 0.0
        %2900 = vmatprep.subr.mxu0 0.0
        %2901 = vmatpush2.msra.mxu0 0.0
        %2902 = vmatprep.subr.mxu0 0.0
        %2903 = vmatpush2.msra.mxu0 0.0
        %2904 = vmatprep.subr.mxu0 0.0
        %2905 = vmatpush2.msra.mxu0 0.0
        %2906 = vmatprep.subr.mxu0 0.0
        %2907 = vmatpush2.msra.mxu0 0.0
        %2908 = vmatprep.subr.mxu0 0.0
        %2909 = vmatpush2.msra.mxu0 0.0
        %2910 = vmatprep.mubr.f32.mxu0 0.0
        %2911 = vmatmul.mubr.f32.gmra.mxu0 %v2460
        %v2912 = vpop.f32.mrf.mxu0
        %v2913 = vadd.f32 %v2843, %v2912
        %v2914 = vpop.f32.mrf.mxu0
        %2915 = vdwg.mxu0
        %2916 = vmatprep.subr.mxu0 0.0
        %2917 = vmatpush1.msra.mxu0 %v2564
        %2918 = vmatprep.subr.mxu0 0.0
        %2919 = vmatpush1.msra.mxu0 %v2563
        %2920 = vmatprep.subr.mxu0 0.0
        %2921 = vmatpush1.msra.mxu0 %v2562
        %2922 = vmatprep.subr.mxu0 0.0
        %2923 = vmatpush1.msra.mxu0 %v2561
        %2924 = vmatprep.subr.mxu0 0.0
        %2925 = vmatpush1.msra.mxu0 %v2560
        %2926 = vmatprep.subr.mxu0 0.0
        %2927 = vmatpush1.msra.mxu0 %v2559
        %2928 = vmatprep.subr.mxu0 0.0
        %2929 = vmatpush1.msra.mxu0 %v2558
        %2930 = vmatprep.subr.mxu0 0.0
        %2931 = vmatpush1.msra.mxu0 %v2557
        %2932 = vmatprep.subr.mxu0 0.0
        %2933 = vmatpush1.msra.mxu0 %v2556
        %2934 = vmatprep.subr.mxu0 0.0
        %2935 = vmatpush1.msra.mxu0 %v2555
        %2936 = vmatprep.subr.mxu0 0.0
        %2937 = vmatpush1.msra.mxu0 %v2554
        %2938 = vmatprep.subr.mxu0 0.0
        %2939 = vmatpush1.msra.mxu0 %v2553
        %2940 = vmatprep.subr.mxu0 0.0
        %2941 = vmatpush1.msra.mxu0 %v2552
        %2942 = vmatprep.subr.mxu0 0.0
        %2943 = vmatpush1.msra.mxu0 %v2551
        %2944 = vmatprep.subr.mxu0 0.0
        %2945 = vmatpush1.msra.mxu0 %v2550
        %2946 = vmatprep.subr.mxu0 0.0
        %2947 = vmatpush1.msra.mxu0 %v2549
        %2948 = vmatprep.subr.mxu0 0.0
        %2949 = vmatpush2.msra.mxu0 0.0
        %2950 = vmatprep.subr.mxu0 0.0
        %2951 = vmatpush2.msra.mxu0 0.0
        %2952 = vmatprep.subr.mxu0 0.0
        %2953 = vmatpush2.msra.mxu0 0.0
        %2954 = vmatprep.subr.mxu0 0.0
        %2955 = vmatpush2.msra.mxu0 0.0
        %2956 = vmatprep.subr.mxu0 0.0
        %2957 = vmatpush2.msra.mxu0 0.0
        %2958 = vmatprep.subr.mxu0 0.0
        %2959 = vmatpush2.msra.mxu0 0.0
        %2960 = vmatprep.subr.mxu0 0.0
        %2961 = vmatpush2.msra.mxu0 0.0
        %2962 = vmatprep.subr.mxu0 0.0
        %2963 = vmatpush2.msra.mxu0 0.0
        %2964 = vmatprep.subr.mxu0 0.0
        %2965 = vmatpush2.msra.mxu0 0.0
        %2966 = vmatprep.subr.mxu0 0.0
        %2967 = vmatpush2.msra.mxu0 0.0
        %2968 = vmatprep.subr.mxu0 0.0
        %2969 = vmatpush2.msra.mxu0 0.0
        %2970 = vmatprep.subr.mxu0 0.0
        %2971 = vmatpush2.msra.mxu0 0.0
        %2972 = vmatprep.subr.mxu0 0.0
        %2973 = vmatpush2.msra.mxu0 0.0
        %2974 = vmatprep.subr.mxu0 0.0
        %2975 = vmatpush2.msra.mxu0 0.0
        %2976 = vmatprep.subr.mxu0 0.0
        %2977 = vmatpush2.msra.mxu0 0.0
        %2978 = vmatprep.subr.mxu0 0.0
        %2979 = vmatpush2.msra.mxu0 0.0
        %2980 = vmatprep.mubr.f32.mxu0 0.0
        %2981 = vmatmul.mubr.f32.gmra.mxu0 %v2455
        %v2982 = vpop.f32.mrf.mxu0
        %v2983 = vadd.f32 0.0, %v2982
        %v2984 = vpop.f32.mrf.mxu0
        %2985 = vdwg.mxu0
        %v2986 = vadd.f32 %v2913, %v2983
        %2987 = vmatprep.subr.mxu0 0.0
        %2988 = vmatpush1.msra.mxu0 %v2497
        %2989 = vmatprep.subr.mxu0 0.0
        %2990 = vmatpush1.msra.mxu0 %v2496
        %2991 = vmatprep.subr.mxu0 0.0
        %2992 = vmatpush1.msra.mxu0 %v2495
        %2993 = vmatprep.subr.mxu0 0.0
        %2994 = vmatpush1.msra.mxu0 %v2494
        %2995 = vmatprep.subr.mxu0 0.0
        %2996 = vmatpush1.msra.mxu0 %v2493
        %2997 = vmatprep.subr.mxu0 0.0
        %2998 = vmatpush1.msra.mxu0 %v2492
        %2999 = vmatprep.subr.mxu0 0.0
        %3000 = vmatpush1.msra.mxu0 %v2491
        %3001 = vmatprep.subr.mxu0 0.0
        %3002 = vmatpush1.msra.mxu0 %v2490
        %3003 = vmatprep.subr.mxu0 0.0
        %3004 = vmatpush1.msra.mxu0 %v2489
        %3005 = vmatprep.subr.mxu0 0.0
        %3006 = vmatpush1.msra.mxu0 %v2488
        %3007 = vmatprep.subr.mxu0 0.0
        %3008 = vmatpush1.msra.mxu0 %v2487
        %3009 = vmatprep.subr.mxu0 0.0
        %3010 = vmatpush1.msra.mxu0 %v2486
        %3011 = vmatprep.subr.mxu0 0.0
        %3012 = vmatpush1.msra.mxu0 %v2485
        %3013 = vmatprep.subr.mxu0 0.0
        %3014 = vmatpush1.msra.mxu0 %v2484
        %3015 = vmatprep.subr.mxu0 0.0
        %3016 = vmatpush1.msra.mxu0 %v2483
        %3017 = vmatprep.subr.mxu0 0.0
        %3018 = vmatpush1.msra.mxu0 %v2482
        %3019 = vmatprep.subr.mxu0 0.0
        %3020 = vmatpush2.msra.mxu0 0.0
        %3021 = vmatprep.subr.mxu0 0.0
        %3022 = vmatpush2.msra.mxu0 0.0
        %3023 = vmatprep.subr.mxu0 0.0
        %3024 = vmatpush2.msra.mxu0 0.0
        %3025 = vmatprep.subr.mxu0 0.0
        %3026 = vmatpush2.msra.mxu0 0.0
        %3027 = vmatprep.subr.mxu0 0.0
        %3028 = vmatpush2.msra.mxu0 0.0
        %3029 = vmatprep.subr.mxu0 0.0
        %3030 = vmatpush2.msra.mxu0 0.0
        %3031 = vmatprep.subr.mxu0 0.0
        %3032 = vmatpush2.msra.mxu0 0.0
        %3033 = vmatprep.subr.mxu0 0.0
        %3034 = vmatpush2.msra.mxu0 0.0
        %3035 = vmatprep.subr.mxu0 0.0
        %3036 = vmatpush2.msra.mxu0 0.0
        %3037 = vmatprep.subr.mxu0 0.0
        %3038 = vmatpush2.msra.mxu0 0.0
        %3039 = vmatprep.subr.mxu0 0.0
        %3040 = vmatpush2.msra.mxu0 0.0
        %3041 = vmatprep.subr.mxu0 0.0
        %3042 = vmatpush2.msra.mxu0 0.0
        %3043 = vmatprep.subr.mxu0 0.0
        %3044 = vmatpush2.msra.mxu0 0.0
        %3045 = vmatprep.subr.mxu0 0.0
        %3046 = vmatpush2.msra.mxu0 0.0
        %3047 = vmatprep.subr.mxu0 0.0
        %3048 = vmatpush2.msra.mxu0 0.0
        %3049 = vmatprep.subr.mxu0 0.0
        %3050 = vmatpush2.msra.mxu0 0.0
        %3051 = vmatprep.mubr.f32.mxu0 0.0
        %3052 = vmatmul.mubr.f32.gmra.mxu0 %v2455
        %v3053 = vpop.f32.mrf.mxu0
        %v3054 = vadd.f32 0.0, %v3053
        %v3055 = vpop.f32.mrf.mxu0
        %3056 = vdwg.mxu0
        %3057 = vmatprep.subr.mxu0 0.0
        %3058 = vmatpush1.msra.mxu0 %v2480
        %3059 = vmatprep.subr.mxu0 0.0
        %3060 = vmatpush1.msra.mxu0 %v2479
        %3061 = vmatprep.subr.mxu0 0.0
        %3062 = vmatpush1.msra.mxu0 %v2478
        %3063 = vmatprep.subr.mxu0 0.0
        %3064 = vmatpush1.msra.mxu0 %v2477
        %3065 = vmatprep.subr.mxu0 0.0
        %3066 = vmatpush1.msra.mxu0 %v2476
        %3067 = vmatprep.subr.mxu0 0.0
        %3068 = vmatpush1.msra.mxu0 %v2475
        %3069 = vmatprep.subr.mxu0 0.0
        %3070 = vmatpush1.msra.mxu0 %v2474
        %3071 = vmatprep.subr.mxu0 0.0
        %3072 = vmatpush1.msra.mxu0 %v2473
        %3073 = vmatprep.subr.mxu0 0.0
        %3074 = vmatpush1.msra.mxu0 %v2472
        %3075 = vmatprep.subr.mxu0 0.0
        %3076 = vmatpush1.msra.mxu0 %v2471
        %3077 = vmatprep.subr.mxu0 0.0
        %3078 = vmatpush1.msra.mxu0 %v2470
        %3079 = vmatprep.subr.mxu0 0.0
        %3080 = vmatpush1.msra.mxu0 %v2469
        %3081 = vmatprep.subr.mxu0 0.0
        %3082 = vmatpush1.msra.mxu0 %v2468
        %3083 = vmatprep.subr.mxu0 0.0
        %3084 = vmatpush1.msra.mxu0 %v2467
        %3085 = vmatprep.subr.mxu0 0.0
        %3086 = vmatpush1.msra.mxu0 %v2466
        %3087 = vmatprep.subr.mxu0 0.0
        %3088 = vmatpush1.msra.mxu0 %v2465
        %3089 = vmatprep.subr.mxu0 0.0
        %3090 = vmatpush2.msra.mxu0 0.0
        %3091 = vmatprep.subr.mxu0 0.0
        %3092 = vmatpush2.msra.mxu0 0.0
        %3093 = vmatprep.subr.mxu0 0.0
        %3094 = vmatpush2.msra.mxu0 0.0
        %3095 = vmatprep.subr.mxu0 0.0
        %3096 = vmatpush2.msra.mxu0 0.0
        %3097 = vmatprep.subr.mxu0 0.0
        %3098 = vmatpush2.msra.mxu0 0.0
        %3099 = vmatprep.subr.mxu0 0.0
        %3100 = vmatpush2.msra.mxu0 0.0
        %3101 = vmatprep.subr.mxu0 0.0
        %3102 = vmatpush2.msra.mxu0 0.0
        %3103 = vmatprep.subr.mxu0 0.0
        %3104 = vmatpush2.msra.mxu0 0.0
        %3105 = vmatprep.subr.mxu0 0.0
        %3106 = vmatpush2.msra.mxu0 0.0
        %3107 = vmatprep.subr.mxu0 0.0
        %3108 = vmatpush2.msra.mxu0 0.0
        %3109 = vmatprep.subr.mxu0 0.0
        %3110 = vmatpush2.msra.mxu0 0.0
        %3111 = vmatprep.subr.mxu0 0.0
        %3112 = vmatpush2.msra.mxu0 0.0
        %3113 = vmatprep.subr.mxu0 0.0
        %3114 = vmatpush2.msra.mxu0 0.0
        %3115 = vmatprep.subr.mxu0 0.0
        %3116 = vmatpush2.msra.mxu0 0.0
        %3117 = vmatprep.subr.mxu0 0.0
        %3118 = vmatpush2.msra.mxu0 0.0
        %3119 = vmatprep.subr.mxu0 0.0
        %3120 = vmatpush2.msra.mxu0 0.0
        %3121 = vmatprep.mubr.f32.mxu0 0.0
        %3122 = vmatmul.mubr.f32.gmra.mxu0 %v1593
        %v3123 = vpop.f32.mrf.mxu0
        %v3124 = vadd.f32 %v3054, %v3123
        %v3125 = vpop.f32.mrf.mxu0
        %3126 = vdwg.mxu0
        %3127 = vmatprep.subr.mxu0 0.0
        %3128 = vmatpush1.msra.mxu0 %v2514
        %3129 = vmatprep.subr.mxu0 0.0
        %3130 = vmatpush1.msra.mxu0 %v2513
        %3131 = vmatprep.subr.mxu0 0.0
        %3132 = vmatpush1.msra.mxu0 %v2512
        %3133 = vmatprep.subr.mxu0 0.0
        %3134 = vmatpush1.msra.mxu0 %v2511
        %3135 = vmatprep.subr.mxu0 0.0
        %3136 = vmatpush1.msra.mxu0 %v2510
        %3137 = vmatprep.subr.mxu0 0.0
        %3138 = vmatpush1.msra.mxu0 %v2509
        %3139 = vmatprep.subr.mxu0 0.0
        %3140 = vmatpush1.msra.mxu0 %v2508
        %3141 = vmatprep.subr.mxu0 0.0
        %3142 = vmatpush1.msra.mxu0 %v2507
        %3143 = vmatprep.subr.mxu0 0.0
        %3144 = vmatpush1.msra.mxu0 %v2506
        %3145 = vmatprep.subr.mxu0 0.0
        %3146 = vmatpush1.msra.mxu0 %v2505
        %3147 = vmatprep.subr.mxu0 0.0
        %3148 = vmatpush1.msra.mxu0 %v2504
        %3149 = vmatprep.subr.mxu0 0.0
        %3150 = vmatpush1.msra.mxu0 %v2503
        %3151 = vmatprep.subr.mxu0 0.0
        %3152 = vmatpush1.msra.mxu0 %v2502
        %3153 = vmatprep.subr.mxu0 0.0
        %3154 = vmatpush1.msra.mxu0 %v2501
        %3155 = vmatprep.subr.mxu0 0.0
        %3156 = vmatpush1.msra.mxu0 %v2500
        %3157 = vmatprep.subr.mxu0 0.0
        %3158 = vmatpush1.msra.mxu0 %v2499
        %3159 = vmatprep.subr.mxu0 0.0
        %3160 = vmatpush2.msra.mxu0 0.0
        %3161 = vmatprep.subr.mxu0 0.0
        %3162 = vmatpush2.msra.mxu0 0.0
        %3163 = vmatprep.subr.mxu0 0.0
        %3164 = vmatpush2.msra.mxu0 0.0
        %3165 = vmatprep.subr.mxu0 0.0
        %3166 = vmatpush2.msra.mxu0 0.0
        %3167 = vmatprep.subr.mxu0 0.0
        %3168 = vmatpush2.msra.mxu0 0.0
        %3169 = vmatprep.subr.mxu0 0.0
        %3170 = vmatpush2.msra.mxu0 0.0
        %3171 = vmatprep.subr.mxu0 0.0
        %3172 = vmatpush2.msra.mxu0 0.0
        %3173 = vmatprep.subr.mxu0 0.0
        %3174 = vmatpush2.msra.mxu0 0.0
        %3175 = vmatprep.subr.mxu0 0.0
        %3176 = vmatpush2.msra.mxu0 0.0
        %3177 = vmatprep.subr.mxu0 0.0
        %3178 = vmatpush2.msra.mxu0 0.0
        %3179 = vmatprep.subr.mxu0 0.0
        %3180 = vmatpush2.msra.mxu0 0.0
        %3181 = vmatprep.subr.mxu0 0.0
        %3182 = vmatpush2.msra.mxu0 0.0
        %3183 = vmatprep.subr.mxu0 0.0
        %3184 = vmatpush2.msra.mxu0 0.0
        %3185 = vmatprep.subr.mxu0 0.0
        %3186 = vmatpush2.msra.mxu0 0.0
        %3187 = vmatprep.subr.mxu0 0.0
        %3188 = vmatpush2.msra.mxu0 0.0
        %3189 = vmatprep.subr.mxu0 0.0
        %3190 = vmatpush2.msra.mxu0 0.0
        %3191 = vmatprep.mubr.f32.mxu0 0.0
        %3192 = vmatmul.mubr.f32.gmra.mxu0 %v2464
        %v3193 = vpop.f32.mrf.mxu0
        %v3194 = vadd.f32 0.0, %v3193
        %v3195 = vpop.f32.mrf.mxu0
        %3196 = vdwg.mxu0
        %v3197 = vadd.f32 %v3124, %v3194
        %3198 = vmatprep.subr.mxu0 0.0
        %3199 = vmatpush1.msra.mxu0 %v2547
        %3200 = vmatprep.subr.mxu0 0.0
        %3201 = vmatpush1.msra.mxu0 %v2546
        %3202 = vmatprep.subr.mxu0 0.0
        %3203 = vmatpush1.msra.mxu0 %v2545
        %3204 = vmatprep.subr.mxu0 0.0
        %3205 = vmatpush1.msra.mxu0 %v2544
        %3206 = vmatprep.subr.mxu0 0.0
        %3207 = vmatpush1.msra.mxu0 %v2543
        %3208 = vmatprep.subr.mxu0 0.0
        %3209 = vmatpush1.msra.mxu0 %v2542
        %3210 = vmatprep.subr.mxu0 0.0
        %3211 = vmatpush1.msra.mxu0 %v2541
        %3212 = vmatprep.subr.mxu0 0.0
        %3213 = vmatpush1.msra.mxu0 %v2540
        %3214 = vmatprep.subr.mxu0 0.0
        %3215 = vmatpush1.msra.mxu0 %v2539
        %3216 = vmatprep.subr.mxu0 0.0
        %3217 = vmatpush1.msra.mxu0 %v2538
        %3218 = vmatprep.subr.mxu0 0.0
        %3219 = vmatpush1.msra.mxu0 %v2537
        %3220 = vmatprep.subr.mxu0 0.0
        %3221 = vmatpush1.msra.mxu0 %v2536
        %3222 = vmatprep.subr.mxu0 0.0
        %3223 = vmatpush1.msra.mxu0 %v2535
        %3224 = vmatprep.subr.mxu0 0.0
        %3225 = vmatpush1.msra.mxu0 %v2534
        %3226 = vmatprep.subr.mxu0 0.0
        %3227 = vmatpush1.msra.mxu0 %v2533
        %3228 = vmatprep.subr.mxu0 0.0
        %3229 = vmatpush1.msra.mxu0 %v2532
        %3230 = vmatprep.subr.mxu0 0.0
        %3231 = vmatpush2.msra.mxu0 0.0
        %3232 = vmatprep.subr.mxu0 0.0
        %3233 = vmatpush2.msra.mxu0 0.0
        %3234 = vmatprep.subr.mxu0 0.0
        %3235 = vmatpush2.msra.mxu0 0.0
        %3236 = vmatprep.subr.mxu0 0.0
        %3237 = vmatpush2.msra.mxu0 0.0
        %3238 = vmatprep.subr.mxu0 0.0
        %3239 = vmatpush2.msra.mxu0 0.0
        %3240 = vmatprep.subr.mxu0 0.0
        %3241 = vmatpush2.msra.mxu0 0.0
        %3242 = vmatprep.subr.mxu0 0.0
        %3243 = vmatpush2.msra.mxu0 0.0
        %3244 = vmatprep.subr.mxu0 0.0
        %3245 = vmatpush2.msra.mxu0 0.0
        %3246 = vmatprep.subr.mxu0 0.0
        %3247 = vmatpush2.msra.mxu0 0.0
        %3248 = vmatprep.subr.mxu0 0.0
        %3249 = vmatpush2.msra.mxu0 0.0
        %3250 = vmatprep.subr.mxu0 0.0
        %3251 = vmatpush2.msra.mxu0 0.0
        %3252 = vmatprep.subr.mxu0 0.0
        %3253 = vmatpush2.msra.mxu0 0.0
        %3254 = vmatprep.subr.mxu0 0.0
        %3255 = vmatpush2.msra.mxu0 0.0
        %3256 = vmatprep.subr.mxu0 0.0
        %3257 = vmatpush2.msra.mxu0 0.0
        %3258 = vmatprep.subr.mxu0 0.0
        %3259 = vmatpush2.msra.mxu0 0.0
        %3260 = vmatprep.subr.mxu0 0.0
        %3261 = vmatpush2.msra.mxu0 0.0
        %3262 = vmatprep.mubr.f32.mxu0 0.0
        %3263 = vmatmul.mubr.f32.gmra.mxu0 %v2455
        %v3264 = vpop.f32.mrf.mxu0
        %v3265 = vadd.f32 0.0, %v3264
        %v3266 = vpop.f32.mrf.mxu0
        %3267 = vdwg.mxu0
        %3268 = vmatprep.subr.mxu0 0.0
        %3269 = vmatpush1.msra.mxu0 %v2530
        %3270 = vmatprep.subr.mxu0 0.0
        %3271 = vmatpush1.msra.mxu0 %v2529
        %3272 = vmatprep.subr.mxu0 0.0
        %3273 = vmatpush1.msra.mxu0 %v2528
        %3274 = vmatprep.subr.mxu0 0.0
        %3275 = vmatpush1.msra.mxu0 %v2527
        %3276 = vmatprep.subr.mxu0 0.0
        %3277 = vmatpush1.msra.mxu0 %v2526
        %3278 = vmatprep.subr.mxu0 0.0
        %3279 = vmatpush1.msra.mxu0 %v2525
        %3280 = vmatprep.subr.mxu0 0.0
        %3281 = vmatpush1.msra.mxu0 %v2524
        %3282 = vmatprep.subr.mxu0 0.0
        %3283 = vmatpush1.msra.mxu0 %v2523
        %3284 = vmatprep.subr.mxu0 0.0
        %3285 = vmatpush1.msra.mxu0 %v2522
        %3286 = vmatprep.subr.mxu0 0.0
        %3287 = vmatpush1.msra.mxu0 %v2521
        %3288 = vmatprep.subr.mxu0 0.0
        %3289 = vmatpush1.msra.mxu0 %v2520
        %3290 = vmatprep.subr.mxu0 0.0
        %3291 = vmatpush1.msra.mxu0 %v2519
        %3292 = vmatprep.subr.mxu0 0.0
        %3293 = vmatpush1.msra.mxu0 %v2518
        %3294 = vmatprep.subr.mxu0 0.0
        %3295 = vmatpush1.msra.mxu0 %v2517
        %3296 = vmatprep.subr.mxu0 0.0
        %3297 = vmatpush1.msra.mxu0 %v2516
        %3298 = vmatprep.subr.mxu0 0.0
        %3299 = vmatpush1.msra.mxu0 %v2515
        %3300 = vmatprep.subr.mxu0 0.0
        %3301 = vmatpush2.msra.mxu0 0.0
        %3302 = vmatprep.subr.mxu0 0.0
        %3303 = vmatpush2.msra.mxu0 0.0
        %3304 = vmatprep.subr.mxu0 0.0
        %3305 = vmatpush2.msra.mxu0 0.0
        %3306 = vmatprep.subr.mxu0 0.0
        %3307 = vmatpush2.msra.mxu0 0.0
        %3308 = vmatprep.subr.mxu0 0.0
        %3309 = vmatpush2.msra.mxu0 0.0
        %3310 = vmatprep.subr.mxu0 0.0
        %3311 = vmatpush2.msra.mxu0 0.0
        %3312 = vmatprep.subr.mxu0 0.0
        %3313 = vmatpush2.msra.mxu0 0.0
        %3314 = vmatprep.subr.mxu0 0.0
        %3315 = vmatpush2.msra.mxu0 0.0
        %3316 = vmatprep.subr.mxu0 0.0
        %3317 = vmatpush2.msra.mxu0 0.0
        %3318 = vmatprep.subr.mxu0 0.0
        %3319 = vmatpush2.msra.mxu0 0.0
        %3320 = vmatprep.subr.mxu0 0.0
        %3321 = vmatpush2.msra.mxu0 0.0
        %3322 = vmatprep.subr.mxu0 0.0
        %3323 = vmatpush2.msra.mxu0 0.0
        %3324 = vmatprep.subr.mxu0 0.0
        %3325 = vmatpush2.msra.mxu0 0.0
        %3326 = vmatprep.subr.mxu0 0.0
        %3327 = vmatpush2.msra.mxu0 0.0
        %3328 = vmatprep.subr.mxu0 0.0
        %3329 = vmatpush2.msra.mxu0 0.0
        %3330 = vmatprep.subr.mxu0 0.0
        %3331 = vmatpush2.msra.mxu0 0.0
        %3332 = vmatprep.mubr.f32.mxu0 0.0
        %3333 = vmatmul.mubr.f32.gmra.mxu0 %v1593
        %v3334 = vpop.f32.mrf.mxu0
        %v3335 = vadd.f32 %v3265, %v3334
        %v3336 = vpop.f32.mrf.mxu0
        %3337 = vdwg.mxu0
        %3338 = vmatprep.subr.mxu0 0.0
        %3339 = vmatpush1.msra.mxu0 %v2564
        %3340 = vmatprep.subr.mxu0 0.0
        %3341 = vmatpush1.msra.mxu0 %v2563
        %3342 = vmatprep.subr.mxu0 0.0
        %3343 = vmatpush1.msra.mxu0 %v2562
        %3344 = vmatprep.subr.mxu0 0.0
        %3345 = vmatpush1.msra.mxu0 %v2561
        %3346 = vmatprep.subr.mxu0 0.0
        %3347 = vmatpush1.msra.mxu0 %v2560
        %3348 = vmatprep.subr.mxu0 0.0
        %3349 = vmatpush1.msra.mxu0 %v2559
        %3350 = vmatprep.subr.mxu0 0.0
        %3351 = vmatpush1.msra.mxu0 %v2558
        %3352 = vmatprep.subr.mxu0 0.0
        %3353 = vmatpush1.msra.mxu0 %v2557
        %3354 = vmatprep.subr.mxu0 0.0
        %3355 = vmatpush1.msra.mxu0 %v2556
        %3356 = vmatprep.subr.mxu0 0.0
        %3357 = vmatpush1.msra.mxu0 %v2555
        %3358 = vmatprep.subr.mxu0 0.0
        %3359 = vmatpush1.msra.mxu0 %v2554
        %3360 = vmatprep.subr.mxu0 0.0
        %3361 = vmatpush1.msra.mxu0 %v2553
        %3362 = vmatprep.subr.mxu0 0.0
        %3363 = vmatpush1.msra.mxu0 %v2552
        %3364 = vmatprep.subr.mxu0 0.0
        %3365 = vmatpush1.msra.mxu0 %v2551
        %3366 = vmatprep.subr.mxu0 0.0
        %3367 = vmatpush1.msra.mxu0 %v2550
        %3368 = vmatprep.subr.mxu0 0.0
        %3369 = vmatpush1.msra.mxu0 %v2549
        %3370 = vmatprep.subr.mxu0 0.0
        %3371 = vmatpush2.msra.mxu0 0.0
        %3372 = vmatprep.subr.mxu0 0.0
        %3373 = vmatpush2.msra.mxu0 0.0
        %3374 = vmatprep.subr.mxu0 0.0
        %3375 = vmatpush2.msra.mxu0 0.0
        %3376 = vmatprep.subr.mxu0 0.0
        %3377 = vmatpush2.msra.mxu0 0.0
        %3378 = vmatprep.subr.mxu0 0.0
        %3379 = vmatpush2.msra.mxu0 0.0
        %3380 = vmatprep.subr.mxu0 0.0
        %3381 = vmatpush2.msra.mxu0 0.0
        %3382 = vmatprep.subr.mxu0 0.0
        %3383 = vmatpush2.msra.mxu0 0.0
        %3384 = vmatprep.subr.mxu0 0.0
        %3385 = vmatpush2.msra.mxu0 0.0
        %3386 = vmatprep.subr.mxu0 0.0
        %3387 = vmatpush2.msra.mxu0 0.0
        %3388 = vmatprep.subr.mxu0 0.0
        %3389 = vmatpush2.msra.mxu0 0.0
        %3390 = vmatprep.subr.mxu0 0.0
        %3391 = vmatpush2.msra.mxu0 0.0
        %3392 = vmatprep.subr.mxu0 0.0
        %3393 = vmatpush2.msra.mxu0 0.0
        %3394 = vmatprep.subr.mxu0 0.0
        %3395 = vmatpush2.msra.mxu0 0.0
        %3396 = vmatprep.subr.mxu0 0.0
        %3397 = vmatpush2.msra.mxu0 0.0
        %3398 = vmatprep.subr.mxu0 0.0
        %3399 = vmatpush2.msra.mxu0 0.0
        %3400 = vmatprep.subr.mxu0 0.0
        %3401 = vmatpush2.msra.mxu0 0.0
        %3402 = vmatprep.mubr.f32.mxu0 0.0
        %3403 = vmatmul.mubr.f32.gmra.mxu0 %v2464
        %v3404 = vpop.f32.mrf.mxu0
        %v3405 = vadd.f32 0.0, %v3404
        %v3406 = vpop.f32.mrf.mxu0
        %3407 = vdwg.mxu0
        %v3408 = vadd.f32 %v3335, %v3405
        %v3409 = vmax.f32 %v2775, %v2986
        %v3410 = vmax.f32 %v3197, %v3408
        %v3411 = vmax.f32 %v3409, %v3410
        %v3412 = vld [vmem:[%s9] sm:$0x1]
        %v3414 = vlaneseq
        %v3415 = vshrl.u32 %v3414, 7
        %v3416 = vsub.s32 0, %v3415
        %v3417 = vrot.slane %v3412, %v3416
        %v3419 = vadd.f32 %v3411, %v3417
        %v3420 = vmax.f32 %v3419, 0.0
        %v3421 = vld [vmem:[#allocation7] sm:$0xff]
        %v3422 = vld [vmem:[#allocation7 + $0x8] sm:$0xff]
        %v3423 = vld [vmem:[#allocation7 + $0x10] sm:$0xff]
        %v3424 = vld [vmem:[#allocation7 + $0x18] sm:$0xff]
        %v3425 = vld [vmem:[#allocation7 + $0x20] sm:$0xff]
        %v3426 = vld [vmem:[#allocation7 + $0x28] sm:$0xff]
        %v3427 = vld [vmem:[#allocation7 + $0x30] sm:$0xff]
        %v3428 = vld [vmem:[#allocation7 + $0x38] sm:$0xff]
        %v3429 = vld [vmem:[#allocation7 + $0x40] sm:$0xff]
        %v3430 = vld [vmem:[#allocation7 + $0x48] sm:$0xff]
        %v3431 = vld [vmem:[#allocation7 + $0x50] sm:$0xff]
        %v3432 = vld [vmem:[#allocation7 + $0x58] sm:$0xff]
        %v3433 = vld [vmem:[#allocation7 + $0x60] sm:$0xff]
        %v3434 = vld [vmem:[#allocation7 + $0x68] sm:$0xff]
        %v3435 = vld [vmem:[#allocation7 + $0x70] sm:$0xff]
        %v3436 = vld [vmem:[#allocation7 + $0x78] sm:$0xff]
        %s3437 = scalar_lea.vmem [#allocation7], 128
        %v3438 = vld [vmem:[%s3437] sm:$0xff]
        %v3439 = vld [vmem:[%s3437 + $0x8] sm:$0xff]
        %v3440 = vld [vmem:[%s3437 + $0x10] sm:$0xff]
        %v3441 = vld [vmem:[%s3437 + $0x18] sm:$0xff]
        %v3442 = vld [vmem:[%s3437 + $0x20] sm:$0xff]
        %v3443 = vld [vmem:[%s3437 + $0x28] sm:$0xff]
        %v3444 = vld [vmem:[%s3437 + $0x30] sm:$0xff]
        %v3445 = vld [vmem:[%s3437 + $0x38] sm:$0xff]
        %v3446 = vld [vmem:[%s3437 + $0x40] sm:$0xff]
        %v3447 = vld [vmem:[%s3437 + $0x48] sm:$0xff]
        %v3448 = vld [vmem:[%s3437 + $0x50] sm:$0xff]
        %v3449 = vld [vmem:[%s3437 + $0x58] sm:$0xff]
        %v3450 = vld [vmem:[%s3437 + $0x60] sm:$0xff]
        %v3451 = vld [vmem:[%s3437 + $0x68] sm:$0xff]
        %v3452 = vld [vmem:[%s3437 + $0x70] sm:$0xff]
        %v3453 = vld [vmem:[%s3437 + $0x78] sm:$0xff]
        %v3455 = vrot.slane %v3420, 1
        %3457 = vmatprep.subr.mxu0 0.0
        %3458 = vmatpush1.msra.mxu0 %v3453
        %3459 = vmatprep.subr.mxu0 0.0
        %3460 = vmatpush1.msra.mxu0 %v3452
        %3461 = vmatprep.subr.mxu0 0.0
        %3462 = vmatpush1.msra.mxu0 %v3451
        %3463 = vmatprep.subr.mxu0 0.0
        %3464 = vmatpush1.msra.mxu0 %v3450
        %3465 = vmatprep.subr.mxu0 0.0
        %3466 = vmatpush1.msra.mxu0 %v3449
        %3467 = vmatprep.subr.mxu0 0.0
        %3468 = vmatpush1.msra.mxu0 %v3448
        %3469 = vmatprep.subr.mxu0 0.0
        %3470 = vmatpush1.msra.mxu0 %v3447
        %3471 = vmatprep.subr.mxu0 0.0
        %3472 = vmatpush1.msra.mxu0 %v3446
        %3473 = vmatprep.subr.mxu0 0.0
        %3474 = vmatpush1.msra.mxu0 %v3445
        %3475 = vmatprep.subr.mxu0 0.0
        %3476 = vmatpush1.msra.mxu0 %v3444
        %3477 = vmatprep.subr.mxu0 0.0
        %3478 = vmatpush1.msra.mxu0 %v3443
        %3479 = vmatprep.subr.mxu0 0.0
        %3480 = vmatpush1.msra.mxu0 %v3442
        %3481 = vmatprep.subr.mxu0 0.0
        %3482 = vmatpush1.msra.mxu0 %v3441
        %3483 = vmatprep.subr.mxu0 0.0
        %3484 = vmatpush1.msra.mxu0 %v3440
        %3485 = vmatprep.subr.mxu0 0.0
        %3486 = vmatpush1.msra.mxu0 %v3439
        %3487 = vmatprep.subr.mxu0 0.0
        %3488 = vmatpush1.msra.mxu0 %v3438
        %3489 = vmatprep.subr.mxu0 0.0
        %3490 = vmatpush2.msra.mxu0 0.0
        %3491 = vmatprep.subr.mxu0 0.0
        %3492 = vmatpush2.msra.mxu0 0.0
        %3493 = vmatprep.subr.mxu0 0.0
        %3494 = vmatpush2.msra.mxu0 0.0
        %3495 = vmatprep.subr.mxu0 0.0
        %3496 = vmatpush2.msra.mxu0 0.0
        %3497 = vmatprep.subr.mxu0 0.0
        %3498 = vmatpush2.msra.mxu0 0.0
        %3499 = vmatprep.subr.mxu0 0.0
        %3500 = vmatpush2.msra.mxu0 0.0
        %3501 = vmatprep.subr.mxu0 0.0
        %3502 = vmatpush2.msra.mxu0 0.0
        %3503 = vmatprep.subr.mxu0 0.0
        %3504 = vmatpush2.msra.mxu0 0.0
        %3505 = vmatprep.subr.mxu0 0.0
        %3506 = vmatpush2.msra.mxu0 0.0
        %3507 = vmatprep.subr.mxu0 0.0
        %3508 = vmatpush2.msra.mxu0 0.0
        %3509 = vmatprep.subr.mxu0 0.0
        %3510 = vmatpush2.msra.mxu0 0.0
        %3511 = vmatprep.subr.mxu0 0.0
        %3512 = vmatpush2.msra.mxu0 0.0
        %3513 = vmatprep.subr.mxu0 0.0
        %3514 = vmatpush2.msra.mxu0 0.0
        %3515 = vmatprep.subr.mxu0 0.0
        %3516 = vmatpush2.msra.mxu0 0.0
        %3517 = vmatprep.subr.mxu0 0.0
        %3518 = vmatpush2.msra.mxu0 0.0
        %3519 = vmatprep.subr.mxu0 0.0
        %3520 = vmatpush2.msra.mxu0 0.0
        %3521 = vmatprep.mubr.f32.mxu0 0.0
        %3522 = vmatmul.mubr.f32.gmra.mxu0 %v3455
        %v3523 = vpop.f32.mrf.mxu0
        %v3524 = vadd.f32 0.0, %v3523
        %v3525 = vpop.f32.mrf.mxu0
        %3526 = vdwg.mxu0
        %3527 = vmatprep.subr.mxu0 0.0
        %3528 = vmatpush1.msra.mxu0 %v3436
        %3529 = vmatprep.subr.mxu0 0.0
        %3530 = vmatpush1.msra.mxu0 %v3435
        %3531 = vmatprep.subr.mxu0 0.0
        %3532 = vmatpush1.msra.mxu0 %v3434
        %3533 = vmatprep.subr.mxu0 0.0
        %3534 = vmatpush1.msra.mxu0 %v3433
        %3535 = vmatprep.subr.mxu0 0.0
        %3536 = vmatpush1.msra.mxu0 %v3432
        %3537 = vmatprep.subr.mxu0 0.0
        %3538 = vmatpush1.msra.mxu0 %v3431
        %3539 = vmatprep.subr.mxu0 0.0
        %3540 = vmatpush1.msra.mxu0 %v3430
        %3541 = vmatprep.subr.mxu0 0.0
        %3542 = vmatpush1.msra.mxu0 %v3429
        %3543 = vmatprep.subr.mxu0 0.0
        %3544 = vmatpush1.msra.mxu0 %v3428
        %3545 = vmatprep.subr.mxu0 0.0
        %3546 = vmatpush1.msra.mxu0 %v3427
        %3547 = vmatprep.subr.mxu0 0.0
        %3548 = vmatpush1.msra.mxu0 %v3426
        %3549 = vmatprep.subr.mxu0 0.0
        %3550 = vmatpush1.msra.mxu0 %v3425
        %3551 = vmatprep.subr.mxu0 0.0
        %3552 = vmatpush1.msra.mxu0 %v3424
        %3553 = vmatprep.subr.mxu0 0.0
        %3554 = vmatpush1.msra.mxu0 %v3423
        %3555 = vmatprep.subr.mxu0 0.0
        %3556 = vmatpush1.msra.mxu0 %v3422
        %3557 = vmatprep.subr.mxu0 0.0
        %3558 = vmatpush1.msra.mxu0 %v3421
        %3559 = vmatprep.subr.mxu0 0.0
        %3560 = vmatpush2.msra.mxu0 0.0
        %3561 = vmatprep.subr.mxu0 0.0
        %3562 = vmatpush2.msra.mxu0 0.0
        %3563 = vmatprep.subr.mxu0 0.0
        %3564 = vmatpush2.msra.mxu0 0.0
        %3565 = vmatprep.subr.mxu0 0.0
        %3566 = vmatpush2.msra.mxu0 0.0
        %3567 = vmatprep.subr.mxu0 0.0
        %3568 = vmatpush2.msra.mxu0 0.0
        %3569 = vmatprep.subr.mxu0 0.0
        %3570 = vmatpush2.msra.mxu0 0.0
        %3571 = vmatprep.subr.mxu0 0.0
        %3572 = vmatpush2.msra.mxu0 0.0
        %3573 = vmatprep.subr.mxu0 0.0
        %3574 = vmatpush2.msra.mxu0 0.0
        %3575 = vmatprep.subr.mxu0 0.0
        %3576 = vmatpush2.msra.mxu0 0.0
        %3577 = vmatprep.subr.mxu0 0.0
        %3578 = vmatpush2.msra.mxu0 0.0
        %3579 = vmatprep.subr.mxu0 0.0
        %3580 = vmatpush2.msra.mxu0 0.0
        %3581 = vmatprep.subr.mxu0 0.0
        %3582 = vmatpush2.msra.mxu0 0.0
        %3583 = vmatprep.subr.mxu0 0.0
        %3584 = vmatpush2.msra.mxu0 0.0
        %3585 = vmatprep.subr.mxu0 0.0
        %3586 = vmatpush2.msra.mxu0 0.0
        %3587 = vmatprep.subr.mxu0 0.0
        %3588 = vmatpush2.msra.mxu0 0.0
        %3589 = vmatprep.subr.mxu0 0.0
        %3590 = vmatpush2.msra.mxu0 0.0
        %3591 = vmatprep.mubr.f32.mxu0 0.0
        %3592 = vmatmul.mubr.f32.gmra.mxu0 %v3420
        %v3593 = vpop.f32.mrf.mxu0
        %v3594 = vadd.f32 %v3524, %v3593
        %v3595 = vpop.f32.mrf.mxu0
        %3596 = vdwg.mxu0
        %s3597 = scalar_lea.vmem [#allocation7], 256
        %v3598 = vld [vmem:[%s3597] sm:$0xff]
        %v3599 = vld [vmem:[%s3597 + $0x8] sm:$0xff]
        %v3600 = vld [vmem:[%s3597 + $0x10] sm:$0xff]
        %v3601 = vld [vmem:[%s3597 + $0x18] sm:$0xff]
        %v3602 = vld [vmem:[%s3597 + $0x20] sm:$0xff]
        %v3603 = vld [vmem:[%s3597 + $0x28] sm:$0xff]
        %v3604 = vld [vmem:[%s3597 + $0x30] sm:$0xff]
        %v3605 = vld [vmem:[%s3597 + $0x38] sm:$0xff]
        %v3606 = vld [vmem:[%s3597 + $0x40] sm:$0xff]
        %v3607 = vld [vmem:[%s3597 + $0x48] sm:$0xff]
        %v3608 = vld [vmem:[%s3597 + $0x50] sm:$0xff]
        %v3609 = vld [vmem:[%s3597 + $0x58] sm:$0xff]
        %v3610 = vld [vmem:[%s3597 + $0x60] sm:$0xff]
        %v3611 = vld [vmem:[%s3597 + $0x68] sm:$0xff]
        %v3612 = vld [vmem:[%s3597 + $0x70] sm:$0xff]
        %v3613 = vld [vmem:[%s3597 + $0x78] sm:$0xff]
        %v3614 = vrot.slane %v3420, 2
        %3616 = vmatprep.subr.mxu0 0.0
        %3617 = vmatpush1.msra.mxu0 %v3613
        %3618 = vmatprep.subr.mxu0 0.0
        %3619 = vmatpush1.msra.mxu0 %v3612
        %3620 = vmatprep.subr.mxu0 0.0
        %3621 = vmatpush1.msra.mxu0 %v3611
        %3622 = vmatprep.subr.mxu0 0.0
        %3623 = vmatpush1.msra.mxu0 %v3610
        %3624 = vmatprep.subr.mxu0 0.0
        %3625 = vmatpush1.msra.mxu0 %v3609
        %3626 = vmatprep.subr.mxu0 0.0
        %3627 = vmatpush1.msra.mxu0 %v3608
        %3628 = vmatprep.subr.mxu0 0.0
        %3629 = vmatpush1.msra.mxu0 %v3607
        %3630 = vmatprep.subr.mxu0 0.0
        %3631 = vmatpush1.msra.mxu0 %v3606
        %3632 = vmatprep.subr.mxu0 0.0
        %3633 = vmatpush1.msra.mxu0 %v3605
        %3634 = vmatprep.subr.mxu0 0.0
        %3635 = vmatpush1.msra.mxu0 %v3604
        %3636 = vmatprep.subr.mxu0 0.0
        %3637 = vmatpush1.msra.mxu0 %v3603
        %3638 = vmatprep.subr.mxu0 0.0
        %3639 = vmatpush1.msra.mxu0 %v3602
        %3640 = vmatprep.subr.mxu0 0.0
        %3641 = vmatpush1.msra.mxu0 %v3601
        %3642 = vmatprep.subr.mxu0 0.0
        %3643 = vmatpush1.msra.mxu0 %v3600
        %3644 = vmatprep.subr.mxu0 0.0
        %3645 = vmatpush1.msra.mxu0 %v3599
        %3646 = vmatprep.subr.mxu0 0.0
        %3647 = vmatpush1.msra.mxu0 %v3598
        %3648 = vmatprep.subr.mxu0 0.0
        %3649 = vmatpush2.msra.mxu0 0.0
        %3650 = vmatprep.subr.mxu0 0.0
        %3651 = vmatpush2.msra.mxu0 0.0
        %3652 = vmatprep.subr.mxu0 0.0
        %3653 = vmatpush2.msra.mxu0 0.0
        %3654 = vmatprep.subr.mxu0 0.0
        %3655 = vmatpush2.msra.mxu0 0.0
        %3656 = vmatprep.subr.mxu0 0.0
        %3657 = vmatpush2.msra.mxu0 0.0
        %3658 = vmatprep.subr.mxu0 0.0
        %3659 = vmatpush2.msra.mxu0 0.0
        %3660 = vmatprep.subr.mxu0 0.0
        %3661 = vmatpush2.msra.mxu0 0.0
        %3662 = vmatprep.subr.mxu0 0.0
        %3663 = vmatpush2.msra.mxu0 0.0
        %3664 = vmatprep.subr.mxu0 0.0
        %3665 = vmatpush2.msra.mxu0 0.0
        %3666 = vmatprep.subr.mxu0 0.0
        %3667 = vmatpush2.msra.mxu0 0.0
        %3668 = vmatprep.subr.mxu0 0.0
        %3669 = vmatpush2.msra.mxu0 0.0
        %3670 = vmatprep.subr.mxu0 0.0
        %3671 = vmatpush2.msra.mxu0 0.0
        %3672 = vmatprep.subr.mxu0 0.0
        %3673 = vmatpush2.msra.mxu0 0.0
        %3674 = vmatprep.subr.mxu0 0.0
        %3675 = vmatpush2.msra.mxu0 0.0
        %3676 = vmatprep.subr.mxu0 0.0
        %3677 = vmatpush2.msra.mxu0 0.0
        %3678 = vmatprep.subr.mxu0 0.0
        %3679 = vmatpush2.msra.mxu0 0.0
        %3680 = vmatprep.mubr.f32.mxu0 0.0
        %3681 = vmatmul.mubr.f32.gmra.mxu0 %v3614
        %v3682 = vpop.f32.mrf.mxu0
        %v3683 = vadd.f32 0.0, %v3682
        %v3684 = vpop.f32.mrf.mxu0
        %3685 = vdwg.mxu0
        %v3686 = vadd.f32 %v3594, %v3683
        %s3687 = scalar_lea.vmem [#allocation7], 384
        %v3688 = vld [vmem:[%s3687] sm:$0xff]
        %v3689 = vld [vmem:[%s3687 + $0x8] sm:$0xff]
        %v3690 = vld [vmem:[%s3687 + $0x10] sm:$0xff]
        %v3691 = vld [vmem:[%s3687 + $0x18] sm:$0xff]
        %v3692 = vld [vmem:[%s3687 + $0x20] sm:$0xff]
        %v3693 = vld [vmem:[%s3687 + $0x28] sm:$0xff]
        %v3694 = vld [vmem:[%s3687 + $0x30] sm:$0xff]
        %v3695 = vld [vmem:[%s3687 + $0x38] sm:$0xff]
        %v3696 = vld [vmem:[%s3687 + $0x40] sm:$0xff]
        %v3697 = vld [vmem:[%s3687 + $0x48] sm:$0xff]
        %v3698 = vld [vmem:[%s3687 + $0x50] sm:$0xff]
        %v3699 = vld [vmem:[%s3687 + $0x58] sm:$0xff]
        %v3700 = vld [vmem:[%s3687 + $0x60] sm:$0xff]
        %v3701 = vld [vmem:[%s3687 + $0x68] sm:$0xff]
        %v3702 = vld [vmem:[%s3687 + $0x70] sm:$0xff]
        %v3703 = vld [vmem:[%s3687 + $0x78] sm:$0xff]
        %v3704 = vrot.slane %v3420, 3
        %3706 = vmatprep.subr.mxu0 0.0
        %3707 = vmatpush1.msra.mxu0 %v3703
        %3708 = vmatprep.subr.mxu0 0.0
        %3709 = vmatpush1.msra.mxu0 %v3702
        %3710 = vmatprep.subr.mxu0 0.0
        %3711 = vmatpush1.msra.mxu0 %v3701
        %3712 = vmatprep.subr.mxu0 0.0
        %3713 = vmatpush1.msra.mxu0 %v3700
        %3714 = vmatprep.subr.mxu0 0.0
        %3715 = vmatpush1.msra.mxu0 %v3699
        %3716 = vmatprep.subr.mxu0 0.0
        %3717 = vmatpush1.msra.mxu0 %v3698
        %3718 = vmatprep.subr.mxu0 0.0
        %3719 = vmatpush1.msra.mxu0 %v3697
        %3720 = vmatprep.subr.mxu0 0.0
        %3721 = vmatpush1.msra.mxu0 %v3696
        %3722 = vmatprep.subr.mxu0 0.0
        %3723 = vmatpush1.msra.mxu0 %v3695
        %3724 = vmatprep.subr.mxu0 0.0
        %3725 = vmatpush1.msra.mxu0 %v3694
        %3726 = vmatprep.subr.mxu0 0.0
        %3727 = vmatpush1.msra.mxu0 %v3693
        %3728 = vmatprep.subr.mxu0 0.0
        %3729 = vmatpush1.msra.mxu0 %v3692
        %3730 = vmatprep.subr.mxu0 0.0
        %3731 = vmatpush1.msra.mxu0 %v3691
        %3732 = vmatprep.subr.mxu0 0.0
        %3733 = vmatpush1.msra.mxu0 %v3690
        %3734 = vmatprep.subr.mxu0 0.0
        %3735 = vmatpush1.msra.mxu0 %v3689
        %3736 = vmatprep.subr.mxu0 0.0
        %3737 = vmatpush1.msra.mxu0 %v3688
        %3738 = vmatprep.subr.mxu0 0.0
        %3739 = vmatpush2.msra.mxu0 0.0
        %3740 = vmatprep.subr.mxu0 0.0
        %3741 = vmatpush2.msra.mxu0 0.0
        %3742 = vmatprep.subr.mxu0 0.0
        %3743 = vmatpush2.msra.mxu0 0.0
        %3744 = vmatprep.subr.mxu0 0.0
        %3745 = vmatpush2.msra.mxu0 0.0
        %3746 = vmatprep.subr.mxu0 0.0
        %3747 = vmatpush2.msra.mxu0 0.0
        %3748 = vmatprep.subr.mxu0 0.0
        %3749 = vmatpush2.msra.mxu0 0.0
        %3750 = vmatprep.subr.mxu0 0.0
        %3751 = vmatpush2.msra.mxu0 0.0
        %3752 = vmatprep.subr.mxu0 0.0
        %3753 = vmatpush2.msra.mxu0 0.0
        %3754 = vmatprep.subr.mxu0 0.0
        %3755 = vmatpush2.msra.mxu0 0.0
        %3756 = vmatprep.subr.mxu0 0.0
        %3757 = vmatpush2.msra.mxu0 0.0
        %3758 = vmatprep.subr.mxu0 0.0
        %3759 = vmatpush2.msra.mxu0 0.0
        %3760 = vmatprep.subr.mxu0 0.0
        %3761 = vmatpush2.msra.mxu0 0.0
        %3762 = vmatprep.subr.mxu0 0.0
        %3763 = vmatpush2.msra.mxu0 0.0
        %3764 = vmatprep.subr.mxu0 0.0
        %3765 = vmatpush2.msra.mxu0 0.0
        %3766 = vmatprep.subr.mxu0 0.0
        %3767 = vmatpush2.msra.mxu0 0.0
        %3768 = vmatprep.subr.mxu0 0.0
        %3769 = vmatpush2.msra.mxu0 0.0
        %3770 = vmatprep.mubr.f32.mxu0 0.0
        %3771 = vmatmul.mubr.f32.gmra.mxu0 %v3704
        %v3772 = vpop.f32.mrf.mxu0
        %v3773 = vadd.f32 0.0, %v3772
        %v3774 = vpop.f32.mrf.mxu0
        %3775 = vdwg.mxu0
        %v3776 = vadd.f32 %v3686, %v3773
        %s3777 = scalar_lea.vmem [#allocation7], 512
        %v3778 = vld [vmem:[%s3777] sm:$0xff]
        %v3779 = vld [vmem:[%s3777 + $0x8] sm:$0xff]
        %v3780 = vld [vmem:[%s3777 + $0x10] sm:$0xff]
        %v3781 = vld [vmem:[%s3777 + $0x18] sm:$0xff]
        %v3782 = vld [vmem:[%s3777 + $0x20] sm:$0xff]
        %v3783 = vld [vmem:[%s3777 + $0x28] sm:$0xff]
        %v3784 = vld [vmem:[%s3777 + $0x30] sm:$0xff]
        %v3785 = vld [vmem:[%s3777 + $0x38] sm:$0xff]
        %v3786 = vld [vmem:[%s3777 + $0x40] sm:$0xff]
        %v3787 = vld [vmem:[%s3777 + $0x48] sm:$0xff]
        %v3788 = vld [vmem:[%s3777 + $0x50] sm:$0xff]
        %v3789 = vld [vmem:[%s3777 + $0x58] sm:$0xff]
        %v3790 = vld [vmem:[%s3777 + $0x60] sm:$0xff]
        %v3791 = vld [vmem:[%s3777 + $0x68] sm:$0xff]
        %v3792 = vld [vmem:[%s3777 + $0x70] sm:$0xff]
        %v3793 = vld [vmem:[%s3777 + $0x78] sm:$0xff]
        %v3794 = vrot.slane %v3420, 4
        %3796 = vmatprep.subr.mxu0 0.0
        %3797 = vmatpush1.msra.mxu0 %v3793
        %3798 = vmatprep.subr.mxu0 0.0
        %3799 = vmatpush1.msra.mxu0 %v3792
        %3800 = vmatprep.subr.mxu0 0.0
        %3801 = vmatpush1.msra.mxu0 %v3791
        %3802 = vmatprep.subr.mxu0 0.0
        %3803 = vmatpush1.msra.mxu0 %v3790
        %3804 = vmatprep.subr.mxu0 0.0
        %3805 = vmatpush1.msra.mxu0 %v3789
        %3806 = vmatprep.subr.mxu0 0.0
        %3807 = vmatpush1.msra.mxu0 %v3788
        %3808 = vmatprep.subr.mxu0 0.0
        %3809 = vmatpush1.msra.mxu0 %v3787
        %3810 = vmatprep.subr.mxu0 0.0
        %3811 = vmatpush1.msra.mxu0 %v3786
        %3812 = vmatprep.subr.mxu0 0.0
        %3813 = vmatpush1.msra.mxu0 %v3785
        %3814 = vmatprep.subr.mxu0 0.0
        %3815 = vmatpush1.msra.mxu0 %v3784
        %3816 = vmatprep.subr.mxu0 0.0
        %3817 = vmatpush1.msra.mxu0 %v3783
        %3818 = vmatprep.subr.mxu0 0.0
        %3819 = vmatpush1.msra.mxu0 %v3782
        %3820 = vmatprep.subr.mxu0 0.0
        %3821 = vmatpush1.msra.mxu0 %v3781
        %3822 = vmatprep.subr.mxu0 0.0
        %3823 = vmatpush1.msra.mxu0 %v3780
        %3824 = vmatprep.subr.mxu0 0.0
        %3825 = vmatpush1.msra.mxu0 %v3779
        %3826 = vmatprep.subr.mxu0 0.0
        %3827 = vmatpush1.msra.mxu0 %v3778
        %3828 = vmatprep.subr.mxu0 0.0
        %3829 = vmatpush2.msra.mxu0 0.0
        %3830 = vmatprep.subr.mxu0 0.0
        %3831 = vmatpush2.msra.mxu0 0.0
        %3832 = vmatprep.subr.mxu0 0.0
        %3833 = vmatpush2.msra.mxu0 0.0
        %3834 = vmatprep.subr.mxu0 0.0
        %3835 = vmatpush2.msra.mxu0 0.0
        %3836 = vmatprep.subr.mxu0 0.0
        %3837 = vmatpush2.msra.mxu0 0.0
        %3838 = vmatprep.subr.mxu0 0.0
        %3839 = vmatpush2.msra.mxu0 0.0
        %3840 = vmatprep.subr.mxu0 0.0
        %3841 = vmatpush2.msra.mxu0 0.0
        %3842 = vmatprep.subr.mxu0 0.0
        %3843 = vmatpush2.msra.mxu0 0.0
        %3844 = vmatprep.subr.mxu0 0.0
        %3845 = vmatpush2.msra.mxu0 0.0
        %3846 = vmatprep.subr.mxu0 0.0
        %3847 = vmatpush2.msra.mxu0 0.0
        %3848 = vmatprep.subr.mxu0 0.0
        %3849 = vmatpush2.msra.mxu0 0.0
        %3850 = vmatprep.subr.mxu0 0.0
        %3851 = vmatpush2.msra.mxu0 0.0
        %3852 = vmatprep.subr.mxu0 0.0
        %3853 = vmatpush2.msra.mxu0 0.0
        %3854 = vmatprep.subr.mxu0 0.0
        %3855 = vmatpush2.msra.mxu0 0.0
        %3856 = vmatprep.subr.mxu0 0.0
        %3857 = vmatpush2.msra.mxu0 0.0
        %3858 = vmatprep.subr.mxu0 0.0
        %3859 = vmatpush2.msra.mxu0 0.0
        %3860 = vmatprep.mubr.f32.mxu0 0.0
        %3861 = vmatmul.mubr.f32.gmra.mxu0 %v3794
        %v3862 = vpop.f32.mrf.mxu0
        %v3863 = vadd.f32 0.0, %v3862
        %v3864 = vpop.f32.mrf.mxu0
        %3865 = vdwg.mxu0
        %v3866 = vadd.f32 %v3776, %v3863
        %s3867 = scalar_lea.vmem [#allocation7], 640
        %v3868 = vld [vmem:[%s3867] sm:$0xff]
        %v3869 = vld [vmem:[%s3867 + $0x8] sm:$0xff]
        %v3870 = vld [vmem:[%s3867 + $0x10] sm:$0xff]
        %v3871 = vld [vmem:[%s3867 + $0x18] sm:$0xff]
        %v3872 = vld [vmem:[%s3867 + $0x20] sm:$0xff]
        %v3873 = vld [vmem:[%s3867 + $0x28] sm:$0xff]
        %v3874 = vld [vmem:[%s3867 + $0x30] sm:$0xff]
        %v3875 = vld [vmem:[%s3867 + $0x38] sm:$0xff]
        %v3876 = vld [vmem:[%s3867 + $0x40] sm:$0xff]
        %v3877 = vld [vmem:[%s3867 + $0x48] sm:$0xff]
        %v3878 = vld [vmem:[%s3867 + $0x50] sm:$0xff]
        %v3879 = vld [vmem:[%s3867 + $0x58] sm:$0xff]
        %v3880 = vld [vmem:[%s3867 + $0x60] sm:$0xff]
        %v3881 = vld [vmem:[%s3867 + $0x68] sm:$0xff]
        %v3882 = vld [vmem:[%s3867 + $0x70] sm:$0xff]
        %v3883 = vld [vmem:[%s3867 + $0x78] sm:$0xff]
        %v3884 = vrot.slane %v3420, 5
        %3886 = vmatprep.subr.mxu0 0.0
        %3887 = vmatpush1.msra.mxu0 %v3883
        %3888 = vmatprep.subr.mxu0 0.0
        %3889 = vmatpush1.msra.mxu0 %v3882
        %3890 = vmatprep.subr.mxu0 0.0
        %3891 = vmatpush1.msra.mxu0 %v3881
        %3892 = vmatprep.subr.mxu0 0.0
        %3893 = vmatpush1.msra.mxu0 %v3880
        %3894 = vmatprep.subr.mxu0 0.0
        %3895 = vmatpush1.msra.mxu0 %v3879
        %3896 = vmatprep.subr.mxu0 0.0
        %3897 = vmatpush1.msra.mxu0 %v3878
        %3898 = vmatprep.subr.mxu0 0.0
        %3899 = vmatpush1.msra.mxu0 %v3877
        %3900 = vmatprep.subr.mxu0 0.0
        %3901 = vmatpush1.msra.mxu0 %v3876
        %3902 = vmatprep.subr.mxu0 0.0
        %3903 = vmatpush1.msra.mxu0 %v3875
        %3904 = vmatprep.subr.mxu0 0.0
        %3905 = vmatpush1.msra.mxu0 %v3874
        %3906 = vmatprep.subr.mxu0 0.0
        %3907 = vmatpush1.msra.mxu0 %v3873
        %3908 = vmatprep.subr.mxu0 0.0
        %3909 = vmatpush1.msra.mxu0 %v3872
        %3910 = vmatprep.subr.mxu0 0.0
        %3911 = vmatpush1.msra.mxu0 %v3871
        %3912 = vmatprep.subr.mxu0 0.0
        %3913 = vmatpush1.msra.mxu0 %v3870
        %3914 = vmatprep.subr.mxu0 0.0
        %3915 = vmatpush1.msra.mxu0 %v3869
        %3916 = vmatprep.subr.mxu0 0.0
        %3917 = vmatpush1.msra.mxu0 %v3868
        %3918 = vmatprep.subr.mxu0 0.0
        %3919 = vmatpush2.msra.mxu0 0.0
        %3920 = vmatprep.subr.mxu0 0.0
        %3921 = vmatpush2.msra.mxu0 0.0
        %3922 = vmatprep.subr.mxu0 0.0
        %3923 = vmatpush2.msra.mxu0 0.0
        %3924 = vmatprep.subr.mxu0 0.0
        %3925 = vmatpush2.msra.mxu0 0.0
        %3926 = vmatprep.subr.mxu0 0.0
        %3927 = vmatpush2.msra.mxu0 0.0
        %3928 = vmatprep.subr.mxu0 0.0
        %3929 = vmatpush2.msra.mxu0 0.0
        %3930 = vmatprep.subr.mxu0 0.0
        %3931 = vmatpush2.msra.mxu0 0.0
        %3932 = vmatprep.subr.mxu0 0.0
        %3933 = vmatpush2.msra.mxu0 0.0
        %3934 = vmatprep.subr.mxu0 0.0
        %3935 = vmatpush2.msra.mxu0 0.0
        %3936 = vmatprep.subr.mxu0 0.0
        %3937 = vmatpush2.msra.mxu0 0.0
        %3938 = vmatprep.subr.mxu0 0.0
        %3939 = vmatpush2.msra.mxu0 0.0
        %3940 = vmatprep.subr.mxu0 0.0
        %3941 = vmatpush2.msra.mxu0 0.0
        %3942 = vmatprep.subr.mxu0 0.0
        %3943 = vmatpush2.msra.mxu0 0.0
        %3944 = vmatprep.subr.mxu0 0.0
        %3945 = vmatpush2.msra.mxu0 0.0
        %3946 = vmatprep.subr.mxu0 0.0
        %3947 = vmatpush2.msra.mxu0 0.0
        %3948 = vmatprep.subr.mxu0 0.0
        %3949 = vmatpush2.msra.mxu0 0.0
        %3950 = vmatprep.mubr.f32.mxu0 0.0
        %3951 = vmatmul.mubr.f32.gmra.mxu0 %v3884
        %v3952 = vpop.f32.mrf.mxu0
        %v3953 = vadd.f32 0.0, %v3952
        %v3954 = vpop.f32.mrf.mxu0
        %3955 = vdwg.mxu0
        %v3956 = vadd.f32 %v3866, %v3953
        %s3957 = scalar_lea.vmem [#allocation7], 768
        %v3958 = vld [vmem:[%s3957] sm:$0xff]
        %v3959 = vld [vmem:[%s3957 + $0x8] sm:$0xff]
        %v3960 = vld [vmem:[%s3957 + $0x10] sm:$0xff]
        %v3961 = vld [vmem:[%s3957 + $0x18] sm:$0xff]
        %v3962 = vld [vmem:[%s3957 + $0x20] sm:$0xff]
        %v3963 = vld [vmem:[%s3957 + $0x28] sm:$0xff]
        %v3964 = vld [vmem:[%s3957 + $0x30] sm:$0xff]
        %v3965 = vld [vmem:[%s3957 + $0x38] sm:$0xff]
        %v3966 = vld [vmem:[%s3957 + $0x40] sm:$0xff]
        %v3967 = vld [vmem:[%s3957 + $0x48] sm:$0xff]
        %v3968 = vld [vmem:[%s3957 + $0x50] sm:$0xff]
        %v3969 = vld [vmem:[%s3957 + $0x58] sm:$0xff]
        %v3970 = vld [vmem:[%s3957 + $0x60] sm:$0xff]
        %v3971 = vld [vmem:[%s3957 + $0x68] sm:$0xff]
        %v3972 = vld [vmem:[%s3957 + $0x70] sm:$0xff]
        %v3973 = vld [vmem:[%s3957 + $0x78] sm:$0xff]
        %v3974 = vrot.slane %v3420, 6
        %3976 = vmatprep.subr.mxu0 0.0
        %3977 = vmatpush1.msra.mxu0 %v3973
        %3978 = vmatprep.subr.mxu0 0.0
        %3979 = vmatpush1.msra.mxu0 %v3972
        %3980 = vmatprep.subr.mxu0 0.0
        %3981 = vmatpush1.msra.mxu0 %v3971
        %3982 = vmatprep.subr.mxu0 0.0
        %3983 = vmatpush1.msra.mxu0 %v3970
        %3984 = vmatprep.subr.mxu0 0.0
        %3985 = vmatpush1.msra.mxu0 %v3969
        %3986 = vmatprep.subr.mxu0 0.0
        %3987 = vmatpush1.msra.mxu0 %v3968
        %3988 = vmatprep.subr.mxu0 0.0
        %3989 = vmatpush1.msra.mxu0 %v3967
        %3990 = vmatprep.subr.mxu0 0.0
        %3991 = vmatpush1.msra.mxu0 %v3966
        %3992 = vmatprep.subr.mxu0 0.0
        %3993 = vmatpush1.msra.mxu0 %v3965
        %3994 = vmatprep.subr.mxu0 0.0
        %3995 = vmatpush1.msra.mxu0 %v3964
        %3996 = vmatprep.subr.mxu0 0.0
        %3997 = vmatpush1.msra.mxu0 %v3963
        %3998 = vmatprep.subr.mxu0 0.0
        %3999 = vmatpush1.msra.mxu0 %v3962
        %4000 = vmatprep.subr.mxu0 0.0
        %4001 = vmatpush1.msra.mxu0 %v3961
        %4002 = vmatprep.subr.mxu0 0.0
        %4003 = vmatpush1.msra.mxu0 %v3960
        %4004 = vmatprep.subr.mxu0 0.0
        %4005 = vmatpush1.msra.mxu0 %v3959
        %4006 = vmatprep.subr.mxu0 0.0
        %4007 = vmatpush1.msra.mxu0 %v3958
        %4008 = vmatprep.subr.mxu0 0.0
        %4009 = vmatpush2.msra.mxu0 0.0
        %4010 = vmatprep.subr.mxu0 0.0
        %4011 = vmatpush2.msra.mxu0 0.0
        %4012 = vmatprep.subr.mxu0 0.0
        %4013 = vmatpush2.msra.mxu0 0.0
        %4014 = vmatprep.subr.mxu0 0.0
        %4015 = vmatpush2.msra.mxu0 0.0
        %4016 = vmatprep.subr.mxu0 0.0
        %4017 = vmatpush2.msra.mxu0 0.0
        %4018 = vmatprep.subr.mxu0 0.0
        %4019 = vmatpush2.msra.mxu0 0.0
        %4020 = vmatprep.subr.mxu0 0.0
        %4021 = vmatpush2.msra.mxu0 0.0
        %4022 = vmatprep.subr.mxu0 0.0
        %4023 = vmatpush2.msra.mxu0 0.0
        %4024 = vmatprep.subr.mxu0 0.0
        %4025 = vmatpush2.msra.mxu0 0.0
        %4026 = vmatprep.subr.mxu0 0.0
        %4027 = vmatpush2.msra.mxu0 0.0
        %4028 = vmatprep.subr.mxu0 0.0
        %4029 = vmatpush2.msra.mxu0 0.0
        %4030 = vmatprep.subr.mxu0 0.0
        %4031 = vmatpush2.msra.mxu0 0.0
        %4032 = vmatprep.subr.mxu0 0.0
        %4033 = vmatpush2.msra.mxu0 0.0
        %4034 = vmatprep.subr.mxu0 0.0
        %4035 = vmatpush2.msra.mxu0 0.0
        %4036 = vmatprep.subr.mxu0 0.0
        %4037 = vmatpush2.msra.mxu0 0.0
        %4038 = vmatprep.subr.mxu0 0.0
        %4039 = vmatpush2.msra.mxu0 0.0
        %4040 = vmatprep.mubr.f32.mxu0 0.0
        %4041 = vmatmul.mubr.f32.gmra.mxu0 %v3974
        %v4042 = vpop.f32.mrf.mxu0
        %v4043 = vadd.f32 0.0, %v4042
        %v4044 = vpop.f32.mrf.mxu0
        %4045 = vdwg.mxu0
        %v4046 = vadd.f32 %v3956, %v4043
        %s4047 = scalar_lea.vmem [#allocation7], 896
        %v4048 = vld [vmem:[%s4047] sm:$0xff]
        %v4049 = vld [vmem:[%s4047 + $0x8] sm:$0xff]
        %v4050 = vld [vmem:[%s4047 + $0x10] sm:$0xff]
        %v4051 = vld [vmem:[%s4047 + $0x18] sm:$0xff]
        %v4052 = vld [vmem:[%s4047 + $0x20] sm:$0xff]
        %v4053 = vld [vmem:[%s4047 + $0x28] sm:$0xff]
        %v4054 = vld [vmem:[%s4047 + $0x30] sm:$0xff]
        %v4055 = vld [vmem:[%s4047 + $0x38] sm:$0xff]
        %v4056 = vld [vmem:[%s4047 + $0x40] sm:$0xff]
        %v4057 = vld [vmem:[%s4047 + $0x48] sm:$0xff]
        %v4058 = vld [vmem:[%s4047 + $0x50] sm:$0xff]
        %v4059 = vld [vmem:[%s4047 + $0x58] sm:$0xff]
        %v4060 = vld [vmem:[%s4047 + $0x60] sm:$0xff]
        %v4061 = vld [vmem:[%s4047 + $0x68] sm:$0xff]
        %v4062 = vld [vmem:[%s4047 + $0x70] sm:$0xff]
        %v4063 = vld [vmem:[%s4047 + $0x78] sm:$0xff]
        %v4064 = vrot.slane %v3420, 7
        %4066 = vmatprep.subr.mxu0 0.0
        %4067 = vmatpush1.msra.mxu0 %v4063
        %4068 = vmatprep.subr.mxu0 0.0
        %4069 = vmatpush1.msra.mxu0 %v4062
        %4070 = vmatprep.subr.mxu0 0.0
        %4071 = vmatpush1.msra.mxu0 %v4061
        %4072 = vmatprep.subr.mxu0 0.0
        %4073 = vmatpush1.msra.mxu0 %v4060
        %4074 = vmatprep.subr.mxu0 0.0
        %4075 = vmatpush1.msra.mxu0 %v4059
        %4076 = vmatprep.subr.mxu0 0.0
        %4077 = vmatpush1.msra.mxu0 %v4058
        %4078 = vmatprep.subr.mxu0 0.0
        %4079 = vmatpush1.msra.mxu0 %v4057
        %4080 = vmatprep.subr.mxu0 0.0
        %4081 = vmatpush1.msra.mxu0 %v4056
        %4082 = vmatprep.subr.mxu0 0.0
        %4083 = vmatpush1.msra.mxu0 %v4055
        %4084 = vmatprep.subr.mxu0 0.0
        %4085 = vmatpush1.msra.mxu0 %v4054
        %4086 = vmatprep.subr.mxu0 0.0
        %4087 = vmatpush1.msra.mxu0 %v4053
        %4088 = vmatprep.subr.mxu0 0.0
        %4089 = vmatpush1.msra.mxu0 %v4052
        %4090 = vmatprep.subr.mxu0 0.0
        %4091 = vmatpush1.msra.mxu0 %v4051
        %4092 = vmatprep.subr.mxu0 0.0
        %4093 = vmatpush1.msra.mxu0 %v4050
        %4094 = vmatprep.subr.mxu0 0.0
        %4095 = vmatpush1.msra.mxu0 %v4049
        %4096 = vmatprep.subr.mxu0 0.0
        %4097 = vmatpush1.msra.mxu0 %v4048
        %4098 = vmatprep.subr.mxu0 0.0
        %4099 = vmatpush2.msra.mxu0 0.0
        %4100 = vmatprep.subr.mxu0 0.0
        %4101 = vmatpush2.msra.mxu0 0.0
        %4102 = vmatprep.subr.mxu0 0.0
        %4103 = vmatpush2.msra.mxu0 0.0
        %4104 = vmatprep.subr.mxu0 0.0
        %4105 = vmatpush2.msra.mxu0 0.0
        %4106 = vmatprep.subr.mxu0 0.0
        %4107 = vmatpush2.msra.mxu0 0.0
        %4108 = vmatprep.subr.mxu0 0.0
        %4109 = vmatpush2.msra.mxu0 0.0
        %4110 = vmatprep.subr.mxu0 0.0
        %4111 = vmatpush2.msra.mxu0 0.0
        %4112 = vmatprep.subr.mxu0 0.0
        %4113 = vmatpush2.msra.mxu0 0.0
        %4114 = vmatprep.subr.mxu0 0.0
        %4115 = vmatpush2.msra.mxu0 0.0
        %4116 = vmatprep.subr.mxu0 0.0
        %4117 = vmatpush2.msra.mxu0 0.0
        %4118 = vmatprep.subr.mxu0 0.0
        %4119 = vmatpush2.msra.mxu0 0.0
        %4120 = vmatprep.subr.mxu0 0.0
        %4121 = vmatpush2.msra.mxu0 0.0
        %4122 = vmatprep.subr.mxu0 0.0
        %4123 = vmatpush2.msra.mxu0 0.0
        %4124 = vmatprep.subr.mxu0 0.0
        %4125 = vmatpush2.msra.mxu0 0.0
        %4126 = vmatprep.subr.mxu0 0.0
        %4127 = vmatpush2.msra.mxu0 0.0
        %4128 = vmatprep.subr.mxu0 0.0
        %4129 = vmatpush2.msra.mxu0 0.0
        %4130 = vmatprep.mubr.f32.mxu0 0.0
        %4131 = vmatmul.mubr.f32.gmra.mxu0 %v4064
        %v4132 = vpop.f32.mrf.mxu0
        %v4133 = vadd.f32 0.0, %v4132
        %v4134 = vpop.f32.mrf.mxu0
        %4135 = vdwg.mxu0
        %v4136 = vadd.f32 %v4046, %v4133
        %v4137 = vld [vmem:[%s11] sm:$0x1]
        %v4138 = vadd.f32 %v4136, %v4137
        %v4139 = vmax.f32 %v4138, 0.0
        %v4140 = vld [vmem:[%s12] sm:$0xff]
        %v4141 = vld [vmem:[%s12 + $0x8] sm:$0xff]
        %v4142 = vld [vmem:[%s12 + $0x10] sm:$0xff]
        %v4143 = vld [vmem:[%s12 + $0x18] sm:$0xff]
        %v4144 = vld [vmem:[%s12 + $0x20] sm:$0xff]
        %v4145 = vld [vmem:[%s12 + $0x28] sm:$0xff]
        %v4146 = vld [vmem:[%s12 + $0x30] sm:$0xff]
        %v4147 = vld [vmem:[%s12 + $0x38] sm:$0xff]
        %v4148 = vld [vmem:[%s12 + $0x40] sm:$0xff]
        %v4149 = vld [vmem:[%s12 + $0x48] sm:$0xff]
        %v4150 = vld [vmem:[%s12 + $0x50] sm:$0xff]
        %v4151 = vld [vmem:[%s12 + $0x58] sm:$0xff]
        %v4152 = vld [vmem:[%s12 + $0x60] sm:$0xff]
        %v4153 = vld [vmem:[%s12 + $0x68] sm:$0xff]
        %v4154 = vld [vmem:[%s12 + $0x70] sm:$0xff]
        %v4155 = vld [vmem:[%s12 + $0x78] sm:$0xff]
        %v4156 = vld [vmem:[%s13] sm:$0x1]
        %4157 = vmatprep.subr.mxu0 0.0
        %4158 = vmatpush1.msra.mxu0 %v4155
        %4159 = vmatprep.subr.mxu0 0.0
        %4160 = vmatpush1.msra.mxu0 %v4154
        %4161 = vmatprep.subr.mxu0 0.0
        %4162 = vmatpush1.msra.mxu0 %v4153
        %4163 = vmatprep.subr.mxu0 0.0
        %4164 = vmatpush1.msra.mxu0 %v4152
        %4165 = vmatprep.subr.mxu0 0.0
        %4166 = vmatpush1.msra.mxu0 %v4151
        %4167 = vmatprep.subr.mxu0 0.0
        %4168 = vmatpush1.msra.mxu0 %v4150
        %4169 = vmatprep.subr.mxu0 0.0
        %4170 = vmatpush1.msra.mxu0 %v4149
        %4171 = vmatprep.subr.mxu0 0.0
        %4172 = vmatpush1.msra.mxu0 %v4148
        %4173 = vmatprep.subr.mxu0 0.0
        %4174 = vmatpush1.msra.mxu0 %v4147
        %4175 = vmatprep.subr.mxu0 0.0
        %4176 = vmatpush1.msra.mxu0 %v4146
        %4177 = vmatprep.subr.mxu0 0.0
        %4178 = vmatpush1.msra.mxu0 %v4145
        %4179 = vmatprep.subr.mxu0 0.0
        %4180 = vmatpush1.msra.mxu0 %v4144
        %4181 = vmatprep.subr.mxu0 0.0
        %4182 = vmatpush1.msra.mxu0 %v4143
        %4183 = vmatprep.subr.mxu0 0.0
        %4184 = vmatpush1.msra.mxu0 %v4142
        %4185 = vmatprep.subr.mxu0 0.0
        %4186 = vmatpush1.msra.mxu0 %v4141
        %4187 = vmatprep.subr.mxu0 0.0
        %4188 = vmatpush1.msra.mxu0 %v4140
        %4189 = vmatprep.subr.mxu0 0.0
        %4190 = vmatpush2.msra.mxu0 0.0
        %4191 = vmatprep.subr.mxu0 0.0
        %4192 = vmatpush2.msra.mxu0 0.0
        %4193 = vmatprep.subr.mxu0 0.0
        %4194 = vmatpush2.msra.mxu0 0.0
        %4195 = vmatprep.subr.mxu0 0.0
        %4196 = vmatpush2.msra.mxu0 0.0
        %4197 = vmatprep.subr.mxu0 0.0
        %4198 = vmatpush2.msra.mxu0 0.0
        %4199 = vmatprep.subr.mxu0 0.0
        %4200 = vmatpush2.msra.mxu0 0.0
        %4201 = vmatprep.subr.mxu0 0.0
        %4202 = vmatpush2.msra.mxu0 0.0
        %4203 = vmatprep.subr.mxu0 0.0
        %4204 = vmatpush2.msra.mxu0 0.0
        %4205 = vmatprep.subr.mxu0 0.0
        %4206 = vmatpush2.msra.mxu0 0.0
        %4207 = vmatprep.subr.mxu0 0.0
        %4208 = vmatpush2.msra.mxu0 0.0
        %4209 = vmatprep.subr.mxu0 0.0
        %4210 = vmatpush2.msra.mxu0 0.0
        %4211 = vmatprep.subr.mxu0 0.0
        %4212 = vmatpush2.msra.mxu0 0.0
        %4213 = vmatprep.subr.mxu0 0.0
        %4214 = vmatpush2.msra.mxu0 0.0
        %4215 = vmatprep.subr.mxu0 0.0
        %4216 = vmatpush2.msra.mxu0 0.0
        %4217 = vmatprep.subr.mxu0 0.0
        %4218 = vmatpush2.msra.mxu0 0.0
        %4219 = vmatprep.subr.mxu0 0.0
        %4220 = vmatpush2.msra.mxu0 0.0
        %4221 = vmatprep.mubr.f32.mxu0 0.0
        %4222 = vmatmul.mubr.f32.gmra.mxu0 %v4139
        %v4223 = vpop.f32.mrf.mxu0
        %v4224 = vadd.f32 %v4156, %v4223
        %v4225 = vpop.f32.mrf.mxu0
        %4226 = vdwg.mxu0
        %v4227 = vmax.f32 %v4224, 0.0
        %v4228 = vld [vmem:[#allocation8] sm:$0xff]
        %v4229 = vld [vmem:[#allocation8 + $0x8] sm:$0xff]
        %v4230 = vld [vmem:[#allocation8 + $0x10] sm:$0xff]
        %v4231 = vld [vmem:[#allocation8 + $0x18] sm:$0xff]
        %v4232 = vld [vmem:[#allocation8 + $0x20] sm:$0xff]
        %v4233 = vld [vmem:[#allocation8 + $0x28] sm:$0xff]
        %v4234 = vld [vmem:[#allocation8 + $0x30] sm:$0xff]
        %v4235 = vld [vmem:[#allocation8 + $0x38] sm:$0xff]
        %v4236 = vld [vmem:[#allocation8 + $0x40] sm:$0xff]
        %v4237 = vld [vmem:[#allocation8 + $0x48] sm:$0xff]
        %v4238 = vld [vmem:[#allocation8 + $0x50] sm:$0xff]
        %v4239 = vld [vmem:[#allocation8 + $0x58] sm:$0xff]
        %v4240 = vld [vmem:[#allocation8 + $0x60] sm:$0xff]
        %v4241 = vld [vmem:[#allocation8 + $0x68] sm:$0xff]
        %v4242 = vld [vmem:[#allocation8 + $0x70] sm:$0xff]
        %v4243 = vld [vmem:[#allocation8 + $0x78] sm:$0xff]
        %v4244 = vld [vmem:[%s15] sm:$0x1]
        %4245 = vmatprep.subr.mxu0 0.0
        %4246 = vmatpush1.msra.mxu0 %v4243
        %4247 = vmatprep.subr.mxu0 0.0
        %4248 = vmatpush1.msra.mxu0 %v4242
        %4249 = vmatprep.subr.mxu0 0.0
        %4250 = vmatpush1.msra.mxu0 %v4241
        %4251 = vmatprep.subr.mxu0 0.0
        %4252 = vmatpush1.msra.mxu0 %v4240
        %4253 = vmatprep.subr.mxu0 0.0
        %4254 = vmatpush1.msra.mxu0 %v4239
        %4255 = vmatprep.subr.mxu0 0.0
        %4256 = vmatpush1.msra.mxu0 %v4238
        %4257 = vmatprep.subr.mxu0 0.0
        %4258 = vmatpush1.msra.mxu0 %v4237
        %4259 = vmatprep.subr.mxu0 0.0
        %4260 = vmatpush1.msra.mxu0 %v4236
        %4261 = vmatprep.subr.mxu0 0.0
        %4262 = vmatpush1.msra.mxu0 %v4235
        %4263 = vmatprep.subr.mxu0 0.0
        %4264 = vmatpush1.msra.mxu0 %v4234
        %4265 = vmatprep.subr.mxu0 0.0
        %4266 = vmatpush1.msra.mxu0 %v4233
        %4267 = vmatprep.subr.mxu0 0.0
        %4268 = vmatpush1.msra.mxu0 %v4232
        %4269 = vmatprep.subr.mxu0 0.0
        %4270 = vmatpush1.msra.mxu0 %v4231
        %4271 = vmatprep.subr.mxu0 0.0
        %4272 = vmatpush1.msra.mxu0 %v4230
        %4273 = vmatprep.subr.mxu0 0.0
        %4274 = vmatpush1.msra.mxu0 %v4229
        %4275 = vmatprep.subr.mxu0 0.0
        %4276 = vmatpush1.msra.mxu0 %v4228
        %4277 = vmatprep.subr.mxu0 0.0
        %4278 = vmatpush2.msra.mxu0 0.0
        %4279 = vmatprep.subr.mxu0 0.0
        %4280 = vmatpush2.msra.mxu0 0.0
        %4281 = vmatprep.subr.mxu0 0.0
        %4282 = vmatpush2.msra.mxu0 0.0
        %4283 = vmatprep.subr.mxu0 0.0
        %4284 = vmatpush2.msra.mxu0 0.0
        %4285 = vmatprep.subr.mxu0 0.0
        %4286 = vmatpush2.msra.mxu0 0.0
        %4287 = vmatprep.subr.mxu0 0.0
        %4288 = vmatpush2.msra.mxu0 0.0
        %4289 = vmatprep.subr.mxu0 0.0
        %4290 = vmatpush2.msra.mxu0 0.0
        %4291 = vmatprep.subr.mxu0 0.0
        %4292 = vmatpush2.msra.mxu0 0.0
        %4293 = vmatprep.subr.mxu0 0.0
        %4294 = vmatpush2.msra.mxu0 0.0
        %4295 = vmatprep.subr.mxu0 0.0
        %4296 = vmatpush2.msra.mxu0 0.0
        %4297 = vmatprep.subr.mxu0 0.0
        %4298 = vmatpush2.msra.mxu0 0.0
        %4299 = vmatprep.subr.mxu0 0.0
        %4300 = vmatpush2.msra.mxu0 0.0
        %4301 = vmatprep.subr.mxu0 0.0
        %4302 = vmatpush2.msra.mxu0 0.0
        %4303 = vmatprep.subr.mxu0 0.0
        %4304 = vmatpush2.msra.mxu0 0.0
        %4305 = vmatprep.subr.mxu0 0.0
        %4306 = vmatpush2.msra.mxu0 0.0
        %4307 = vmatprep.subr.mxu0 0.0
        %4308 = vmatpush2.msra.mxu0 0.0
        %4309 = vmatprep.mubr.f32.mxu0 0.0
        %4310 = vmatmul.mubr.f32.gmra.mxu0 %v4227
        %v4311 = vpop.f32.mrf.mxu0
        %v4312 = vadd.f32 %v4244, %v4311
        %v4313 = vpop.f32.mrf.mxu0
        %4314 = vdwg.mxu0
        %v4315 = vsel %vm2459, %v4312, -inf
        %4316 = vmax.xlane.f32.xlu0 %v4315
        %v4317 = vpop.xlane.xlu0 %4316
        %v4318 = vsub.f32 %v4312, %v4317
        %v4319 = vmul.f32 %v4318, 1.442695
        %v4320 = vpow.pop %v4319
        %v4321 = vsel %vm2459, %v4320, 0.0
        %4322 = vadd.xlane.f32.xlu0 %v4321
        %v4323 = vpop.xlane.xlu0 %4322
        %v4324 = vlog2.pop %v4323
        %v4325 = vmul.f32 %v4324, 0.6931472
        %v4326 = vsub.f32 %v4318, %v4325
        %4327 = vst [vmem:[%s613] sm:$0x1] %v4326
        %s4328 = sand.u32 %s397, 1
        %s4329 = scalar_lea.sflag [#allocation4], %s4328
        %s4330 = sand.u32 %s397, 1
        %s4331 = scalar_lea.vmem [#allocation10], %s4330
        // Predicated region
        $region101: #{net_forward.1} parent=83 // pred_check
          %p4332 = pneg %p407
        $region102: #{net_forward.1} parent=83 // pred_check_branch
          %4334 = sbr.rel (%p4332) target = $region104
        $region103: #{net_forward.1} parent=83 // pred_region
          %s4336 = ssub.s32 16, 16
          %4337 = vsyncadd %s4329, %s4336
          %s4338 = smul.addr %s33, 16
          %s4339 = scalar_lea.hbm %s16, %s4338
          %s4341 = sshll.u32 %s4331, 4
          %s4342 = int_to_ptr.vmem [resolvable:$true] %s4341
          %4344 = dma.vmem_to_hbm [thread:$0]  %s4342, 16, %s4339, %s4329
        $region104: #{net_forward.1} parent=83 // pred_fallthru
          _
      $region84: #{net_forward.1} parent=5 // pred_fallthru
        _
      %p4345 = scmp.le.s32.totalorder 2, %s28
      // Predicated region
      $region105: #{net_forward.1} parent=5 // pred_check
        %p4346 = pneg %p4345
      $region106: #{net_forward.1} parent=5 // pred_check_branch
        %4348 = sbr.rel (%p4346) target = $region108
      $region107: #{net_forward.1} parent=5 // pred_region
        %s4349 = ssub.s32 %s28, 2
        // Predicated region
        $region109: #{net_forward.1} parent=107 // pred_check
          %p4350 = pneg %p413
        $region110: #{net_forward.1} parent=107 // pred_check_branch
          %4352 = sbr.rel (%p4350) target = $region112
        $region111: #{net_forward.1} parent=107 // pred_region
          %s4353 = sand.u32 %s398, 1
          %s4354 = scalar_lea.sflag [#allocation4], %s4353
          %s4355 = sand.u32 %s398, 1
          %s4356 = scalar_lea.vmem [#allocation10], %s4355
          %4357 = dma.done %s4354, 16
        $region112: #{net_forward.1} parent=107 // pred_fallthru
          _
      $region108: #{net_forward.1} parent=5 // pred_fallthru
        _
    $region6: #{net_forward.1} parent=1 // loop_footer
      %s32 = sadd.s32 1, %s28
    $region7: #{net_forward.1} parent=1 // loop_footer_branch
      %27 = sbr.rel target = $region3
    $region8: #{net_forward.1} parent=1 // loop_exit
      _
    %4358 = vsyncpa [#allocation3], 1
    %s4359 = scalar_lea.sflag [#allocation3], 1
    %4360 = vsyncpa %s4359, 1
    %4361 = vsyncpa [#allocation6], 1
    %4362 = vsyncpa [#allocation9], 1
    %4363 = vsyncpa [#allocation4], 1
    %s4364 = scalar_lea.sflag [#allocation4], 1
    %4365 = vsyncpa %s4364, 1

</llo_original>
